<compile_context>
chip_gen: v5e
topology: v5e:2x2
jax: 0.10.0
libtpu: 0.0.40
codegen_flags: <defaults>
</compile_context>

<pallas_src>
import functools

import jax
import jax.numpy as jnp
from jax.experimental import pallas as pl
from jax.experimental.pallas import tpu as pltpu

NEG_SLOPE = 0.2     # GATConv default negative_slope
DIR_ALPHA = 0.5     # DirGNNConv default alpha
HEADS1, F1 = 12, 12  # GATConv(num_features, 12, heads=12)
HEADS2 = 1           # GATConv(144, num_classes, heads=1)


# ----------------------------- Pallas kernel ------------------------------- #

def _head_aggregate(h_hd, dst_col, src_row, mask):
    """Masked single-head GAT aggregation: softmax_j(LeakyReLU(a_dst_i + a_src_j)) @ h."""
    e = dst_col + src_row                              # [N, N] VPU broadcast add
    e = jnp.where(e > 0.0, e, NEG_SLOPE * e)           # LeakyReLU
    e = jnp.where(mask, e, -1e30)                      # kill non-edges
    m = jnp.max(e, axis=1, keepdims=True)
    p = jnp.where(mask, jnp.exp(e - m), 0.0)
    denom = jnp.sum(p, axis=1, keepdims=True)
    inv = pl.reciprocal(jnp.maximum(denom, 1e-20), approx=True)   # EUP slot, ~free
    att = p * inv                                      # rows with no in-edges -> all zeros
    # TODO(synk): for the large-N version cast att/h_hd to bf16 before the MXU dot
    # (f32 keeps closest parity with PyTorch at this tiny size).
    return jnp.dot(att, h_hd, preferred_element_type=jnp.float32)


def _dir_gat_layer(x, mask_in, mask_out, w_cat, a_cat, bias, *,
                   heads, fdim, seg, alpha, apply_relu):
    """One DirGNNConv(GATConv): both GAT directions + root Linear + alpha-combine.

    w_cat : [Din, 3*seg]    128-aligned zero-padded segments [w_in | w_out | w_root]
    a_cat : [3*seg, 4*H]    block-diag attention vectors  [dst_in|src_in|dst_out|src_out]
    bias  : [1, H*F]        pre-combined  alpha*b_out + (1-alpha)*b_in + b_root
    """
    hf = heads * fdim
    # Two MXU ops per layer: fused projection + fused attention-logits matmul.
    proj = jnp.dot(x, w_cat, preferred_element_type=jnp.float32)        # [N, 3*seg]
    logits = jnp.dot(proj, a_cat, preferred_element_type=jnp.float32)   # [N, 4H]
    logits_t = jnp.transpose(logits)                                    # [4H, N], one XLU op

    h_in = proj[:, 0:hf]                       # 128-aligned segment starts
    h_out = proj[:, seg:seg + hf]
    root = proj[:, 2 * seg:2 * seg + hf] + bias

    outs = []
    for hd in range(heads):                    # static unrolled head loop
        lo, hi = hd * fdim, (hd + 1) * fdim
        agg_in = _head_aggregate(h_in[:, lo:hi],
                                 logits[:, hd:hd + 1],
                                 logits_t[heads + hd:heads + hd + 1, :],
                                 mask_in)
        agg_out = _head_aggregate(h_out[:, lo:hi],
                                  logits[:, 2 * heads + hd:2 * heads + hd + 1],
                                  logits_t[3 * heads + hd:3 * heads + hd + 1, :],
                                  mask_out)
        outs.append(alpha * agg_out + (1.0 - alpha) * agg_in + root[:, lo:hi])
    y = outs[0] if heads == 1 else jnp.concatenate(outs, axis=1)        # lane-dense value
    if apply_relu:
        y = jnp.maximum(y, 0.0)
    return y


def _mini_gnn_kernel(x_ref, adj_ref, adjt_ref,
                     w1_ref, a1_ref, b1_ref,
                     w2_ref, a2_ref, b2_ref,
                     out_ref, *, f2, seg1, seg2, alpha):
    """Fused forward: DirGAT layer 1 -> ReLU -> (eval dropout = id) -> DirGAT layer 2."""
    x = x_ref[...]                             # [N, Din]
    mask_in = adj_ref[...] != 0                # adj[i, j] = 1 iff edge j -> i
    mask_out = adjt_ref[...] != 0              # reversed edges (precomputed adj.T)

    h = _dir_gat_layer(x, mask_in, mask_out, w1_ref[...], a1_ref[...], b1_ref[...],
                       heads=HEADS1, fdim=F1, seg=seg1, alpha=alpha, apply_relu=True)
    # nn.functional.dropout(p=0.5, training=False) -> identity in eval mode.
    y = _dir_gat_layer(h, mask_in, mask_out, w2_ref[...], a2_ref[...], b2_ref[...],
                       heads=HEADS2, fdim=f2, seg=seg2, alpha=alpha, apply_relu=False)
    out_ref[...] = y                           # single lane-dense store


# ----------------------------- wrapper / packing ---------------------------- #

def _block_diag(a, heads, fdim):
    """[H, F] attention vector -> [H*F, H] block-diagonal column stack."""
    eye = jnp.eye(heads, dtype=jnp.float32)
    return (a[:, :, None] * eye[:, None, :]).reshape(heads * fdim, heads)


def pack_dir_gat_layer(p, heads, fdim):
    """Pre-pack one DirGNN layer's weights (runs ONCE, outside the forward jit)."""
    hf = heads * fdim
    seg = ((hf + 127) // 128) * 128            # 128-lane-aligned segment width
    ci, co = p["conv_in"], p["conv_out"]
    din = ci["w"].shape[0]

    w_cat = jnp.zeros((din, 3 * seg), jnp.float32)
    w_cat = w_cat.at[:, 0:hf].set(ci["w"])
    w_cat = w_cat.at[:, seg:seg + hf].set(co["w"])
    w_cat = w_cat.at[:, 2 * seg:2 * seg + hf].set(p["root_w"])

    a_cat = jnp.zeros((3 * seg, 4 * heads), jnp.float32)
    a_cat = a_cat.at[0:hf, 0:heads].set(_block_diag(ci["a_dst"], heads, fdim))
    a_cat = a_cat.at[0:hf, heads:2 * heads].set(_block_diag(ci["a_src"], heads, fdim))
    a_cat = a_cat.at[seg:seg + hf, 2 * heads:3 * heads].set(_block_diag(co["a_dst"], heads, fdim))
    a_cat = a_cat.at[seg:seg + hf, 3 * heads:4 * heads].set(_block_diag(co["a_src"], heads, fdim))

    bias = DIR_ALPHA * co["bias"] + (1.0 - DIR_ALPHA) * ci["bias"] + p["root_b"]
    return dict(w=w_cat, a=a_cat, b=bias)


def build_adjacency(edge_index, num_nodes):
    """Dense int8 adjacency (and its transpose), built once per static graph."""
    adj = jnp.zeros((num_nodes, num_nodes), jnp.int8)
    adj = adj.at[edge_index[1], edge_index[0]].set(1)     # adj[dst, src] = 1
    return adj, jnp.transpose(adj)


@jax.jit
def mini_gnn_forward(packed, x, adj, adj_t):
    n = x.shape[0]
    seg1 = packed["l1"]["w"].shape[1] // 3
    seg2 = packed["l2"]["w"].shape[1] // 3
    f2 = packed["l2"]["b"].shape[1] // HEADS2              # = num_classes
    kernel = functools.partial(_mini_gnn_kernel, f2=f2, seg1=seg1, seg2=seg2,
                               alpha=DIR_ALPHA)
    vmem = pl.BlockSpec(memory_space=pltpu.MemorySpace.VMEM)
    # TODO(synk): at large N the dense [N, N] adj must be tiled over a (dst, src) grid
    # (dst "parallel", src "arbitrary") with online-softmax accumulators, int8 adj tiles
    # and an explicit vmem_limit_bytes sized for v7x's 64 MiB VMEM.
    return pl.pallas_call(
        kernel,
        out_shape=jax.ShapeDtypeStruct((n, HEADS2 * f2), jnp.float32),
        in_specs=[vmem] * 9,
        out_specs=vmem,
    )(x, adj, adj_t,
      packed["l1"]["w"], packed["l1"]["a"], packed["l1"]["b"],
      packed["l2"]["w"], packed["l2"]["a"], packed["l2"]["b"])


# ------------------------ deterministic parameter init --------------------- #

def init_gat_params(key, din, fdim, heads, scale=0.2):
    k0, k1, k2 = jax.random.split(key, 3)
    return dict(
        w=scale * jax.random.normal(k0, (din, heads * fdim), jnp.float32),
        a_src=scale * jax.random.normal(k1, (heads, fdim), jnp.float32),
        a_dst=scale * jax.random.normal(k2, (heads, fdim), jnp.float32),
        bias=jnp.zeros((1, heads * fdim), jnp.float32),   # GATConv bias inits to zero
    )


def init_dir_gat_params(key, din, fdim, heads, scale=0.2):
    k0, k1, k2 = jax.random.split(key, 3)
    return dict(
        conv_in=init_gat_params(k0, din, fdim, heads, scale),
        conv_out=init_gat_params(k1, din, fdim, heads, scale),
        # TODO(synk): PyG DirGNNConv literally builds Linear(din, conv.out_channels)=Linear(din, fdim),
        # which is shape-incompatible with concat heads>1; we use the shape-consistent din -> heads*fdim.
        root_w=scale * jax.random.normal(k2, (din, heads * fdim), jnp.float32),
        root_b=jnp.zeros((1, heads * fdim), jnp.float32),
    )


# ----------------------------------- main ----------------------------------- #

if __name__ == "__main__":
    N, NUM_FEATURES, NUM_CLASSES = 16, 16, 4

    key = jax.random.PRNGKey(0)
    kx, kp1, kp2 = jax.random.split(key, 3)

    x = jax.random.normal(kx, (N, NUM_FEATURES), jnp.float32)

    # Deterministic directed graph (ring + skip-5 edges), no duplicate edges.
    src = jnp.concatenate([jnp.arange(N), jnp.arange(N)])
    dst = jnp.concatenate([(jnp.arange(N) + 1) % N, (jnp.arange(N) + 5) % N])
    edge_index = jnp.stack([src, dst]).astype(jnp.int32)      # [2, 32]

    params = {
        "conv1": init_dir_gat_params(kp1, NUM_FEATURES, 12, 12),   # GATConv(F, 12, heads=12)
        "conv2": init_dir_gat_params(kp2, 144, NUM_CLASSES, 1),    # GATConv(144, C, heads=1)
    }

    # One-time setup (outside the jitted forward): adjacency + packed weights.
    adj, adj_t = build_adjacency(edge_index, N)
    packed = {
        "l1": pack_dir_gat_layer(params["conv1"], HEADS1, F1),
        "l2": pack_dir_gat_layer(params["conv2"], HEADS2, NUM_CLASSES),
    }
    # NOTE: self.fc is defined in __init__ but never used in forward -> omitted.

    out = mini_gnn_forward(packed, x, adj, adj_t)
    out = jax.block_until_ready(out)
    assert out.shape == (N, NUM_CLASSES) and out.dtype == jnp.float32
    assert bool(jnp.all(jnp.isfinite(out)))
    print("KERNEL_OK")
</pallas_src>

<mosaic_0001>
module attributes {stable_mosaic.version = 11 : i64} {
  func.func @_mini_gnn_kernel(%arg0: memref<16x16xf32, #tpu.memory_space<vmem>>, %arg1: memref<16x16xi8, #tpu.memory_space<vmem>>, %arg2: memref<16x16xi8, #tpu.memory_space<vmem>>, %arg3: memref<16x768xf32, #tpu.memory_space<vmem>>, %arg4: memref<768x48xf32, #tpu.memory_space<vmem>>, %arg5: memref<1x144xf32, #tpu.memory_space<vmem>>, %arg6: memref<144x384xf32, #tpu.memory_space<vmem>>, %arg7: memref<384x4xf32, #tpu.memory_space<vmem>>, %arg8: memref<1x4xf32, #tpu.memory_space<vmem>>, %arg9: memref<16x4xf32, #tpu.memory_space<vmem>>) attributes {dimension_semantics = [], scalar_prefetch = 0 : i64, scratch_operands = 0 : i64, tpu.core_type = #tpu.core_type<tc>} {
    %c0 = arith.constant 0 : index
    %c0_0 = arith.constant 0 : index
    %0 = vector.load %arg0[%c0, %c0_0] : memref<16x16xf32, #tpu.memory_space<vmem>>, vector<16x16xf32>
    %c0_1 = arith.constant 0 : index
    %c0_2 = arith.constant 0 : index
    %1 = vector.load %arg1[%c0_1, %c0_2] : memref<16x16xi8, #tpu.memory_space<vmem>>, vector<16x16xi8>
    %c0_i8 = arith.constant 0 : i8
    %2 = vector.broadcast %c0_i8 : i8 to vector<16x16xi8>
    %3 = arith.cmpi ne, %1, %2 : vector<16x16xi8>
    %c0_3 = arith.constant 0 : index
    %c0_4 = arith.constant 0 : index
    %4 = vector.load %arg2[%c0_3, %c0_4] : memref<16x16xi8, #tpu.memory_space<vmem>>, vector<16x16xi8>
    %c0_i8_5 = arith.constant 0 : i8
    %5 = vector.broadcast %c0_i8_5 : i8 to vector<16x16xi8>
    %6 = arith.cmpi ne, %4, %5 : vector<16x16xi8>
    %c0_6 = arith.constant 0 : index
    %c0_7 = arith.constant 0 : index
    %7 = vector.load %arg3[%c0_6, %c0_7] : memref<16x768xf32, #tpu.memory_space<vmem>>, vector<16x768xf32>
    %c0_8 = arith.constant 0 : index
    %c0_9 = arith.constant 0 : index
    %8 = vector.load %arg4[%c0_8, %c0_9] : memref<768x48xf32, #tpu.memory_space<vmem>>, vector<768x48xf32>
    %c0_10 = arith.constant 0 : index
    %c0_11 = arith.constant 0 : index
    %9 = vector.load %arg5[%c0_10, %c0_11] : memref<1x144xf32, #tpu.memory_space<vmem>>, vector<1x144xf32>
    %cst = arith.constant dense<0.000000e+00> : vector<16x768xf32>
    %10 = tpu.matmul %0, %7, %cst {dimension_numbers = #tpu.dot_dimension_numbers<[1], [0], [0], [1], [0, 0, 1, 1], [], []>} : vector<16x16xf32>, vector<16x768xf32>, vector<16x768xf32> -> vector<16x768xf32>
    %cst_12 = arith.constant dense<0.000000e+00> : vector<16x48xf32>
    %11 = tpu.matmul %10, %8, %cst_12 {dimension_numbers = #tpu.dot_dimension_numbers<[1], [0], [0], [1], [0, 0, 1, 1], [], []>} : vector<16x768xf32>, vector<768x48xf32>, vector<16x48xf32> -> vector<16x48xf32>
    %12 = tpu.transpose %11, [1, 0] : vector<16x48xf32> -> vector<48x16xf32>
    %13 = vector.extract_strided_slice %10 {offsets = [0, 0], sizes = [16, 144], strides = [1, 1]} : vector<16x768xf32> to vector<16x144xf32>
    %14 = vector.extract_strided_slice %10 {offsets = [0, 256], sizes = [16, 144], strides = [1, 1]} : vector<16x768xf32> to vector<16x144xf32>
    %15 = vector.extract_strided_slice %10 {offsets = [0, 512], sizes = [16, 144], strides = [1, 1]} : vector<16x768xf32> to vector<16x144xf32>
    %16 = vector.broadcast %9 : vector<1x144xf32> to vector<16x144xf32>
    %17 = arith.addf %15, %16 : vector<16x144xf32>
    %18 = vector.extract_strided_slice %13 {offsets = [0, 0], sizes = [16, 12], strides = [1, 1]} : vector<16x144xf32> to vector<16x12xf32>
    %19 = vector.extract_strided_slice %11 {offsets = [0, 0], sizes = [16, 1], strides = [1, 1]} : vector<16x48xf32> to vector<16x1xf32>
    %20 = vector.extract_strided_slice %12 {offsets = [12, 0], sizes = [1, 16], strides = [1, 1]} : vector<48x16xf32> to vector<1x16xf32>
    %21 = vector.broadcast %19 : vector<16x1xf32> to vector<16x16xf32>
    %22 = vector.broadcast %20 : vector<1x16xf32> to vector<16x16xf32>
    %23 = arith.addf %21, %22 : vector<16x16xf32>
    %cst_13 = arith.constant 0.000000e+00 : f32
    %24 = vector.broadcast %cst_13 : f32 to vector<16x16xf32>
    %25 = arith.cmpf ogt, %23, %24 : vector<16x16xf32>
    %cst_14 = arith.constant 2.000000e-01 : f32
    %26 = vector.broadcast %cst_14 : f32 to vector<16x16xf32>
    %27 = arith.mulf %26, %23 : vector<16x16xf32>
    %28 = arith.select %25, %23, %27 : vector<16x16xi1>, vector<16x16xf32>
    %cst_15 = arith.constant -1.000000e+30 : f32
    %29 = vector.broadcast %cst_15 : f32 to vector<16x16xf32>
    %30 = arith.select %3, %28, %29 : vector<16x16xi1>, vector<16x16xf32>
    %cst_16 = arith.constant dense<0xFF800000> : vector<16xf32>
    %31 = vector.multi_reduction <maximumf>, %30, %cst_16 [1] : vector<16x16xf32> to vector<16xf32>
    %32 = vector.shape_cast %31 : vector<16xf32> to vector<16x1xf32>
    %33 = vector.broadcast %32 : vector<16x1xf32> to vector<16x16xf32>
    %34 = arith.subf %30, %33 : vector<16x16xf32>
    %35 = math.exp %34 : vector<16x16xf32>
    %cst_17 = arith.constant 0.000000e+00 : f32
    %36 = vector.broadcast %cst_17 : f32 to vector<16x16xf32>
    %37 = arith.select %3, %35, %36 : vector<16x16xi1>, vector<16x16xf32>
    %cst_18 = arith.constant dense<0.000000e+00> : vector<16xf32>
    %38 = vector.multi_reduction <add>, %37, %cst_18 [1] : vector<16x16xf32> to vector<16xf32>
    %39 = vector.shape_cast %38 : vector<16xf32> to vector<16x1xf32>
    %cst_19 = arith.constant 9.99999968E-21 : f32
    %40 = vector.broadcast %cst_19 : f32 to vector<16x1xf32>
    %41 = arith.maximumf %39, %40 : vector<16x1xf32>
    %42 = tpu.reciprocal %41 {approx = true} : vector<16x1xf32> -> vector<16x1xf32>
    %43 = vector.broadcast %42 : vector<16x1xf32> to vector<16x16xf32>
    %44 = arith.mulf %37, %43 : vector<16x16xf32>
    %cst_20 = arith.constant dense<0.000000e+00> : vector<16x12xf32>
    %45 = tpu.matmul %44, %18, %cst_20 {dimension_numbers = #tpu.dot_dimension_numbers<[1], [0], [0], [1], [0, 0, 1, 1], [], []>} : vector<16x16xf32>, vector<16x12xf32>, vector<16x12xf32> -> vector<16x12xf32>
    %46 = vector.extract_strided_slice %14 {offsets = [0, 0], sizes = [16, 12], strides = [1, 1]} : vector<16x144xf32> to vector<16x12xf32>
    %47 = vector.extract_strided_slice %11 {offsets = [0, 24], sizes = [16, 1], strides = [1, 1]} : vector<16x48xf32> to vector<16x1xf32>
    %48 = vector.extract_strided_slice %12 {offsets = [36, 0], sizes = [1, 16], strides = [1, 1]} : vector<48x16xf32> to vector<1x16xf32>
    %49 = vector.broadcast %47 : vector<16x1xf32> to vector<16x16xf32>
    %50 = vector.broadcast %48 : vector<1x16xf32> to vector<16x16xf32>
    %51 = arith.addf %49, %50 : vector<16x16xf32>
    %cst_21 = arith.constant 0.000000e+00 : f32
    %52 = vector.broadcast %cst_21 : f32 to vector<16x16xf32>
    %53 = arith.cmpf ogt, %51, %52 : vector<16x16xf32>
    %cst_22 = arith.constant 2.000000e-01 : f32
    %54 = vector.broadcast %cst_22 : f32 to vector<16x16xf32>
    %55 = arith.mulf %54, %51 : vector<16x16xf32>
    %56 = arith.select %53, %51, %55 : vector<16x16xi1>, vector<16x16xf32>
    %cst_23 = arith.constant -1.000000e+30 : f32
    %57 = vector.broadcast %cst_23 : f32 to vector<16x16xf32>
    %58 = arith.select %6, %56, %57 : vector<16x16xi1>, vector<16x16xf32>
    %cst_24 = arith.constant dense<0xFF800000> : vector<16xf32>
    %59 = vector.multi_reduction <maximumf>, %58, %cst_24 [1] : vector<16x16xf32> to vector<16xf32>
    %60 = vector.shape_cast %59 : vector<16xf32> to vector<16x1xf32>
    %61 = vector.broadcast %60 : vector<16x1xf32> to vector<16x16xf32>
    %62 = arith.subf %58, %61 : vector<16x16xf32>
    %63 = math.exp %62 : vector<16x16xf32>
    %cst_25 = arith.constant 0.000000e+00 : f32
    %64 = vector.broadcast %cst_25 : f32 to vector<16x16xf32>
    %65 = arith.select %6, %63, %64 : vector<16x16xi1>, vector<16x16xf32>
    %cst_26 = arith.constant dense<0.000000e+00> : vector<16xf32>
    %66 = vector.multi_reduction <add>, %65, %cst_26 [1] : vector<16x16xf32> to vector<16xf32>
    %67 = vector.shape_cast %66 : vector<16xf32> to vector<16x1xf32>
    %cst_27 = arith.constant 9.99999968E-21 : f32
    %68 = vector.broadcast %cst_27 : f32 to vector<16x1xf32>
    %69 = arith.maximumf %67, %68 : vector<16x1xf32>
    %70 = tpu.reciprocal %69 {approx = true} : vector<16x1xf32> -> vector<16x1xf32>
    %71 = vector.broadcast %70 : vector<16x1xf32> to vector<16x16xf32>
    %72 = arith.mulf %65, %71 : vector<16x16xf32>
    %cst_28 = arith.constant dense<0.000000e+00> : vector<16x12xf32>
    %73 = tpu.matmul %72, %46, %cst_28 {dimension_numbers = #tpu.dot_dimension_numbers<[1], [0], [0], [1], [0, 0, 1, 1], [], []>} : vector<16x16xf32>, vector<16x12xf32>, vector<16x12xf32> -> vector<16x12xf32>
    %cst_29 = arith.constant 5.000000e-01 : f32
    %74 = vector.broadcast %cst_29 : f32 to vector<16x12xf32>
    %75 = arith.mulf %74, %73 : vector<16x12xf32>
    %cst_30 = arith.constant 5.000000e-01 : f32
    %76 = vector.broadcast %cst_30 : f32 to vector<16x12xf32>
    %77 = arith.mulf %76, %45 : vector<16x12xf32>
    %78 = arith.addf %75, %77 : vector<16x12xf32>
    %79 = vector.extract_strided_slice %17 {offsets = [0, 0], sizes = [16, 12], strides = [1, 1]} : vector<16x144xf32> to vector<16x12xf32>
    %80 = arith.addf %78, %79 : vector<16x12xf32>
    %81 = vector.extract_strided_slice %13 {offsets = [0, 12], sizes = [16, 12], strides = [1, 1]} : vector<16x144xf32> to vector<16x12xf32>
    %82 = vector.extract_strided_slice %11 {offsets = [0, 1], sizes = [16, 1], strides = [1, 1]} : vector<16x48xf32> to vector<16x1xf32>
    %83 = vector.extract_strided_slice %12 {offsets = [13, 0], sizes = [1, 16], strides = [1, 1]} : vector<48x16xf32> to vector<1x16xf32>
    %84 = vector.broadcast %82 : vector<16x1xf32> to vector<16x16xf32>
    %85 = vector.broadcast %83 : vector<1x16xf32> to vector<16x16xf32>
    %86 = arith.addf %84, %85 : vector<16x16xf32>
    %cst_31 = arith.constant 0.000000e+00 : f32
    %87 = vector.broadcast %cst_31 : f32 to vector<16x16xf32>
    %88 = arith.cmpf ogt, %86, %87 : vector<16x16xf32>
    %cst_32 = arith.constant 2.000000e-01 : f32
    %89 = vector.broadcast %cst_32 : f32 to vector<16x16xf32>
    %90 = arith.mulf %89, %86 : vector<16x16xf32>
    %91 = arith.select %88, %86, %90 : vector<16x16xi1>, vector<16x16xf32>
    %cst_33 = arith.constant -1.000000e+30 : f32
    %92 = vector.broadcast %cst_33 : f32 to vector<16x16xf32>
    %93 = arith.select %3, %91, %92 : vector<16x16xi1>, vector<16x16xf32>
    %cst_34 = arith.constant dense<0xFF800000> : vector<16xf32>
    %94 = vector.multi_reduction <maximumf>, %93, %cst_34 [1] : vector<16x16xf32> to vector<16xf32>
    %95 = vector.shape_cast %94 : vector<16xf32> to vector<16x1xf32>
    %96 = vector.broadcast %95 : vector<16x1xf32> to vector<16x16xf32>
    %97 = arith.subf %93, %96 : vector<16x16xf32>
    %98 = math.exp %97 : vector<16x16xf32>
    %cst_35 = arith.constant 0.000000e+00 : f32
    %99 = vector.broadcast %cst_35 : f32 to vector<16x16xf32>
    %100 = arith.select %3, %98, %99 : vector<16x16xi1>, vector<16x16xf32>
    %cst_36 = arith.constant dense<0.000000e+00> : vector<16xf32>
    %101 = vector.multi_reduction <add>, %100, %cst_36 [1] : vector<16x16xf32> to vector<16xf32>
    %102 = vector.shape_cast %101 : vector<16xf32> to vector<16x1xf32>
    %cst_37 = arith.constant 9.99999968E-21 : f32
    %103 = vector.broadcast %cst_37 : f32 to vector<16x1xf32>
    %104 = arith.maximumf %102, %103 : vector<16x1xf32>
    %105 = tpu.reciprocal %104 {approx = true} : vector<16x1xf32> -> vector<16x1xf32>
    %106 = vector.broadcast %105 : vector<16x1xf32> to vector<16x16xf32>
    %107 = arith.mulf %100, %106 : vector<16x16xf32>
    %cst_38 = arith.constant dense<0.000000e+00> : vector<16x12xf32>
    %108 = tpu.matmul %107, %81, %cst_38 {dimension_numbers = #tpu.dot_dimension_numbers<[1], [0], [0], [1], [0, 0, 1, 1], [], []>} : vector<16x16xf32>, vector<16x12xf32>, vector<16x12xf32> -> vector<16x12xf32>
    %109 = vector.extract_strided_slice %14 {offsets = [0, 12], sizes = [16, 12], strides = [1, 1]} : vector<16x144xf32> to vector<16x12xf32>
    %110 = vector.extract_strided_slice %11 {offsets = [0, 25], sizes = [16, 1], strides = [1, 1]} : vector<16x48xf32> to vector<16x1xf32>
    %111 = vector.extract_strided_slice %12 {offsets = [37, 0], sizes = [1, 16], strides = [1, 1]} : vector<48x16xf32> to vector<1x16xf32>
    %112 = vector.broadcast %110 : vector<16x1xf32> to vector<16x16xf32>
    %113 = vector.broadcast %111 : vector<1x16xf32> to vector<16x16xf32>
    %114 = arith.addf %112, %113 : vector<16x16xf32>
    %cst_39 = arith.constant 0.000000e+00 : f32
    %115 = vector.broadcast %cst_39 : f32 to vector<16x16xf32>
    %116 = arith.cmpf ogt, %114, %115 : vector<16x16xf32>
    %cst_40 = arith.constant 2.000000e-01 : f32
    %117 = vector.broadcast %cst_40 : f32 to vector<16x16xf32>
    %118 = arith.mulf %117, %114 : vector<16x16xf32>
    %119 = arith.select %116, %114, %118 : vector<16x16xi1>, vector<16x16xf32>
    %cst_41 = arith.constant -1.000000e+30 : f32
    %120 = vector.broadcast %cst_41 : f32 to vector<16x16xf32>
    %121 = arith.select %6, %119, %120 : vector<16x16xi1>, vector<16x16xf32>
    %cst_42 = arith.constant dense<0xFF800000> : vector<16xf32>
    %122 = vector.multi_reduction <maximumf>, %121, %cst_42 [1] : vector<16x16xf32> to vector<16xf32>
    %123 = vector.shape_cast %122 : vector<16xf32> to vector<16x1xf32>
    %124 = vector.broadcast %123 : vector<16x1xf32> to vector<16x16xf32>
    %125 = arith.subf %121, %124 : vector<16x16xf32>
    %126 = math.exp %125 : vector<16x16xf32>
    %cst_43 = arith.constant 0.000000e+00 : f32
    %127 = vector.broadcast %cst_43 : f32 to vector<16x16xf32>
    %128 = arith.select %6, %126, %127 : vector<16x16xi1>, vector<16x16xf32>
    %cst_44 = arith.constant dense<0.000000e+00> : vector<16xf32>
    %129 = vector.multi_reduction <add>, %128, %cst_44 [1] : vector<16x16xf32> to vector<16xf32>
    %130 = vector.shape_cast %129 : vector<16xf32> to vector<16x1xf32>
    %cst_45 = arith.constant 9.99999968E-21 : f32
    %131 = vector.broadcast %cst_45 : f32 to vector<16x1xf32>
    %132 = arith.maximumf %130, %131 : vector<16x1xf32>
    %133 = tpu.reciprocal %132 {approx = true} : vector<16x1xf32> -> vector<16x1xf32>
    %134 = vector.broadcast %133 : vector<16x1xf32> to vector<16x16xf32>
    %135 = arith.mulf %128, %134 : vector<16x16xf32>
    %cst_46 = arith.constant dense<0.000000e+00> : vector<16x12xf32>
    %136 = tpu.matmul %135, %109, %cst_46 {dimension_numbers = #tpu.dot_dimension_numbers<[1], [0], [0], [1], [0, 0, 1, 1], [], []>} : vector<16x16xf32>, vector<16x12xf32>, vector<16x12xf32> -> vector<16x12xf32>
    %cst_47 = arith.constant 5.000000e-01 : f32
    %137 = vector.broadcast %cst_47 : f32 to vector<16x12xf32>
    %138 = arith.mulf %137, %136 : vector<16x12xf32>
    %cst_48 = arith.constant 5.000000e-01 : f32
    %139 = vector.broadcast %cst_48 : f32 to vector<16x12xf32>
    %140 = arith.mulf %139, %108 : vector<16x12xf32>
    %141 = arith.addf %138, %140 : vector<16x12xf32>
    %142 = vector.extract_strided_slice %17 {offsets = [0, 12], sizes = [16, 12], strides = [1, 1]} : vector<16x144xf32> to vector<16x12xf32>
    %143 = arith.addf %141, %142 : vector<16x12xf32>
    %144 = vector.extract_strided_slice %13 {offsets = [0, 24], sizes = [16, 12], strides = [1, 1]} : vector<16x144xf32> to vector<16x12xf32>
    %145 = vector.extract_strided_slice %11 {offsets = [0, 2], sizes = [16, 1], strides = [1, 1]} : vector<16x48xf32> to vector<16x1xf32>
    %146 = vector.extract_strided_slice %12 {offsets = [14, 0], sizes = [1, 16], strides = [1, 1]} : vector<48x16xf32> to vector<1x16xf32>
    %147 = vector.broadcast %145 : vector<16x1xf32> to vector<16x16xf32>
    %148 = vector.broadcast %146 : vector<1x16xf32> to vector<16x16xf32>
    %149 = arith.addf %147, %148 : vector<16x16xf32>
    %cst_49 = arith.constant 0.000000e+00 : f32
    %150 = vector.broadcast %cst_49 : f32 to vector<16x16xf32>
    %151 = arith.cmpf ogt, %149, %150 : vector<16x16xf32>
    %cst_50 = arith.constant 2.000000e-01 : f32
    %152 = vector.broadcast %cst_50 : f32 to vector<16x16xf32>
    %153 = arith.mulf %152, %149 : vector<16x16xf32>
    %154 = arith.select %151, %149, %153 : vector<16x16xi1>, vector<16x16xf32>
    %cst_51 = arith.constant -1.000000e+30 : f32
    %155 = vector.broadcast %cst_51 : f32 to vector<16x16xf32>
    %156 = arith.select %3, %154, %155 : vector<16x16xi1>, vector<16x16xf32>
    %cst_52 = arith.constant dense<0xFF800000> : vector<16xf32>
    %157 = vector.multi_reduction <maximumf>, %156, %cst_52 [1] : vector<16x16xf32> to vector<16xf32>
    %158 = vector.shape_cast %157 : vector<16xf32> to vector<16x1xf32>
    %159 = vector.broadcast %158 : vector<16x1xf32> to vector<16x16xf32>
    %160 = arith.subf %156, %159 : vector<16x16xf32>
    %161 = math.exp %160 : vector<16x16xf32>
    %cst_53 = arith.constant 0.000000e+00 : f32
    %162 = vector.broadcast %cst_53 : f32 to vector<16x16xf32>
    %163 = arith.select %3, %161, %162 : vector<16x16xi1>, vector<16x16xf32>
    %cst_54 = arith.constant dense<0.000000e+00> : vector<16xf32>
    %164 = vector.multi_reduction <add>, %163, %cst_54 [1] : vector<16x16xf32> to vector<16xf32>
    %165 = vector.shape_cast %164 : vector<16xf32> to vector<16x1xf32>
    %cst_55 = arith.constant 9.99999968E-21 : f32
    %166 = vector.broadcast %cst_55 : f32 to vector<16x1xf32>
    %167 = arith.maximumf %165, %166 : vector<16x1xf32>
    %168 = tpu.reciprocal %167 {approx = true} : vector<16x1xf32> -> vector<16x1xf32>
    %169 = vector.broadcast %168 : vector<16x1xf32> to vector<16x16xf32>
    %170 = arith.mulf %163, %169 : vector<16x16xf32>
    %cst_56 = arith.constant dense<0.000000e+00> : vector<16x12xf32>
    %171 = tpu.matmul %170, %144, %cst_56 {dimension_numbers = #tpu.dot_dimension_numbers<[1], [0], [0], [1], [0, 0, 1, 1], [], []>} : vector<16x16xf32>, vector<16x12xf32>, vector<16x12xf32> -> vector<16x12xf32>
    %172 = vector.extract_strided_slice %14 {offsets = [0, 24], sizes = [16, 12], strides = [1, 1]} : vector<16x144xf32> to vector<16x12xf32>
    %173 = vector.extract_strided_slice %11 {offsets = [0, 26], sizes = [16, 1], strides = [1, 1]} : vector<16x48xf32> to vector<16x1xf32>
    %174 = vector.extract_strided_slice %12 {offsets = [38, 0], sizes = [1, 16], strides = [1, 1]} : vector<48x16xf32> to vector<1x16xf32>
    %175 = vector.broadcast %173 : vector<16x1xf32> to vector<16x16xf32>
    %176 = vector.broadcast %174 : vector<1x16xf32> to vector<16x16xf32>
    %177 = arith.addf %175, %176 : vector<16x16xf32>
    %cst_57 = arith.constant 0.000000e+00 : f32
    %178 = vector.broadcast %cst_57 : f32 to vector<16x16xf32>
    %179 = arith.cmpf ogt, %177, %178 : vector<16x16xf32>
    %cst_58 = arith.constant 2.000000e-01 : f32
    %180 = vector.broadcast %cst_58 : f32 to vector<16x16xf32>
    %181 = arith.mulf %180, %177 : vector<16x16xf32>
    %182 = arith.select %179, %177, %181 : vector<16x16xi1>, vector<16x16xf32>
    %cst_59 = arith.constant -1.000000e+30 : f32
    %183 = vector.broadcast %cst_59 : f32 to vector<16x16xf32>
    %184 = arith.select %6, %182, %183 : vector<16x16xi1>, vector<16x16xf32>
    %cst_60 = arith.constant dense<0xFF800000> : vector<16xf32>
    %185 = vector.multi_reduction <maximumf>, %184, %cst_60 [1] : vector<16x16xf32> to vector<16xf32>
    %186 = vector.shape_cast %185 : vector<16xf32> to vector<16x1xf32>
    %187 = vector.broadcast %186 : vector<16x1xf32> to vector<16x16xf32>
    %188 = arith.subf %184, %187 : vector<16x16xf32>
    %189 = math.exp %188 : vector<16x16xf32>
    %cst_61 = arith.constant 0.000000e+00 : f32
    %190 = vector.broadcast %cst_61 : f32 to vector<16x16xf32>
    %191 = arith.select %6, %189, %190 : vector<16x16xi1>, vector<16x16xf32>
    %cst_62 = arith.constant dense<0.000000e+00> : vector<16xf32>
    %192 = vector.multi_reduction <add>, %191, %cst_62 [1] : vector<16x16xf32> to vector<16xf32>
    %193 = vector.shape_cast %192 : vector<16xf32> to vector<16x1xf32>
    %cst_63 = arith.constant 9.99999968E-21 : f32
    %194 = vector.broadcast %cst_63 : f32 to vector<16x1xf32>
    %195 = arith.maximumf %193, %194 : vector<16x1xf32>
    %196 = tpu.reciprocal %195 {approx = true} : vector<16x1xf32> -> vector<16x1xf32>
    %197 = vector.broadcast %196 : vector<16x1xf32> to vector<16x16xf32>
    %198 = arith.mulf %191, %197 : vector<16x16xf32>
    %cst_64 = arith.constant dense<0.000000e+00> : vector<16x12xf32>
    %199 = tpu.matmul %198, %172, %cst_64 {dimension_numbers = #tpu.dot_dimension_numbers<[1], [0], [0], [1], [0, 0, 1, 1], [], []>} : vector<16x16xf32>, vector<16x12xf32>, vector<16x12xf32> -> vector<16x12xf32>
    %cst_65 = arith.constant 5.000000e-01 : f32
    %200 = vector.broadcast %cst_65 : f32 to vector<16x12xf32>
    %201 = arith.mulf %200, %199 : vector<16x12xf32>
    %cst_66 = arith.constant 5.000000e-01 : f32
    %202 = vector.broadcast %cst_66 : f32 to vector<16x12xf32>
    %203 = arith.mulf %202, %171 : vector<16x12xf32>
    %204 = arith.addf %201, %203 : vector<16x12xf32>
    %205 = vector.extract_strided_slice %17 {offsets = [0, 24], sizes = [16, 12], strides = [1, 1]} : vector<16x144xf32> to vector<16x12xf32>
    %206 = arith.addf %204, %205 : vector<16x12xf32>
    %207 = vector.extract_strided_slice %13 {offsets = [0, 36], sizes = [16, 12], strides = [1, 1]} : vector<16x144xf32> to vector<16x12xf32>
    %208 = vector.extract_strided_slice %11 {offsets = [0, 3], sizes = [16, 1], strides = [1, 1]} : vector<16x48xf32> to vector<16x1xf32>
    %209 = vector.extract_strided_slice %12 {offsets = [15, 0], sizes = [1, 16], strides = [1, 1]} : vector<48x16xf32> to vector<1x16xf32>
    %210 = vector.broadcast %208 : vector<16x1xf32> to vector<16x16xf32>
    %211 = vector.broadcast %209 : vector<1x16xf32> to vector<16x16xf32>
    %212 = arith.addf %210, %211 : vector<16x16xf32>
    %cst_67 = arith.constant 0.000000e+00 : f32
    %213 = vector.broadcast %cst_67 : f32 to vector<16x16xf32>
    %214 = arith.cmpf ogt, %212, %213 : vector<16x16xf32>
    %cst_68 = arith.constant 2.000000e-01 : f32
    %215 = vector.broadcast %cst_68 : f32 to vector<16x16xf32>
    %216 = arith.mulf %215, %212 : vector<16x16xf32>
    %217 = arith.select %214, %212, %216 : vector<16x16xi1>, vector<16x16xf32>
    %cst_69 = arith.constant -1.000000e+30 : f32
    %218 = vector.broadcast %cst_69 : f32 to vector<16x16xf32>
    %219 = arith.select %3, %217, %218 : vector<16x16xi1>, vector<16x16xf32>
    %cst_70 = arith.constant dense<0xFF800000> : vector<16xf32>
    %220 = vector.multi_reduction <maximumf>, %219, %cst_70 [1] : vector<16x16xf32> to vector<16xf32>
    %221 = vector.shape_cast %220 : vector<16xf32> to vector<16x1xf32>
    %222 = vector.broadcast %221 : vector<16x1xf32> to vector<16x16xf32>
    %223 = arith.subf %219, %222 : vector<16x16xf32>
    %224 = math.exp %223 : vector<16x16xf32>
    %cst_71 = arith.constant 0.000000e+00 : f32
    %225 = vector.broadcast %cst_71 : f32 to vector<16x16xf32>
    %226 = arith.select %3, %224, %225 : vector<16x16xi1>, vector<16x16xf32>
    %cst_72 = arith.constant dense<0.000000e+00> : vector<16xf32>
    %227 = vector.multi_reduction <add>, %226, %cst_72 [1] : vector<16x16xf32> to vector<16xf32>
    %228 = vector.shape_cast %227 : vector<16xf32> to vector<16x1xf32>
    %cst_73 = arith.constant 9.99999968E-21 : f32
    %229 = vector.broadcast %cst_73 : f32 to vector<16x1xf32>
    %230 = arith.maximumf %228, %229 : vector<16x1xf32>
    %231 = tpu.reciprocal %230 {approx = true} : vector<16x1xf32> -> vector<16x1xf32>
    %232 = vector.broadcast %231 : vector<16x1xf32> to vector<16x16xf32>
    %233 = arith.mulf %226, %232 : vector<16x16xf32>
    %cst_74 = arith.constant dense<0.000000e+00> : vector<16x12xf32>
    %234 = tpu.matmul %233, %207, %cst_74 {dimension_numbers = #tpu.dot_dimension_numbers<[1], [0], [0], [1], [0, 0, 1, 1], [], []>} : vector<16x16xf32>, vector<16x12xf32>, vector<16x12xf32> -> vector<16x12xf32>
    %235 = vector.extract_strided_slice %14 {offsets = [0, 36], sizes = [16, 12], strides = [1, 1]} : vector<16x144xf32> to vector<16x12xf32>
    %236 = vector.extract_strided_slice %11 {offsets = [0, 27], sizes = [16, 1], strides = [1, 1]} : vector<16x48xf32> to vector<16x1xf32>
    %237 = vector.extract_strided_slice %12 {offsets = [39, 0], sizes = [1, 16], strides = [1, 1]} : vector<48x16xf32> to vector<1x16xf32>
    %238 = vector.broadcast %236 : vector<16x1xf32> to vector<16x16xf32>
    %239 = vector.broadcast %237 : vector<1x16xf32> to vector<16x16xf32>
    %240 = arith.addf %238, %239 : vector<16x16xf32>
    %cst_75 = arith.constant 0.000000e+00 : f32
    %241 = vector.broadcast %cst_75 : f32 to vector<16x16xf32>
    %242 = arith.cmpf ogt, %240, %241 : vector<16x16xf32>
    %cst_76 = arith.constant 2.000000e-01 : f32
    %243 = vector.broadcast %cst_76 : f32 to vector<16x16xf32>
    %244 = arith.mulf %243, %240 : vector<16x16xf32>
    %245 = arith.select %242, %240, %244 : vector<16x16xi1>, vector<16x16xf32>
    %cst_77 = arith.constant -1.000000e+30 : f32
    %246 = vector.broadcast %cst_77 : f32 to vector<16x16xf32>
    %247 = arith.select %6, %245, %246 : vector<16x16xi1>, vector<16x16xf32>
    %cst_78 = arith.constant dense<0xFF800000> : vector<16xf32>
    %248 = vector.multi_reduction <maximumf>, %247, %cst_78 [1] : vector<16x16xf32> to vector<16xf32>
    %249 = vector.shape_cast %248 : vector<16xf32> to vector<16x1xf32>
    %250 = vector.broadcast %249 : vector<16x1xf32> to vector<16x16xf32>
    %251 = arith.subf %247, %250 : vector<16x16xf32>
    %252 = math.exp %251 : vector<16x16xf32>
    %cst_79 = arith.constant 0.000000e+00 : f32
    %253 = vector.broadcast %cst_79 : f32 to vector<16x16xf32>
    %254 = arith.select %6, %252, %253 : vector<16x16xi1>, vector<16x16xf32>
    %cst_80 = arith.constant dense<0.000000e+00> : vector<16xf32>
    %255 = vector.multi_reduction <add>, %254, %cst_80 [1] : vector<16x16xf32> to vector<16xf32>
    %256 = vector.shape_cast %255 : vector<16xf32> to vector<16x1xf32>
    %cst_81 = arith.constant 9.99999968E-21 : f32
    %257 = vector.broadcast %cst_81 : f32 to vector<16x1xf32>
    %258 = arith.maximumf %256, %257 : vector<16x1xf32>
    %259 = tpu.reciprocal %258 {approx = true} : vector<16x1xf32> -> vector<16x1xf32>
    %260 = vector.broadcast %259 : vector<16x1xf32> to vector<16x16xf32>
    %261 = arith.mulf %254, %260 : vector<16x16xf32>
    %cst_82 = arith.constant dense<0.000000e+00> : vector<16x12xf32>
    %262 = tpu.matmul %261, %235, %cst_82 {dimension_numbers = #tpu.dot_dimension_numbers<[1], [0], [0], [1], [0, 0, 1, 1], [], []>} : vector<16x16xf32>, vector<16x12xf32>, vector<16x12xf32> -> vector<16x12xf32>
    %cst_83 = arith.constant 5.000000e-01 : f32
    %263 = vector.broadcast %cst_83 : f32 to vector<16x12xf32>
    %264 = arith.mulf %263, %262 : vector<16x12xf32>
    %cst_84 = arith.constant 5.000000e-01 : f32
    %265 = vector.broadcast %cst_84 : f32 to vector<16x12xf32>
    %266 = arith.mulf %265, %234 : vector<16x12xf32>
    %267 = arith.addf %264, %266 : vector<16x12xf32>
    %268 = vector.extract_strided_slice %17 {offsets = [0, 36], sizes = [16, 12], strides = [1, 1]} : vector<16x144xf32> to vector<16x12xf32>
    %269 = arith.addf %267, %268 : vector<16x12xf32>
    %270 = vector.extract_strided_slice %13 {offsets = [0, 48], sizes = [16, 12], strides = [1, 1]} : vector<16x144xf32> to vector<16x12xf32>
    %271 = vector.extract_strided_slice %11 {offsets = [0, 4], sizes = [16, 1], strides = [1, 1]} : vector<16x48xf32> to vector<16x1xf32>
    %272 = vector.extract_strided_slice %12 {offsets = [16, 0], sizes = [1, 16], strides = [1, 1]} : vector<48x16xf32> to vector<1x16xf32>
    %273 = vector.broadcast %271 : vector<16x1xf32> to vector<16x16xf32>
    %274 = vector.broadcast %272 : vector<1x16xf32> to vector<16x16xf32>
    %275 = arith.addf %273, %274 : vector<16x16xf32>
    %cst_85 = arith.constant 0.000000e+00 : f32
    %276 = vector.broadcast %cst_85 : f32 to vector<16x16xf32>
    %277 = arith.cmpf ogt, %275, %276 : vector<16x16xf32>
    %cst_86 = arith.constant 2.000000e-01 : f32
    %278 = vector.broadcast %cst_86 : f32 to vector<16x16xf32>
    %279 = arith.mulf %278, %275 : vector<16x16xf32>
    %280 = arith.select %277, %275, %279 : vector<16x16xi1>, vector<16x16xf32>
    %cst_87 = arith.constant -1.000000e+30 : f32
    %281 = vector.broadcast %cst_87 : f32 to vector<16x16xf32>
    %282 = arith.select %3, %280, %281 : vector<16x16xi1>, vector<16x16xf32>
    %cst_88 = arith.constant dense<0xFF800000> : vector<16xf32>
    %283 = vector.multi_reduction <maximumf>, %282, %cst_88 [1] : vector<16x16xf32> to vector<16xf32>
    %284 = vector.shape_cast %283 : vector<16xf32> to vector<16x1xf32>
    %285 = vector.broadcast %284 : vector<16x1xf32> to vector<16x16xf32>
    %286 = arith.subf %282, %285 : vector<16x16xf32>
    %287 = math.exp %286 : vector<16x16xf32>
    %cst_89 = arith.constant 0.000000e+00 : f32
    %288 = vector.broadcast %cst_89 : f32 to vector<16x16xf32>
    %289 = arith.select %3, %287, %288 : vector<16x16xi1>, vector<16x16xf32>
    %cst_90 = arith.constant dense<0.000000e+00> : vector<16xf32>
    %290 = vector.multi_reduction <add>, %289, %cst_90 [1] : vector<16x16xf32> to vector<16xf32>
    %291 = vector.shape_cast %290 : vector<16xf32> to vector<16x1xf32>
    %cst_91 = arith.constant 9.99999968E-21 : f32
    %292 = vector.broadcast %cst_91 : f32 to vector<16x1xf32>
    %293 = arith.maximumf %291, %292 : vector<16x1xf32>
    %294 = tpu.reciprocal %293 {approx = true} : vector<16x1xf32> -> vector<16x1xf32>
    %295 = vector.broadcast %294 : vector<16x1xf32> to vector<16x16xf32>
    %296 = arith.mulf %289, %295 : vector<16x16xf32>
    %cst_92 = arith.constant dense<0.000000e+00> : vector<16x12xf32>
    %297 = tpu.matmul %296, %270, %cst_92 {dimension_numbers = #tpu.dot_dimension_numbers<[1], [0], [0], [1], [0, 0, 1, 1], [], []>} : vector<16x16xf32>, vector<16x12xf32>, vector<16x12xf32> -> vector<16x12xf32>
    %298 = vector.extract_strided_slice %14 {offsets = [0, 48], sizes = [16, 12], strides = [1, 1]} : vector<16x144xf32> to vector<16x12xf32>
    %299 = vector.extract_strided_slice %11 {offsets = [0, 28], sizes = [16, 1], strides = [1, 1]} : vector<16x48xf32> to vector<16x1xf32>
    %300 = vector.extract_strided_slice %12 {offsets = [40, 0], sizes = [1, 16], strides = [1, 1]} : vector<48x16xf32> to vector<1x16xf32>
    %301 = vector.broadcast %299 : vector<16x1xf32> to vector<16x16xf32>
    %302 = vector.broadcast %300 : vector<1x16xf32> to vector<16x16xf32>
    %303 = arith.addf %301, %302 : vector<16x16xf32>
    %cst_93 = arith.constant 0.000000e+00 : f32
    %304 = vector.broadcast %cst_93 : f32 to vector<16x16xf32>
    %305 = arith.cmpf ogt, %303, %304 : vector<16x16xf32>
    %cst_94 = arith.constant 2.000000e-01 : f32
    %306 = vector.broadcast %cst_94 : f32 to vector<16x16xf32>
    %307 = arith.mulf %306, %303 : vector<16x16xf32>
    %308 = arith.select %305, %303, %307 : vector<16x16xi1>, vector<16x16xf32>
    %cst_95 = arith.constant -1.000000e+30 : f32
    %309 = vector.broadcast %cst_95 : f32 to vector<16x16xf32>
    %310 = arith.select %6, %308, %309 : vector<16x16xi1>, vector<16x16xf32>
    %cst_96 = arith.constant dense<0xFF800000> : vector<16xf32>
    %311 = vector.multi_reduction <maximumf>, %310, %cst_96 [1] : vector<16x16xf32> to vector<16xf32>
    %312 = vector.shape_cast %311 : vector<16xf32> to vector<16x1xf32>
    %313 = vector.broadcast %312 : vector<16x1xf32> to vector<16x16xf32>
    %314 = arith.subf %310, %313 : vector<16x16xf32>
    %315 = math.exp %314 : vector<16x16xf32>
    %cst_97 = arith.constant 0.000000e+00 : f32
    %316 = vector.broadcast %cst_97 : f32 to vector<16x16xf32>
    %317 = arith.select %6, %315, %316 : vector<16x16xi1>, vector<16x16xf32>
    %cst_98 = arith.constant dense<0.000000e+00> : vector<16xf32>
    %318 = vector.multi_reduction <add>, %317, %cst_98 [1] : vector<16x16xf32> to vector<16xf32>
    %319 = vector.shape_cast %318 : vector<16xf32> to vector<16x1xf32>
    %cst_99 = arith.constant 9.99999968E-21 : f32
    %320 = vector.broadcast %cst_99 : f32 to vector<16x1xf32>
    %321 = arith.maximumf %319, %320 : vector<16x1xf32>
    %322 = tpu.reciprocal %321 {approx = true} : vector<16x1xf32> -> vector<16x1xf32>
    %323 = vector.broadcast %322 : vector<16x1xf32> to vector<16x16xf32>
    %324 = arith.mulf %317, %323 : vector<16x16xf32>
    %cst_100 = arith.constant dense<0.000000e+00> : vector<16x12xf32>
    %325 = tpu.matmul %324, %298, %cst_100 {dimension_numbers = #tpu.dot_dimension_numbers<[1], [0], [0], [1], [0, 0, 1, 1], [], []>} : vector<16x16xf32>, vector<16x12xf32>, vector<16x12xf32> -> vector<16x12xf32>
    %cst_101 = arith.constant 5.000000e-01 : f32
    %326 = vector.broadcast %cst_101 : f32 to vector<16x12xf32>
    %327 = arith.mulf %326, %325 : vector<16x12xf32>
    %cst_102 = arith.constant 5.000000e-01 : f32
    %328 = vector.broadcast %cst_102 : f32 to vector<16x12xf32>
    %329 = arith.mulf %328, %297 : vector<16x12xf32>
    %330 = arith.addf %327, %329 : vector<16x12xf32>
    %331 = vector.extract_strided_slice %17 {offsets = [0, 48], sizes = [16, 12], strides = [1, 1]} : vector<16x144xf32> to vector<16x12xf32>
    %332 = arith.addf %330, %331 : vector<16x12xf32>
    %333 = vector.extract_strided_slice %13 {offsets = [0, 60], sizes = [16, 12], strides = [1, 1]} : vector<16x144xf32> to vector<16x12xf32>
    %334 = vector.extract_strided_slice %11 {offsets = [0, 5], sizes = [16, 1], strides = [1, 1]} : vector<16x48xf32> to vector<16x1xf32>
    %335 = vector.extract_strided_slice %12 {offsets = [17, 0], sizes = [1, 16], strides = [1, 1]} : vector<48x16xf32> to vector<1x16xf32>
    %336 = vector.broadcast %334 : vector<16x1xf32> to vector<16x16xf32>
    %337 = vector.broadcast %335 : vector<1x16xf32> to vector<16x16xf32>
    %338 = arith.addf %336, %337 : vector<16x16xf32>
    %cst_103 = arith.constant 0.000000e+00 : f32
    %339 = vector.broadcast %cst_103 : f32 to vector<16x16xf32>
    %340 = arith.cmpf ogt, %338, %339 : vector<16x16xf32>
    %cst_104 = arith.constant 2.000000e-01 : f32
    %341 = vector.broadcast %cst_104 : f32 to vector<16x16xf32>
    %342 = arith.mulf %341, %338 : vector<16x16xf32>
    %343 = arith.select %340, %338, %342 : vector<16x16xi1>, vector<16x16xf32>
    %cst_105 = arith.constant -1.000000e+30 : f32
    %344 = vector.broadcast %cst_105 : f32 to vector<16x16xf32>
    %345 = arith.select %3, %343, %344 : vector<16x16xi1>, vector<16x16xf32>
    %cst_106 = arith.constant dense<0xFF800000> : vector<16xf32>
    %346 = vector.multi_reduction <maximumf>, %345, %cst_106 [1] : vector<16x16xf32> to vector<16xf32>
    %347 = vector.shape_cast %346 : vector<16xf32> to vector<16x1xf32>
    %348 = vector.broadcast %347 : vector<16x1xf32> to vector<16x16xf32>
    %349 = arith.subf %345, %348 : vector<16x16xf32>
    %350 = math.exp %349 : vector<16x16xf32>
    %cst_107 = arith.constant 0.000000e+00 : f32
    %351 = vector.broadcast %cst_107 : f32 to vector<16x16xf32>
    %352 = arith.select %3, %350, %351 : vector<16x16xi1>, vector<16x16xf32>
    %cst_108 = arith.constant dense<0.000000e+00> : vector<16xf32>
    %353 = vector.multi_reduction <add>, %352, %cst_108 [1] : vector<16x16xf32> to vector<16xf32>
    %354 = vector.shape_cast %353 : vector<16xf32> to vector<16x1xf32>
    %cst_109 = arith.constant 9.99999968E-21 : f32
    %355 = vector.broadcast %cst_109 : f32 to vector<16x1xf32>
    %356 = arith.maximumf %354, %355 : vector<16x1xf32>
    %357 = tpu.reciprocal %356 {approx = true} : vector<16x1xf32> -> vector<16x1xf32>
    %358 = vector.broadcast %357 : vector<16x1xf32> to vector<16x16xf32>
    %359 = arith.mulf %352, %358 : vector<16x16xf32>
    %cst_110 = arith.constant dense<0.000000e+00> : vector<16x12xf32>
    %360 = tpu.matmul %359, %333, %cst_110 {dimension_numbers = #tpu.dot_dimension_numbers<[1], [0], [0], [1], [0, 0, 1, 1], [], []>} : vector<16x16xf32>, vector<16x12xf32>, vector<16x12xf32> -> vector<16x12xf32>
    %361 = vector.extract_strided_slice %14 {offsets = [0, 60], sizes = [16, 12], strides = [1, 1]} : vector<16x144xf32> to vector<16x12xf32>
    %362 = vector.extract_strided_slice %11 {offsets = [0, 29], sizes = [16, 1], strides = [1, 1]} : vector<16x48xf32> to vector<16x1xf32>
    %363 = vector.extract_strided_slice %12 {offsets = [41, 0], sizes = [1, 16], strides = [1, 1]} : vector<48x16xf32> to vector<1x16xf32>
    %364 = vector.broadcast %362 : vector<16x1xf32> to vector<16x16xf32>
    %365 = vector.broadcast %363 : vector<1x16xf32> to vector<16x16xf32>
    %366 = arith.addf %364, %365 : vector<16x16xf32>
    %cst_111 = arith.constant 0.000000e+00 : f32
    %367 = vector.broadcast %cst_111 : f32 to vector<16x16xf32>
    %368 = arith.cmpf ogt, %366, %367 : vector<16x16xf32>
    %cst_112 = arith.constant 2.000000e-01 : f32
    %369 = vector.broadcast %cst_112 : f32 to vector<16x16xf32>
    %370 = arith.mulf %369, %366 : vector<16x16xf32>
    %371 = arith.select %368, %366, %370 : vector<16x16xi1>, vector<16x16xf32>
    %cst_113 = arith.constant -1.000000e+30 : f32
    %372 = vector.broadcast %cst_113 : f32 to vector<16x16xf32>
    %373 = arith.select %6, %371, %372 : vector<16x16xi1>, vector<16x16xf32>
    %cst_114 = arith.constant dense<0xFF800000> : vector<16xf32>
    %374 = vector.multi_reduction <maximumf>, %373, %cst_114 [1] : vector<16x16xf32> to vector<16xf32>
    %375 = vector.shape_cast %374 : vector<16xf32> to vector<16x1xf32>
    %376 = vector.broadcast %375 : vector<16x1xf32> to vector<16x16xf32>
    %377 = arith.subf %373, %376 : vector<16x16xf32>
    %378 = math.exp %377 : vector<16x16xf32>
    %cst_115 = arith.constant 0.000000e+00 : f32
    %379 = vector.broadcast %cst_115 : f32 to vector<16x16xf32>
    %380 = arith.select %6, %378, %379 : vector<16x16xi1>, vector<16x16xf32>
    %cst_116 = arith.constant dense<0.000000e+00> : vector<16xf32>
    %381 = vector.multi_reduction <add>, %380, %cst_116 [1] : vector<16x16xf32> to vector<16xf32>
    %382 = vector.shape_cast %381 : vector<16xf32> to vector<16x1xf32>
    %cst_117 = arith.constant 9.99999968E-21 : f32
    %383 = vector.broadcast %cst_117 : f32 to vector<16x1xf32>
    %384 = arith.maximumf %382, %383 : vector<16x1xf32>
    %385 = tpu.reciprocal %384 {approx = true} : vector<16x1xf32> -> vector<16x1xf32>
    %386 = vector.broadcast %385 : vector<16x1xf32> to vector<16x16xf32>
    %387 = arith.mulf %380, %386 : vector<16x16xf32>
    %cst_118 = arith.constant dense<0.000000e+00> : vector<16x12xf32>
    %388 = tpu.matmul %387, %361, %cst_118 {dimension_numbers = #tpu.dot_dimension_numbers<[1], [0], [0], [1], [0, 0, 1, 1], [], []>} : vector<16x16xf32>, vector<16x12xf32>, vector<16x12xf32> -> vector<16x12xf32>
    %cst_119 = arith.constant 5.000000e-01 : f32
    %389 = vector.broadcast %cst_119 : f32 to vector<16x12xf32>
    %390 = arith.mulf %389, %388 : vector<16x12xf32>
    %cst_120 = arith.constant 5.000000e-01 : f32
    %391 = vector.broadcast %cst_120 : f32 to vector<16x12xf32>
    %392 = arith.mulf %391, %360 : vector<16x12xf32>
    %393 = arith.addf %390, %392 : vector<16x12xf32>
    %394 = vector.extract_strided_slice %17 {offsets = [0, 60], sizes = [16, 12], strides = [1, 1]} : vector<16x144xf32> to vector<16x12xf32>
    %395 = arith.addf %393, %394 : vector<16x12xf32>
    %396 = vector.extract_strided_slice %13 {offsets = [0, 72], sizes = [16, 12], strides = [1, 1]} : vector<16x144xf32> to vector<16x12xf32>
    %397 = vector.extract_strided_slice %11 {offsets = [0, 6], sizes = [16, 1], strides = [1, 1]} : vector<16x48xf32> to vector<16x1xf32>
    %398 = vector.extract_strided_slice %12 {offsets = [18, 0], sizes = [1, 16], strides = [1, 1]} : vector<48x16xf32> to vector<1x16xf32>
    %399 = vector.broadcast %397 : vector<16x1xf32> to vector<16x16xf32>
    %400 = vector.broadcast %398 : vector<1x16xf32> to vector<16x16xf32>
    %401 = arith.addf %399, %400 : vector<16x16xf32>
    %cst_121 = arith.constant 0.000000e+00 : f32
    %402 = vector.broadcast %cst_121 : f32 to vector<16x16xf32>
    %403 = arith.cmpf ogt, %401, %402 : vector<16x16xf32>
    %cst_122 = arith.constant 2.000000e-01 : f32
    %404 = vector.broadcast %cst_122 : f32 to vector<16x16xf32>
    %405 = arith.mulf %404, %401 : vector<16x16xf32>
    %406 = arith.select %403, %401, %405 : vector<16x16xi1>, vector<16x16xf32>
    %cst_123 = arith.constant -1.000000e+30 : f32
    %407 = vector.broadcast %cst_123 : f32 to vector<16x16xf32>
    %408 = arith.select %3, %406, %407 : vector<16x16xi1>, vector<16x16xf32>
    %cst_124 = arith.constant dense<0xFF800000> : vector<16xf32>
    %409 = vector.multi_reduction <maximumf>, %408, %cst_124 [1] : vector<16x16xf32> to vector<16xf32>
    %410 = vector.shape_cast %409 : vector<16xf32> to vector<16x1xf32>
    %411 = vector.broadcast %410 : vector<16x1xf32> to vector<16x16xf32>
    %412 = arith.subf %408, %411 : vector<16x16xf32>
    %413 = math.exp %412 : vector<16x16xf32>
    %cst_125 = arith.constant 0.000000e+00 : f32
    %414 = vector.broadcast %cst_125 : f32 to vector<16x16xf32>
    %415 = arith.select %3, %413, %414 : vector<16x16xi1>, vector<16x16xf32>
    %cst_126 = arith.constant dense<0.000000e+00> : vector<16xf32>
    %416 = vector.multi_reduction <add>, %415, %cst_126 [1] : vector<16x16xf32> to vector<16xf32>
    %417 = vector.shape_cast %416 : vector<16xf32> to vector<16x1xf32>
    %cst_127 = arith.constant 9.99999968E-21 : f32
    %418 = vector.broadcast %cst_127 : f32 to vector<16x1xf32>
    %419 = arith.maximumf %417, %418 : vector<16x1xf32>
    %420 = tpu.reciprocal %419 {approx = true} : vector<16x1xf32> -> vector<16x1xf32>
    %421 = vector.broadcast %420 : vector<16x1xf32> to vector<16x16xf32>
    %422 = arith.mulf %415, %421 : vector<16x16xf32>
    %cst_128 = arith.constant dense<0.000000e+00> : vector<16x12xf32>
    %423 = tpu.matmul %422, %396, %cst_128 {dimension_numbers = #tpu.dot_dimension_numbers<[1], [0], [0], [1], [0, 0, 1, 1], [], []>} : vector<16x16xf32>, vector<16x12xf32>, vector<16x12xf32> -> vector<16x12xf32>
    %424 = vector.extract_strided_slice %14 {offsets = [0, 72], sizes = [16, 12], strides = [1, 1]} : vector<16x144xf32> to vector<16x12xf32>
    %425 = vector.extract_strided_slice %11 {offsets = [0, 30], sizes = [16, 1], strides = [1, 1]} : vector<16x48xf32> to vector<16x1xf32>
    %426 = vector.extract_strided_slice %12 {offsets = [42, 0], sizes = [1, 16], strides = [1, 1]} : vector<48x16xf32> to vector<1x16xf32>
    %427 = vector.broadcast %425 : vector<16x1xf32> to vector<16x16xf32>
    %428 = vector.broadcast %426 : vector<1x16xf32> to vector<16x16xf32>
    %429 = arith.addf %427, %428 : vector<16x16xf32>
    %cst_129 = arith.constant 0.000000e+00 : f32
    %430 = vector.broadcast %cst_129 : f32 to vector<16x16xf32>
    %431 = arith.cmpf ogt, %429, %430 : vector<16x16xf32>
    %cst_130 = arith.constant 2.000000e-01 : f32
    %432 = vector.broadcast %cst_130 : f32 to vector<16x16xf32>
    %433 = arith.mulf %432, %429 : vector<16x16xf32>
    %434 = arith.select %431, %429, %433 : vector<16x16xi1>, vector<16x16xf32>
    %cst_131 = arith.constant -1.000000e+30 : f32
    %435 = vector.broadcast %cst_131 : f32 to vector<16x16xf32>
    %436 = arith.select %6, %434, %435 : vector<16x16xi1>, vector<16x16xf32>
    %cst_132 = arith.constant dense<0xFF800000> : vector<16xf32>
    %437 = vector.multi_reduction <maximumf>, %436, %cst_132 [1] : vector<16x16xf32> to vector<16xf32>
    %438 = vector.shape_cast %437 : vector<16xf32> to vector<16x1xf32>
    %439 = vector.broadcast %438 : vector<16x1xf32> to vector<16x16xf32>
    %440 = arith.subf %436, %439 : vector<16x16xf32>
    %441 = math.exp %440 : vector<16x16xf32>
    %cst_133 = arith.constant 0.000000e+00 : f32
    %442 = vector.broadcast %cst_133 : f32 to vector<16x16xf32>
    %443 = arith.select %6, %441, %442 : vector<16x16xi1>, vector<16x16xf32>
    %cst_134 = arith.constant dense<0.000000e+00> : vector<16xf32>
    %444 = vector.multi_reduction <add>, %443, %cst_134 [1] : vector<16x16xf32> to vector<16xf32>
    %445 = vector.shape_cast %444 : vector<16xf32> to vector<16x1xf32>
    %cst_135 = arith.constant 9.99999968E-21 : f32
    %446 = vector.broadcast %cst_135 : f32 to vector<16x1xf32>
    %447 = arith.maximumf %445, %446 : vector<16x1xf32>
    %448 = tpu.reciprocal %447 {approx = true} : vector<16x1xf32> -> vector<16x1xf32>
    %449 = vector.broadcast %448 : vector<16x1xf32> to vector<16x16xf32>
    %450 = arith.mulf %443, %449 : vector<16x16xf32>
    %cst_136 = arith.constant dense<0.000000e+00> : vector<16x12xf32>
    %451 = tpu.matmul %450, %424, %cst_136 {dimension_numbers = #tpu.dot_dimension_numbers<[1], [0], [0], [1], [0, 0, 1, 1], [], []>} : vector<16x16xf32>, vector<16x12xf32>, vector<16x12xf32> -> vector<16x12xf32>
    %cst_137 = arith.constant 5.000000e-01 : f32
    %452 = vector.broadcast %cst_137 : f32 to vector<16x12xf32>
    %453 = arith.mulf %452, %451 : vector<16x12xf32>
    %cst_138 = arith.constant 5.000000e-01 : f32
    %454 = vector.broadcast %cst_138 : f32 to vector<16x12xf32>
    %455 = arith.mulf %454, %423 : vector<16x12xf32>
    %456 = arith.addf %453, %455 : vector<16x12xf32>
    %457 = vector.extract_strided_slice %17 {offsets = [0, 72], sizes = [16, 12], strides = [1, 1]} : vector<16x144xf32> to vector<16x12xf32>
    %458 = arith.addf %456, %457 : vector<16x12xf32>
    %459 = vector.extract_strided_slice %13 {offsets = [0, 84], sizes = [16, 12], strides = [1, 1]} : vector<16x144xf32> to vector<16x12xf32>
    %460 = vector.extract_strided_slice %11 {offsets = [0, 7], sizes = [16, 1], strides = [1, 1]} : vector<16x48xf32> to vector<16x1xf32>
    %461 = vector.extract_strided_slice %12 {offsets = [19, 0], sizes = [1, 16], strides = [1, 1]} : vector<48x16xf32> to vector<1x16xf32>
    %462 = vector.broadcast %460 : vector<16x1xf32> to vector<16x16xf32>
    %463 = vector.broadcast %461 : vector<1x16xf32> to vector<16x16xf32>
    %464 = arith.addf %462, %463 : vector<16x16xf32>
    %cst_139 = arith.constant 0.000000e+00 : f32
    %465 = vector.broadcast %cst_139 : f32 to vector<16x16xf32>
    %466 = arith.cmpf ogt, %464, %465 : vector<16x16xf32>
    %cst_140 = arith.constant 2.000000e-01 : f32
    %467 = vector.broadcast %cst_140 : f32 to vector<16x16xf32>
    %468 = arith.mulf %467, %464 : vector<16x16xf32>
    %469 = arith.select %466, %464, %468 : vector<16x16xi1>, vector<16x16xf32>
    %cst_141 = arith.constant -1.000000e+30 : f32
    %470 = vector.broadcast %cst_141 : f32 to vector<16x16xf32>
    %471 = arith.select %3, %469, %470 : vector<16x16xi1>, vector<16x16xf32>
    %cst_142 = arith.constant dense<0xFF800000> : vector<16xf32>
    %472 = vector.multi_reduction <maximumf>, %471, %cst_142 [1] : vector<16x16xf32> to vector<16xf32>
    %473 = vector.shape_cast %472 : vector<16xf32> to vector<16x1xf32>
    %474 = vector.broadcast %473 : vector<16x1xf32> to vector<16x16xf32>
    %475 = arith.subf %471, %474 : vector<16x16xf32>
    %476 = math.exp %475 : vector<16x16xf32>
    %cst_143 = arith.constant 0.000000e+00 : f32
    %477 = vector.broadcast %cst_143 : f32 to vector<16x16xf32>
    %478 = arith.select %3, %476, %477 : vector<16x16xi1>, vector<16x16xf32>
    %cst_144 = arith.constant dense<0.000000e+00> : vector<16xf32>
    %479 = vector.multi_reduction <add>, %478, %cst_144 [1] : vector<16x16xf32> to vector<16xf32>
    %480 = vector.shape_cast %479 : vector<16xf32> to vector<16x1xf32>
    %cst_145 = arith.constant 9.99999968E-21 : f32
    %481 = vector.broadcast %cst_145 : f32 to vector<16x1xf32>
    %482 = arith.maximumf %480, %481 : vector<16x1xf32>
    %483 = tpu.reciprocal %482 {approx = true} : vector<16x1xf32> -> vector<16x1xf32>
    %484 = vector.broadcast %483 : vector<16x1xf32> to vector<16x16xf32>
    %485 = arith.mulf %478, %484 : vector<16x16xf32>
    %cst_146 = arith.constant dense<0.000000e+00> : vector<16x12xf32>
    %486 = tpu.matmul %485, %459, %cst_146 {dimension_numbers = #tpu.dot_dimension_numbers<[1], [0], [0], [1], [0, 0, 1, 1], [], []>} : vector<16x16xf32>, vector<16x12xf32>, vector<16x12xf32> -> vector<16x12xf32>
    %487 = vector.extract_strided_slice %14 {offsets = [0, 84], sizes = [16, 12], strides = [1, 1]} : vector<16x144xf32> to vector<16x12xf32>
    %488 = vector.extract_strided_slice %11 {offsets = [0, 31], sizes = [16, 1], strides = [1, 1]} : vector<16x48xf32> to vector<16x1xf32>
    %489 = vector.extract_strided_slice %12 {offsets = [43, 0], sizes = [1, 16], strides = [1, 1]} : vector<48x16xf32> to vector<1x16xf32>
    %490 = vector.broadcast %488 : vector<16x1xf32> to vector<16x16xf32>
    %491 = vector.broadcast %489 : vector<1x16xf32> to vector<16x16xf32>
    %492 = arith.addf %490, %491 : vector<16x16xf32>
    %cst_147 = arith.constant 0.000000e+00 : f32
    %493 = vector.broadcast %cst_147 : f32 to vector<16x16xf32>
    %494 = arith.cmpf ogt, %492, %493 : vector<16x16xf32>
    %cst_148 = arith.constant 2.000000e-01 : f32
    %495 = vector.broadcast %cst_148 : f32 to vector<16x16xf32>
    %496 = arith.mulf %495, %492 : vector<16x16xf32>
    %497 = arith.select %494, %492, %496 : vector<16x16xi1>, vector<16x16xf32>
    %cst_149 = arith.constant -1.000000e+30 : f32
    %498 = vector.broadcast %cst_149 : f32 to vector<16x16xf32>
    %499 = arith.select %6, %497, %498 : vector<16x16xi1>, vector<16x16xf32>
    %cst_150 = arith.constant dense<0xFF800000> : vector<16xf32>
    %500 = vector.multi_reduction <maximumf>, %499, %cst_150 [1] : vector<16x16xf32> to vector<16xf32>
    %501 = vector.shape_cast %500 : vector<16xf32> to vector<16x1xf32>
    %502 = vector.broadcast %501 : vector<16x1xf32> to vector<16x16xf32>
    %503 = arith.subf %499, %502 : vector<16x16xf32>
    %504 = math.exp %503 : vector<16x16xf32>
    %cst_151 = arith.constant 0.000000e+00 : f32
    %505 = vector.broadcast %cst_151 : f32 to vector<16x16xf32>
    %506 = arith.select %6, %504, %505 : vector<16x16xi1>, vector<16x16xf32>
    %cst_152 = arith.constant dense<0.000000e+00> : vector<16xf32>
    %507 = vector.multi_reduction <add>, %506, %cst_152 [1] : vector<16x16xf32> to vector<16xf32>
    %508 = vector.shape_cast %507 : vector<16xf32> to vector<16x1xf32>
    %cst_153 = arith.constant 9.99999968E-21 : f32
    %509 = vector.broadcast %cst_153 : f32 to vector<16x1xf32>
    %510 = arith.maximumf %508, %509 : vector<16x1xf32>
    %511 = tpu.reciprocal %510 {approx = true} : vector<16x1xf32> -> vector<16x1xf32>
    %512 = vector.broadcast %511 : vector<16x1xf32> to vector<16x16xf32>
    %513 = arith.mulf %506, %512 : vector<16x16xf32>
    %cst_154 = arith.constant dense<0.000000e+00> : vector<16x12xf32>
    %514 = tpu.matmul %513, %487, %cst_154 {dimension_numbers = #tpu.dot_dimension_numbers<[1], [0], [0], [1], [0, 0, 1, 1], [], []>} : vector<16x16xf32>, vector<16x12xf32>, vector<16x12xf32> -> vector<16x12xf32>
    %cst_155 = arith.constant 5.000000e-01 : f32
    %515 = vector.broadcast %cst_155 : f32 to vector<16x12xf32>
    %516 = arith.mulf %515, %514 : vector<16x12xf32>
    %cst_156 = arith.constant 5.000000e-01 : f32
    %517 = vector.broadcast %cst_156 : f32 to vector<16x12xf32>
    %518 = arith.mulf %517, %486 : vector<16x12xf32>
    %519 = arith.addf %516, %518 : vector<16x12xf32>
    %520 = vector.extract_strided_slice %17 {offsets = [0, 84], sizes = [16, 12], strides = [1, 1]} : vector<16x144xf32> to vector<16x12xf32>
    %521 = arith.addf %519, %520 : vector<16x12xf32>
    %522 = vector.extract_strided_slice %13 {offsets = [0, 96], sizes = [16, 12], strides = [1, 1]} : vector<16x144xf32> to vector<16x12xf32>
    %523 = vector.extract_strided_slice %11 {offsets = [0, 8], sizes = [16, 1], strides = [1, 1]} : vector<16x48xf32> to vector<16x1xf32>
    %524 = vector.extract_strided_slice %12 {offsets = [20, 0], sizes = [1, 16], strides = [1, 1]} : vector<48x16xf32> to vector<1x16xf32>
    %525 = vector.broadcast %523 : vector<16x1xf32> to vector<16x16xf32>
    %526 = vector.broadcast %524 : vector<1x16xf32> to vector<16x16xf32>
    %527 = arith.addf %525, %526 : vector<16x16xf32>
    %cst_157 = arith.constant 0.000000e+00 : f32
    %528 = vector.broadcast %cst_157 : f32 to vector<16x16xf32>
    %529 = arith.cmpf ogt, %527, %528 : vector<16x16xf32>
    %cst_158 = arith.constant 2.000000e-01 : f32
    %530 = vector.broadcast %cst_158 : f32 to vector<16x16xf32>
    %531 = arith.mulf %530, %527 : vector<16x16xf32>
    %532 = arith.select %529, %527, %531 : vector<16x16xi1>, vector<16x16xf32>
    %cst_159 = arith.constant -1.000000e+30 : f32
    %533 = vector.broadcast %cst_159 : f32 to vector<16x16xf32>
    %534 = arith.select %3, %532, %533 : vector<16x16xi1>, vector<16x16xf32>
    %cst_160 = arith.constant dense<0xFF800000> : vector<16xf32>
    %535 = vector.multi_reduction <maximumf>, %534, %cst_160 [1] : vector<16x16xf32> to vector<16xf32>
    %536 = vector.shape_cast %535 : vector<16xf32> to vector<16x1xf32>
    %537 = vector.broadcast %536 : vector<16x1xf32> to vector<16x16xf32>
    %538 = arith.subf %534, %537 : vector<16x16xf32>
    %539 = math.exp %538 : vector<16x16xf32>
    %cst_161 = arith.constant 0.000000e+00 : f32
    %540 = vector.broadcast %cst_161 : f32 to vector<16x16xf32>
    %541 = arith.select %3, %539, %540 : vector<16x16xi1>, vector<16x16xf32>
    %cst_162 = arith.constant dense<0.000000e+00> : vector<16xf32>
    %542 = vector.multi_reduction <add>, %541, %cst_162 [1] : vector<16x16xf32> to vector<16xf32>
    %543 = vector.shape_cast %542 : vector<16xf32> to vector<16x1xf32>
    %cst_163 = arith.constant 9.99999968E-21 : f32
    %544 = vector.broadcast %cst_163 : f32 to vector<16x1xf32>
    %545 = arith.maximumf %543, %544 : vector<16x1xf32>
    %546 = tpu.reciprocal %545 {approx = true} : vector<16x1xf32> -> vector<16x1xf32>
    %547 = vector.broadcast %546 : vector<16x1xf32> to vector<16x16xf32>
    %548 = arith.mulf %541, %547 : vector<16x16xf32>
    %cst_164 = arith.constant dense<0.000000e+00> : vector<16x12xf32>
    %549 = tpu.matmul %548, %522, %cst_164 {dimension_numbers = #tpu.dot_dimension_numbers<[1], [0], [0], [1], [0, 0, 1, 1], [], []>} : vector<16x16xf32>, vector<16x12xf32>, vector<16x12xf32> -> vector<16x12xf32>
    %550 = vector.extract_strided_slice %14 {offsets = [0, 96], sizes = [16, 12], strides = [1, 1]} : vector<16x144xf32> to vector<16x12xf32>
    %551 = vector.extract_strided_slice %11 {offsets = [0, 32], sizes = [16, 1], strides = [1, 1]} : vector<16x48xf32> to vector<16x1xf32>
    %552 = vector.extract_strided_slice %12 {offsets = [44, 0], sizes = [1, 16], strides = [1, 1]} : vector<48x16xf32> to vector<1x16xf32>
    %553 = vector.broadcast %551 : vector<16x1xf32> to vector<16x16xf32>
    %554 = vector.broadcast %552 : vector<1x16xf32> to vector<16x16xf32>
    %555 = arith.addf %553, %554 : vector<16x16xf32>
    %cst_165 = arith.constant 0.000000e+00 : f32
    %556 = vector.broadcast %cst_165 : f32 to vector<16x16xf32>
    %557 = arith.cmpf ogt, %555, %556 : vector<16x16xf32>
    %cst_166 = arith.constant 2.000000e-01 : f32
    %558 = vector.broadcast %cst_166 : f32 to vector<16x16xf32>
    %559 = arith.mulf %558, %555 : vector<16x16xf32>
    %560 = arith.select %557, %555, %559 : vector<16x16xi1>, vector<16x16xf32>
    %cst_167 = arith.constant -1.000000e+30 : f32
    %561 = vector.broadcast %cst_167 : f32 to vector<16x16xf32>
    %562 = arith.select %6, %560, %561 : vector<16x16xi1>, vector<16x16xf32>
    %cst_168 = arith.constant dense<0xFF800000> : vector<16xf32>
    %563 = vector.multi_reduction <maximumf>, %562, %cst_168 [1] : vector<16x16xf32> to vector<16xf32>
    %564 = vector.shape_cast %563 : vector<16xf32> to vector<16x1xf32>
    %565 = vector.broadcast %564 : vector<16x1xf32> to vector<16x16xf32>
    %566 = arith.subf %562, %565 : vector<16x16xf32>
    %567 = math.exp %566 : vector<16x16xf32>
    %cst_169 = arith.constant 0.000000e+00 : f32
    %568 = vector.broadcast %cst_169 : f32 to vector<16x16xf32>
    %569 = arith.select %6, %567, %568 : vector<16x16xi1>, vector<16x16xf32>
    %cst_170 = arith.constant dense<0.000000e+00> : vector<16xf32>
    %570 = vector.multi_reduction <add>, %569, %cst_170 [1] : vector<16x16xf32> to vector<16xf32>
    %571 = vector.shape_cast %570 : vector<16xf32> to vector<16x1xf32>
    %cst_171 = arith.constant 9.99999968E-21 : f32
    %572 = vector.broadcast %cst_171 : f32 to vector<16x1xf32>
    %573 = arith.maximumf %571, %572 : vector<16x1xf32>
    %574 = tpu.reciprocal %573 {approx = true} : vector<16x1xf32> -> vector<16x1xf32>
    %575 = vector.broadcast %574 : vector<16x1xf32> to vector<16x16xf32>
    %576 = arith.mulf %569, %575 : vector<16x16xf32>
    %cst_172 = arith.constant dense<0.000000e+00> : vector<16x12xf32>
    %577 = tpu.matmul %576, %550, %cst_172 {dimension_numbers = #tpu.dot_dimension_numbers<[1], [0], [0], [1], [0, 0, 1, 1], [], []>} : vector<16x16xf32>, vector<16x12xf32>, vector<16x12xf32> -> vector<16x12xf32>
    %cst_173 = arith.constant 5.000000e-01 : f32
    %578 = vector.broadcast %cst_173 : f32 to vector<16x12xf32>
    %579 = arith.mulf %578, %577 : vector<16x12xf32>
    %cst_174 = arith.constant 5.000000e-01 : f32
    %580 = vector.broadcast %cst_174 : f32 to vector<16x12xf32>
    %581 = arith.mulf %580, %549 : vector<16x12xf32>
    %582 = arith.addf %579, %581 : vector<16x12xf32>
    %583 = vector.extract_strided_slice %17 {offsets = [0, 96], sizes = [16, 12], strides = [1, 1]} : vector<16x144xf32> to vector<16x12xf32>
    %584 = arith.addf %582, %583 : vector<16x12xf32>
    %585 = vector.extract_strided_slice %13 {offsets = [0, 108], sizes = [16, 12], strides = [1, 1]} : vector<16x144xf32> to vector<16x12xf32>
    %586 = vector.extract_strided_slice %11 {offsets = [0, 9], sizes = [16, 1], strides = [1, 1]} : vector<16x48xf32> to vector<16x1xf32>
    %587 = vector.extract_strided_slice %12 {offsets = [21, 0], sizes = [1, 16], strides = [1, 1]} : vector<48x16xf32> to vector<1x16xf32>
    %588 = vector.broadcast %586 : vector<16x1xf32> to vector<16x16xf32>
    %589 = vector.broadcast %587 : vector<1x16xf32> to vector<16x16xf32>
    %590 = arith.addf %588, %589 : vector<16x16xf32>
    %cst_175 = arith.constant 0.000000e+00 : f32
    %591 = vector.broadcast %cst_175 : f32 to vector<16x16xf32>
    %592 = arith.cmpf ogt, %590, %591 : vector<16x16xf32>
    %cst_176 = arith.constant 2.000000e-01 : f32
    %593 = vector.broadcast %cst_176 : f32 to vector<16x16xf32>
    %594 = arith.mulf %593, %590 : vector<16x16xf32>
    %595 = arith.select %592, %590, %594 : vector<16x16xi1>, vector<16x16xf32>
    %cst_177 = arith.constant -1.000000e+30 : f32
    %596 = vector.broadcast %cst_177 : f32 to vector<16x16xf32>
    %597 = arith.select %3, %595, %596 : vector<16x16xi1>, vector<16x16xf32>
    %cst_178 = arith.constant dense<0xFF800000> : vector<16xf32>
    %598 = vector.multi_reduction <maximumf>, %597, %cst_178 [1] : vector<16x16xf32> to vector<16xf32>
    %599 = vector.shape_cast %598 : vector<16xf32> to vector<16x1xf32>
    %600 = vector.broadcast %599 : vector<16x1xf32> to vector<16x16xf32>
    %601 = arith.subf %597, %600 : vector<16x16xf32>
    %602 = math.exp %601 : vector<16x16xf32>
    %cst_179 = arith.constant 0.000000e+00 : f32
    %603 = vector.broadcast %cst_179 : f32 to vector<16x16xf32>
    %604 = arith.select %3, %602, %603 : vector<16x16xi1>, vector<16x16xf32>
    %cst_180 = arith.constant dense<0.000000e+00> : vector<16xf32>
    %605 = vector.multi_reduction <add>, %604, %cst_180 [1] : vector<16x16xf32> to vector<16xf32>
    %606 = vector.shape_cast %605 : vector<16xf32> to vector<16x1xf32>
    %cst_181 = arith.constant 9.99999968E-21 : f32
    %607 = vector.broadcast %cst_181 : f32 to vector<16x1xf32>
    %608 = arith.maximumf %606, %607 : vector<16x1xf32>
    %609 = tpu.reciprocal %608 {approx = true} : vector<16x1xf32> -> vector<16x1xf32>
    %610 = vector.broadcast %609 : vector<16x1xf32> to vector<16x16xf32>
    %611 = arith.mulf %604, %610 : vector<16x16xf32>
    %cst_182 = arith.constant dense<0.000000e+00> : vector<16x12xf32>
    %612 = tpu.matmul %611, %585, %cst_182 {dimension_numbers = #tpu.dot_dimension_numbers<[1], [0], [0], [1], [0, 0, 1, 1], [], []>} : vector<16x16xf32>, vector<16x12xf32>, vector<16x12xf32> -> vector<16x12xf32>
    %613 = vector.extract_strided_slice %14 {offsets = [0, 108], sizes = [16, 12], strides = [1, 1]} : vector<16x144xf32> to vector<16x12xf32>
    %614 = vector.extract_strided_slice %11 {offsets = [0, 33], sizes = [16, 1], strides = [1, 1]} : vector<16x48xf32> to vector<16x1xf32>
    %615 = vector.extract_strided_slice %12 {offsets = [45, 0], sizes = [1, 16], strides = [1, 1]} : vector<48x16xf32> to vector<1x16xf32>
    %616 = vector.broadcast %614 : vector<16x1xf32> to vector<16x16xf32>
    %617 = vector.broadcast %615 : vector<1x16xf32> to vector<16x16xf32>
    %618 = arith.addf %616, %617 : vector<16x16xf32>
    %cst_183 = arith.constant 0.000000e+00 : f32
    %619 = vector.broadcast %cst_183 : f32 to vector<16x16xf32>
    %620 = arith.cmpf ogt, %618, %619 : vector<16x16xf32>
    %cst_184 = arith.constant 2.000000e-01 : f32
    %621 = vector.broadcast %cst_184 : f32 to vector<16x16xf32>
    %622 = arith.mulf %621, %618 : vector<16x16xf32>
    %623 = arith.select %620, %618, %622 : vector<16x16xi1>, vector<16x16xf32>
    %cst_185 = arith.constant -1.000000e+30 : f32
    %624 = vector.broadcast %cst_185 : f32 to vector<16x16xf32>
    %625 = arith.select %6, %623, %624 : vector<16x16xi1>, vector<16x16xf32>
    %cst_186 = arith.constant dense<0xFF800000> : vector<16xf32>
    %626 = vector.multi_reduction <maximumf>, %625, %cst_186 [1] : vector<16x16xf32> to vector<16xf32>
    %627 = vector.shape_cast %626 : vector<16xf32> to vector<16x1xf32>
    %628 = vector.broadcast %627 : vector<16x1xf32> to vector<16x16xf32>
    %629 = arith.subf %625, %628 : vector<16x16xf32>
    %630 = math.exp %629 : vector<16x16xf32>
    %cst_187 = arith.constant 0.000000e+00 : f32
    %631 = vector.broadcast %cst_187 : f32 to vector<16x16xf32>
    %632 = arith.select %6, %630, %631 : vector<16x16xi1>, vector<16x16xf32>
    %cst_188 = arith.constant dense<0.000000e+00> : vector<16xf32>
    %633 = vector.multi_reduction <add>, %632, %cst_188 [1] : vector<16x16xf32> to vector<16xf32>
    %634 = vector.shape_cast %633 : vector<16xf32> to vector<16x1xf32>
    %cst_189 = arith.constant 9.99999968E-21 : f32
    %635 = vector.broadcast %cst_189 : f32 to vector<16x1xf32>
    %636 = arith.maximumf %634, %635 : vector<16x1xf32>
    %637 = tpu.reciprocal %636 {approx = true} : vector<16x1xf32> -> vector<16x1xf32>
    %638 = vector.broadcast %637 : vector<16x1xf32> to vector<16x16xf32>
    %639 = arith.mulf %632, %638 : vector<16x16xf32>
    %cst_190 = arith.constant dense<0.000000e+00> : vector<16x12xf32>
    %640 = tpu.matmul %639, %613, %cst_190 {dimension_numbers = #tpu.dot_dimension_numbers<[1], [0], [0], [1], [0, 0, 1, 1], [], []>} : vector<16x16xf32>, vector<16x12xf32>, vector<16x12xf32> -> vector<16x12xf32>
    %cst_191 = arith.constant 5.000000e-01 : f32
    %641 = vector.broadcast %cst_191 : f32 to vector<16x12xf32>
    %642 = arith.mulf %641, %640 : vector<16x12xf32>
    %cst_192 = arith.constant 5.000000e-01 : f32
    %643 = vector.broadcast %cst_192 : f32 to vector<16x12xf32>
    %644 = arith.mulf %643, %612 : vector<16x12xf32>
    %645 = arith.addf %642, %644 : vector<16x12xf32>
    %646 = vector.extract_strided_slice %17 {offsets = [0, 108], sizes = [16, 12], strides = [1, 1]} : vector<16x144xf32> to vector<16x12xf32>
    %647 = arith.addf %645, %646 : vector<16x12xf32>
    %648 = vector.extract_strided_slice %13 {offsets = [0, 120], sizes = [16, 12], strides = [1, 1]} : vector<16x144xf32> to vector<16x12xf32>
    %649 = vector.extract_strided_slice %11 {offsets = [0, 10], sizes = [16, 1], strides = [1, 1]} : vector<16x48xf32> to vector<16x1xf32>
    %650 = vector.extract_strided_slice %12 {offsets = [22, 0], sizes = [1, 16], strides = [1, 1]} : vector<48x16xf32> to vector<1x16xf32>
    %651 = vector.broadcast %649 : vector<16x1xf32> to vector<16x16xf32>
    %652 = vector.broadcast %650 : vector<1x16xf32> to vector<16x16xf32>
    %653 = arith.addf %651, %652 : vector<16x16xf32>
    %cst_193 = arith.constant 0.000000e+00 : f32
    %654 = vector.broadcast %cst_193 : f32 to vector<16x16xf32>
    %655 = arith.cmpf ogt, %653, %654 : vector<16x16xf32>
    %cst_194 = arith.constant 2.000000e-01 : f32
    %656 = vector.broadcast %cst_194 : f32 to vector<16x16xf32>
    %657 = arith.mulf %656, %653 : vector<16x16xf32>
    %658 = arith.select %655, %653, %657 : vector<16x16xi1>, vector<16x16xf32>
    %cst_195 = arith.constant -1.000000e+30 : f32
    %659 = vector.broadcast %cst_195 : f32 to vector<16x16xf32>
    %660 = arith.select %3, %658, %659 : vector<16x16xi1>, vector<16x16xf32>
    %cst_196 = arith.constant dense<0xFF800000> : vector<16xf32>
    %661 = vector.multi_reduction <maximumf>, %660, %cst_196 [1] : vector<16x16xf32> to vector<16xf32>
    %662 = vector.shape_cast %661 : vector<16xf32> to vector<16x1xf32>
    %663 = vector.broadcast %662 : vector<16x1xf32> to vector<16x16xf32>
    %664 = arith.subf %660, %663 : vector<16x16xf32>
    %665 = math.exp %664 : vector<16x16xf32>
    %cst_197 = arith.constant 0.000000e+00 : f32
    %666 = vector.broadcast %cst_197 : f32 to vector<16x16xf32>
    %667 = arith.select %3, %665, %666 : vector<16x16xi1>, vector<16x16xf32>
    %cst_198 = arith.constant dense<0.000000e+00> : vector<16xf32>
    %668 = vector.multi_reduction <add>, %667, %cst_198 [1] : vector<16x16xf32> to vector<16xf32>
    %669 = vector.shape_cast %668 : vector<16xf32> to vector<16x1xf32>
    %cst_199 = arith.constant 9.99999968E-21 : f32
    %670 = vector.broadcast %cst_199 : f32 to vector<16x1xf32>
    %671 = arith.maximumf %669, %670 : vector<16x1xf32>
    %672 = tpu.reciprocal %671 {approx = true} : vector<16x1xf32> -> vector<16x1xf32>
    %673 = vector.broadcast %672 : vector<16x1xf32> to vector<16x16xf32>
    %674 = arith.mulf %667, %673 : vector<16x16xf32>
    %cst_200 = arith.constant dense<0.000000e+00> : vector<16x12xf32>
    %675 = tpu.matmul %674, %648, %cst_200 {dimension_numbers = #tpu.dot_dimension_numbers<[1], [0], [0], [1], [0, 0, 1, 1], [], []>} : vector<16x16xf32>, vector<16x12xf32>, vector<16x12xf32> -> vector<16x12xf32>
    %676 = vector.extract_strided_slice %14 {offsets = [0, 120], sizes = [16, 12], strides = [1, 1]} : vector<16x144xf32> to vector<16x12xf32>
    %677 = vector.extract_strided_slice %11 {offsets = [0, 34], sizes = [16, 1], strides = [1, 1]} : vector<16x48xf32> to vector<16x1xf32>
    %678 = vector.extract_strided_slice %12 {offsets = [46, 0], sizes = [1, 16], strides = [1, 1]} : vector<48x16xf32> to vector<1x16xf32>
    %679 = vector.broadcast %677 : vector<16x1xf32> to vector<16x16xf32>
    %680 = vector.broadcast %678 : vector<1x16xf32> to vector<16x16xf32>
    %681 = arith.addf %679, %680 : vector<16x16xf32>
    %cst_201 = arith.constant 0.000000e+00 : f32
    %682 = vector.broadcast %cst_201 : f32 to vector<16x16xf32>
    %683 = arith.cmpf ogt, %681, %682 : vector<16x16xf32>
    %cst_202 = arith.constant 2.000000e-01 : f32
    %684 = vector.broadcast %cst_202 : f32 to vector<16x16xf32>
    %685 = arith.mulf %684, %681 : vector<16x16xf32>
    %686 = arith.select %683, %681, %685 : vector<16x16xi1>, vector<16x16xf32>
    %cst_203 = arith.constant -1.000000e+30 : f32
    %687 = vector.broadcast %cst_203 : f32 to vector<16x16xf32>
    %688 = arith.select %6, %686, %687 : vector<16x16xi1>, vector<16x16xf32>
    %cst_204 = arith.constant dense<0xFF800000> : vector<16xf32>
    %689 = vector.multi_reduction <maximumf>, %688, %cst_204 [1] : vector<16x16xf32> to vector<16xf32>
    %690 = vector.shape_cast %689 : vector<16xf32> to vector<16x1xf32>
    %691 = vector.broadcast %690 : vector<16x1xf32> to vector<16x16xf32>
    %692 = arith.subf %688, %691 : vector<16x16xf32>
    %693 = math.exp %692 : vector<16x16xf32>
    %cst_205 = arith.constant 0.000000e+00 : f32
    %694 = vector.broadcast %cst_205 : f32 to vector<16x16xf32>
    %695 = arith.select %6, %693, %694 : vector<16x16xi1>, vector<16x16xf32>
    %cst_206 = arith.constant dense<0.000000e+00> : vector<16xf32>
    %696 = vector.multi_reduction <add>, %695, %cst_206 [1] : vector<16x16xf32> to vector<16xf32>
    %697 = vector.shape_cast %696 : vector<16xf32> to vector<16x1xf32>
    %cst_207 = arith.constant 9.99999968E-21 : f32
    %698 = vector.broadcast %cst_207 : f32 to vector<16x1xf32>
    %699 = arith.maximumf %697, %698 : vector<16x1xf32>
    %700 = tpu.reciprocal %699 {approx = true} : vector<16x1xf32> -> vector<16x1xf32>
    %701 = vector.broadcast %700 : vector<16x1xf32> to vector<16x16xf32>
    %702 = arith.mulf %695, %701 : vector<16x16xf32>
    %cst_208 = arith.constant dense<0.000000e+00> : vector<16x12xf32>
    %703 = tpu.matmul %702, %676, %cst_208 {dimension_numbers = #tpu.dot_dimension_numbers<[1], [0], [0], [1], [0, 0, 1, 1], [], []>} : vector<16x16xf32>, vector<16x12xf32>, vector<16x12xf32> -> vector<16x12xf32>
    %cst_209 = arith.constant 5.000000e-01 : f32
    %704 = vector.broadcast %cst_209 : f32 to vector<16x12xf32>
    %705 = arith.mulf %704, %703 : vector<16x12xf32>
    %cst_210 = arith.constant 5.000000e-01 : f32
    %706 = vector.broadcast %cst_210 : f32 to vector<16x12xf32>
    %707 = arith.mulf %706, %675 : vector<16x12xf32>
    %708 = arith.addf %705, %707 : vector<16x12xf32>
    %709 = vector.extract_strided_slice %17 {offsets = [0, 120], sizes = [16, 12], strides = [1, 1]} : vector<16x144xf32> to vector<16x12xf32>
    %710 = arith.addf %708, %709 : vector<16x12xf32>
    %711 = vector.extract_strided_slice %13 {offsets = [0, 132], sizes = [16, 12], strides = [1, 1]} : vector<16x144xf32> to vector<16x12xf32>
    %712 = vector.extract_strided_slice %11 {offsets = [0, 11], sizes = [16, 1], strides = [1, 1]} : vector<16x48xf32> to vector<16x1xf32>
    %713 = vector.extract_strided_slice %12 {offsets = [23, 0], sizes = [1, 16], strides = [1, 1]} : vector<48x16xf32> to vector<1x16xf32>
    %714 = vector.broadcast %712 : vector<16x1xf32> to vector<16x16xf32>
    %715 = vector.broadcast %713 : vector<1x16xf32> to vector<16x16xf32>
    %716 = arith.addf %714, %715 : vector<16x16xf32>
    %cst_211 = arith.constant 0.000000e+00 : f32
    %717 = vector.broadcast %cst_211 : f32 to vector<16x16xf32>
    %718 = arith.cmpf ogt, %716, %717 : vector<16x16xf32>
    %cst_212 = arith.constant 2.000000e-01 : f32
    %719 = vector.broadcast %cst_212 : f32 to vector<16x16xf32>
    %720 = arith.mulf %719, %716 : vector<16x16xf32>
    %721 = arith.select %718, %716, %720 : vector<16x16xi1>, vector<16x16xf32>
    %cst_213 = arith.constant -1.000000e+30 : f32
    %722 = vector.broadcast %cst_213 : f32 to vector<16x16xf32>
    %723 = arith.select %3, %721, %722 : vector<16x16xi1>, vector<16x16xf32>
    %cst_214 = arith.constant dense<0xFF800000> : vector<16xf32>
    %724 = vector.multi_reduction <maximumf>, %723, %cst_214 [1] : vector<16x16xf32> to vector<16xf32>
    %725 = vector.shape_cast %724 : vector<16xf32> to vector<16x1xf32>
    %726 = vector.broadcast %725 : vector<16x1xf32> to vector<16x16xf32>
    %727 = arith.subf %723, %726 : vector<16x16xf32>
    %728 = math.exp %727 : vector<16x16xf32>
    %cst_215 = arith.constant 0.000000e+00 : f32
    %729 = vector.broadcast %cst_215 : f32 to vector<16x16xf32>
    %730 = arith.select %3, %728, %729 : vector<16x16xi1>, vector<16x16xf32>
    %cst_216 = arith.constant dense<0.000000e+00> : vector<16xf32>
    %731 = vector.multi_reduction <add>, %730, %cst_216 [1] : vector<16x16xf32> to vector<16xf32>
    %732 = vector.shape_cast %731 : vector<16xf32> to vector<16x1xf32>
    %cst_217 = arith.constant 9.99999968E-21 : f32
    %733 = vector.broadcast %cst_217 : f32 to vector<16x1xf32>
    %734 = arith.maximumf %732, %733 : vector<16x1xf32>
    %735 = tpu.reciprocal %734 {approx = true} : vector<16x1xf32> -> vector<16x1xf32>
    %736 = vector.broadcast %735 : vector<16x1xf32> to vector<16x16xf32>
    %737 = arith.mulf %730, %736 : vector<16x16xf32>
    %cst_218 = arith.constant dense<0.000000e+00> : vector<16x12xf32>
    %738 = tpu.matmul %737, %711, %cst_218 {dimension_numbers = #tpu.dot_dimension_numbers<[1], [0], [0], [1], [0, 0, 1, 1], [], []>} : vector<16x16xf32>, vector<16x12xf32>, vector<16x12xf32> -> vector<16x12xf32>
    %739 = vector.extract_strided_slice %14 {offsets = [0, 132], sizes = [16, 12], strides = [1, 1]} : vector<16x144xf32> to vector<16x12xf32>
    %740 = vector.extract_strided_slice %11 {offsets = [0, 35], sizes = [16, 1], strides = [1, 1]} : vector<16x48xf32> to vector<16x1xf32>
    %741 = vector.extract_strided_slice %12 {offsets = [47, 0], sizes = [1, 16], strides = [1, 1]} : vector<48x16xf32> to vector<1x16xf32>
    %742 = vector.broadcast %740 : vector<16x1xf32> to vector<16x16xf32>
    %743 = vector.broadcast %741 : vector<1x16xf32> to vector<16x16xf32>
    %744 = arith.addf %742, %743 : vector<16x16xf32>
    %cst_219 = arith.constant 0.000000e+00 : f32
    %745 = vector.broadcast %cst_219 : f32 to vector<16x16xf32>
    %746 = arith.cmpf ogt, %744, %745 : vector<16x16xf32>
    %cst_220 = arith.constant 2.000000e-01 : f32
    %747 = vector.broadcast %cst_220 : f32 to vector<16x16xf32>
    %748 = arith.mulf %747, %744 : vector<16x16xf32>
    %749 = arith.select %746, %744, %748 : vector<16x16xi1>, vector<16x16xf32>
    %cst_221 = arith.constant -1.000000e+30 : f32
    %750 = vector.broadcast %cst_221 : f32 to vector<16x16xf32>
    %751 = arith.select %6, %749, %750 : vector<16x16xi1>, vector<16x16xf32>
    %cst_222 = arith.constant dense<0xFF800000> : vector<16xf32>
    %752 = vector.multi_reduction <maximumf>, %751, %cst_222 [1] : vector<16x16xf32> to vector<16xf32>
    %753 = vector.shape_cast %752 : vector<16xf32> to vector<16x1xf32>
    %754 = vector.broadcast %753 : vector<16x1xf32> to vector<16x16xf32>
    %755 = arith.subf %751, %754 : vector<16x16xf32>
    %756 = math.exp %755 : vector<16x16xf32>
    %cst_223 = arith.constant 0.000000e+00 : f32
    %757 = vector.broadcast %cst_223 : f32 to vector<16x16xf32>
    %758 = arith.select %6, %756, %757 : vector<16x16xi1>, vector<16x16xf32>
    %cst_224 = arith.constant dense<0.000000e+00> : vector<16xf32>
    %759 = vector.multi_reduction <add>, %758, %cst_224 [1] : vector<16x16xf32> to vector<16xf32>
    %760 = vector.shape_cast %759 : vector<16xf32> to vector<16x1xf32>
    %cst_225 = arith.constant 9.99999968E-21 : f32
    %761 = vector.broadcast %cst_225 : f32 to vector<16x1xf32>
    %762 = arith.maximumf %760, %761 : vector<16x1xf32>
    %763 = tpu.reciprocal %762 {approx = true} : vector<16x1xf32> -> vector<16x1xf32>
    %764 = vector.broadcast %763 : vector<16x1xf32> to vector<16x16xf32>
    %765 = arith.mulf %758, %764 : vector<16x16xf32>
    %cst_226 = arith.constant dense<0.000000e+00> : vector<16x12xf32>
    %766 = tpu.matmul %765, %739, %cst_226 {dimension_numbers = #tpu.dot_dimension_numbers<[1], [0], [0], [1], [0, 0, 1, 1], [], []>} : vector<16x16xf32>, vector<16x12xf32>, vector<16x12xf32> -> vector<16x12xf32>
    %cst_227 = arith.constant 5.000000e-01 : f32
    %767 = vector.broadcast %cst_227 : f32 to vector<16x12xf32>
    %768 = arith.mulf %767, %766 : vector<16x12xf32>
    %cst_228 = arith.constant 5.000000e-01 : f32
    %769 = vector.broadcast %cst_228 : f32 to vector<16x12xf32>
    %770 = arith.mulf %769, %738 : vector<16x12xf32>
    %771 = arith.addf %768, %770 : vector<16x12xf32>
    %772 = vector.extract_strided_slice %17 {offsets = [0, 132], sizes = [16, 12], strides = [1, 1]} : vector<16x144xf32> to vector<16x12xf32>
    %773 = arith.addf %771, %772 : vector<16x12xf32>
    %774 = tpu.concatenate %80, %143, %206, %269, %332, %395, %458, %521, %584, %647, %710, %773 in 1 : vector<16x12xf32>, vector<16x12xf32>, vector<16x12xf32>, vector<16x12xf32>, vector<16x12xf32>, vector<16x12xf32>, vector<16x12xf32>, vector<16x12xf32>, vector<16x12xf32>, vector<16x12xf32>, vector<16x12xf32>, vector<16x12xf32> -> vector<16x144xf32>
    %cst_229 = arith.constant 0.000000e+00 : f32
    %775 = vector.broadcast %cst_229 : f32 to vector<16x144xf32>
    %776 = arith.maximumf %774, %775 : vector<16x144xf32>
    %c0_230 = arith.constant 0 : index
    %c0_231 = arith.constant 0 : index
    %777 = vector.load %arg6[%c0_230, %c0_231] : memref<144x384xf32, #tpu.memory_space<vmem>>, vector<144x384xf32>
    %c0_232 = arith.constant 0 : index
    %c0_233 = arith.constant 0 : index
    %778 = vector.load %arg7[%c0_232, %c0_233] : memref<384x4xf32, #tpu.memory_space<vmem>>, vector<384x4xf32>
    %c0_234 = arith.constant 0 : index
    %c0_235 = arith.constant 0 : index
    %779 = vector.load %arg8[%c0_234, %c0_235] : memref<1x4xf32, #tpu.memory_space<vmem>>, vector<1x4xf32>
    %cst_236 = arith.constant dense<0.000000e+00> : vector<16x384xf32>
    %780 = tpu.matmul %776, %777, %cst_236 {dimension_numbers = #tpu.dot_dimension_numbers<[1], [0], [0], [1], [0, 0, 1, 1], [], []>} : vector<16x144xf32>, vector<144x384xf32>, vector<16x384xf32> -> vector<16x384xf32>
    %cst_237 = arith.constant dense<0.000000e+00> : vector<16x4xf32>
    %781 = tpu.matmul %780, %778, %cst_237 {dimension_numbers = #tpu.dot_dimension_numbers<[1], [0], [0], [1], [0, 0, 1, 1], [], []>} : vector<16x384xf32>, vector<384x4xf32>, vector<16x4xf32> -> vector<16x4xf32>
    %782 = tpu.transpose %781, [1, 0] : vector<16x4xf32> -> vector<4x16xf32>
    %783 = vector.extract_strided_slice %780 {offsets = [0, 0], sizes = [16, 4], strides = [1, 1]} : vector<16x384xf32> to vector<16x4xf32>
    %784 = vector.extract_strided_slice %780 {offsets = [0, 128], sizes = [16, 4], strides = [1, 1]} : vector<16x384xf32> to vector<16x4xf32>
    %785 = vector.extract_strided_slice %780 {offsets = [0, 256], sizes = [16, 4], strides = [1, 1]} : vector<16x384xf32> to vector<16x4xf32>
    %786 = vector.broadcast %779 : vector<1x4xf32> to vector<16x4xf32>
    %787 = arith.addf %785, %786 : vector<16x4xf32>
    %788 = vector.extract_strided_slice %781 {offsets = [0, 0], sizes = [16, 1], strides = [1, 1]} : vector<16x4xf32> to vector<16x1xf32>
    %789 = vector.extract_strided_slice %782 {offsets = [1, 0], sizes = [1, 16], strides = [1, 1]} : vector<4x16xf32> to vector<1x16xf32>
    %790 = vector.broadcast %788 : vector<16x1xf32> to vector<16x16xf32>
    %791 = vector.broadcast %789 : vector<1x16xf32> to vector<16x16xf32>
    %792 = arith.addf %790, %791 : vector<16x16xf32>
    %cst_238 = arith.constant 0.000000e+00 : f32
    %793 = vector.broadcast %cst_238 : f32 to vector<16x16xf32>
    %794 = arith.cmpf ogt, %792, %793 : vector<16x16xf32>
    %cst_239 = arith.constant 2.000000e-01 : f32
    %795 = vector.broadcast %cst_239 : f32 to vector<16x16xf32>
    %796 = arith.mulf %795, %792 : vector<16x16xf32>
    %797 = arith.select %794, %792, %796 : vector<16x16xi1>, vector<16x16xf32>
    %cst_240 = arith.constant -1.000000e+30 : f32
    %798 = vector.broadcast %cst_240 : f32 to vector<16x16xf32>
    %799 = arith.select %3, %797, %798 : vector<16x16xi1>, vector<16x16xf32>
    %cst_241 = arith.constant dense<0xFF800000> : vector<16xf32>
    %800 = vector.multi_reduction <maximumf>, %799, %cst_241 [1] : vector<16x16xf32> to vector<16xf32>
    %801 = vector.shape_cast %800 : vector<16xf32> to vector<16x1xf32>
    %802 = vector.broadcast %801 : vector<16x1xf32> to vector<16x16xf32>
    %803 = arith.subf %799, %802 : vector<16x16xf32>
    %804 = math.exp %803 : vector<16x16xf32>
    %cst_242 = arith.constant 0.000000e+00 : f32
    %805 = vector.broadcast %cst_242 : f32 to vector<16x16xf32>
    %806 = arith.select %3, %804, %805 : vector<16x16xi1>, vector<16x16xf32>
    %cst_243 = arith.constant dense<0.000000e+00> : vector<16xf32>
    %807 = vector.multi_reduction <add>, %806, %cst_243 [1] : vector<16x16xf32> to vector<16xf32>
    %808 = vector.shape_cast %807 : vector<16xf32> to vector<16x1xf32>
    %cst_244 = arith.constant 9.99999968E-21 : f32
    %809 = vector.broadcast %cst_244 : f32 to vector<16x1xf32>
    %810 = arith.maximumf %808, %809 : vector<16x1xf32>
    %811 = tpu.reciprocal %810 {approx = true} : vector<16x1xf32> -> vector<16x1xf32>
    %812 = vector.broadcast %811 : vector<16x1xf32> to vector<16x16xf32>
    %813 = arith.mulf %806, %812 : vector<16x16xf32>
    %cst_245 = arith.constant dense<0.000000e+00> : vector<16x4xf32>
    %814 = tpu.matmul %813, %783, %cst_245 {dimension_numbers = #tpu.dot_dimension_numbers<[1], [0], [0], [1], [0, 0, 1, 1], [], []>} : vector<16x16xf32>, vector<16x4xf32>, vector<16x4xf32> -> vector<16x4xf32>
    %815 = vector.extract_strided_slice %781 {offsets = [0, 2], sizes = [16, 1], strides = [1, 1]} : vector<16x4xf32> to vector<16x1xf32>
    %816 = vector.extract_strided_slice %782 {offsets = [3, 0], sizes = [1, 16], strides = [1, 1]} : vector<4x16xf32> to vector<1x16xf32>
    %817 = vector.broadcast %815 : vector<16x1xf32> to vector<16x16xf32>
    %818 = vector.broadcast %816 : vector<1x16xf32> to vector<16x16xf32>
    %819 = arith.addf %817, %818 : vector<16x16xf32>
    %cst_246 = arith.constant 0.000000e+00 : f32
    %820 = vector.broadcast %cst_246 : f32 to vector<16x16xf32>
    %821 = arith.cmpf ogt, %819, %820 : vector<16x16xf32>
    %cst_247 = arith.constant 2.000000e-01 : f32
    %822 = vector.broadcast %cst_247 : f32 to vector<16x16xf32>
    %823 = arith.mulf %822, %819 : vector<16x16xf32>
    %824 = arith.select %821, %819, %823 : vector<16x16xi1>, vector<16x16xf32>
    %cst_248 = arith.constant -1.000000e+30 : f32
    %825 = vector.broadcast %cst_248 : f32 to vector<16x16xf32>
    %826 = arith.select %6, %824, %825 : vector<16x16xi1>, vector<16x16xf32>
    %cst_249 = arith.constant dense<0xFF800000> : vector<16xf32>
    %827 = vector.multi_reduction <maximumf>, %826, %cst_249 [1] : vector<16x16xf32> to vector<16xf32>
    %828 = vector.shape_cast %827 : vector<16xf32> to vector<16x1xf32>
    %829 = vector.broadcast %828 : vector<16x1xf32> to vector<16x16xf32>
    %830 = arith.subf %826, %829 : vector<16x16xf32>
    %831 = math.exp %830 : vector<16x16xf32>
    %cst_250 = arith.constant 0.000000e+00 : f32
    %832 = vector.broadcast %cst_250 : f32 to vector<16x16xf32>
    %833 = arith.select %6, %831, %832 : vector<16x16xi1>, vector<16x16xf32>
    %cst_251 = arith.constant dense<0.000000e+00> : vector<16xf32>
    %834 = vector.multi_reduction <add>, %833, %cst_251 [1] : vector<16x16xf32> to vector<16xf32>
    %835 = vector.shape_cast %834 : vector<16xf32> to vector<16x1xf32>
    %cst_252 = arith.constant 9.99999968E-21 : f32
    %836 = vector.broadcast %cst_252 : f32 to vector<16x1xf32>
    %837 = arith.maximumf %835, %836 : vector<16x1xf32>
    %838 = tpu.reciprocal %837 {approx = true} : vector<16x1xf32> -> vector<16x1xf32>
    %839 = vector.broadcast %838 : vector<16x1xf32> to vector<16x16xf32>
    %840 = arith.mulf %833, %839 : vector<16x16xf32>
    %cst_253 = arith.constant dense<0.000000e+00> : vector<16x4xf32>
    %841 = tpu.matmul %840, %784, %cst_253 {dimension_numbers = #tpu.dot_dimension_numbers<[1], [0], [0], [1], [0, 0, 1, 1], [], []>} : vector<16x16xf32>, vector<16x4xf32>, vector<16x4xf32> -> vector<16x4xf32>
    %cst_254 = arith.constant 5.000000e-01 : f32
    %842 = vector.broadcast %cst_254 : f32 to vector<16x4xf32>
    %843 = arith.mulf %842, %841 : vector<16x4xf32>
    %cst_255 = arith.constant 5.000000e-01 : f32
    %844 = vector.broadcast %cst_255 : f32 to vector<16x4xf32>
    %845 = arith.mulf %844, %814 : vector<16x4xf32>
    %846 = arith.addf %843, %845 : vector<16x4xf32>
    %847 = arith.addf %846, %787 : vector<16x4xf32>
    %c0_256 = arith.constant 0 : index
    %c0_257 = arith.constant 0 : index
    %848 = vector.load %arg9[%c0_256, %c0_257] : memref<16x4xf32, #tpu.memory_space<vmem>>, vector<16x4xf32>
    tpu.vector_store %arg9[%c0_256, %c0_257], %847 {strides = array<i32>} : memref<16x4xf32, #tpu.memory_space<vmem>>, vector<16x4xf32>,
    return
  }
}

</mosaic_0001>

<llo_original>
// kernel: mini_gnn_forward.1
$region0: #{mini_gnn_forward.1}
  #allocation0 [shape = 'u32[]', space=smem, size = 0x4, offset = 0x4, fixed_abs, tag = 'smem constant byte address 0x4 - core index']
  #allocation1 [shape = 'u32[72,128]{1,0:T(1,128)}', space=vmem, size = 0x9000, scoped, tag = 'internal scratch']
  %s0 = inlined_call_operand.vmem [shape: f32[16,16], index: 0, kind: input, shape index: {}]
  %s1 = inlined_call_operand.vmem [shape: s8[16,16], index: 1, kind: input, shape index: {}]
  %s2 = inlined_call_operand.vmem [shape: s8[16,16], index: 2, kind: input, shape index: {}]
  %s3 = inlined_call_operand.vmem [shape: f32[16,768], index: 3, kind: input, shape index: {}]
  %s4 = inlined_call_operand.vmem [shape: f32[768,48], index: 4, kind: input, shape index: {}]
  %s5 = inlined_call_operand.vmem [shape: f32[1,144], index: 5, kind: input, shape index: {}]
  %s6 = inlined_call_operand.vmem [shape: f32[144,384], index: 6, kind: input, shape index: {}]
  %s7 = inlined_call_operand.vmem [shape: f32[384,4], index: 7, kind: input, shape index: {}]
  %s8 = inlined_call_operand.vmem [shape: f32[1,4], index: 8, kind: input, shape index: {}]
  %s9 = inlined_call_operand.vmem [shape: f32[16,4], index: 9, kind: output, shape index: {}]
  %s10 = sld [smem:[#allocation0]]
  $region46: #{mini_gnn_forward.1} parent=0
    _
  %s12 = ssub.s32 1, %s10
  %s13 = scalar_select 0, %s12, %s10
  // Predicated region
  $region2: #{mini_gnn_forward.1} parent=0 // pred_check
    _
  $region3: #{mini_gnn_forward.1} parent=0 // pred_check_branch
    %15 = sbr.rel (0) target = $region5
  $region4: #{mini_gnn_forward.1} parent=0 // pred_region
    _
  $region5: #{mini_gnn_forward.1} parent=0 // pred_fallthru
    _
  // Predicated region
  $region6: #{mini_gnn_forward.1} parent=0 // pred_check
    _
  $region7: #{mini_gnn_forward.1} parent=0 // pred_check_branch
    %17 = sbr.rel (0) target = $region9
  $region8: #{mini_gnn_forward.1} parent=0 // pred_region
    _
  $region9: #{mini_gnn_forward.1} parent=0 // pred_fallthru
    _
  // Predicated region
  $region10: #{mini_gnn_forward.1} parent=0 // pred_check
    _
  $region11: #{mini_gnn_forward.1} parent=0 // pred_check_branch
    %19 = sbr.rel (0) target = $region13
  $region12: #{mini_gnn_forward.1} parent=0 // pred_region
    _
  $region13: #{mini_gnn_forward.1} parent=0 // pred_fallthru
    _
  // Predicated region
  $region14: #{mini_gnn_forward.1} parent=0 // pred_check
    _
  $region15: #{mini_gnn_forward.1} parent=0 // pred_check_branch
    %21 = sbr.rel (0) target = $region17
  $region16: #{mini_gnn_forward.1} parent=0 // pred_region
    _
  $region17: #{mini_gnn_forward.1} parent=0 // pred_fallthru
    _
  // Predicated region
  $region18: #{mini_gnn_forward.1} parent=0 // pred_check
    _
  $region19: #{mini_gnn_forward.1} parent=0 // pred_check_branch
    %23 = sbr.rel (0) target = $region21
  $region20: #{mini_gnn_forward.1} parent=0 // pred_region
    _
  $region21: #{mini_gnn_forward.1} parent=0 // pred_fallthru
    _
  // Predicated region
  $region22: #{mini_gnn_forward.1} parent=0 // pred_check
    _
  $region23: #{mini_gnn_forward.1} parent=0 // pred_check_branch
    %25 = sbr.rel (0) target = $region25
  $region24: #{mini_gnn_forward.1} parent=0 // pred_region
    _
  $region25: #{mini_gnn_forward.1} parent=0 // pred_fallthru
    _
  // Predicated region
  $region26: #{mini_gnn_forward.1} parent=0 // pred_check
    _
  $region27: #{mini_gnn_forward.1} parent=0 // pred_check_branch
    %27 = sbr.rel (0) target = $region29
  $region28: #{mini_gnn_forward.1} parent=0 // pred_region
    _
  $region29: #{mini_gnn_forward.1} parent=0 // pred_fallthru
    _
  // Predicated region
  $region30: #{mini_gnn_forward.1} parent=0 // pred_check
    _
  $region31: #{mini_gnn_forward.1} parent=0 // pred_check_branch
    %29 = sbr.rel (0) target = $region33
  $region32: #{mini_gnn_forward.1} parent=0 // pred_region
    _
  $region33: #{mini_gnn_forward.1} parent=0 // pred_fallthru
    _
  // Predicated region
  $region34: #{mini_gnn_forward.1} parent=0 // pred_check
    _
  $region35: #{mini_gnn_forward.1} parent=0 // pred_check_branch
    %31 = sbr.rel (0) target = $region37
  $region36: #{mini_gnn_forward.1} parent=0 // pred_region
    _
  $region37: #{mini_gnn_forward.1} parent=0 // pred_fallthru
    _
  %v34 = vld [vmem:[%s0] sm:$0xff]
  %v35 = vld [vmem:[%s0 + $0x8] sm:$0xff]
  %v36 = vld [vmem:[%s1] sm:$0x3]
  %v37 = vld [vmem:[%s1 + $0x2] sm:$0x3]
  %vm38 = vnez %v36
  %vm39 = vnez %v37
  %v40 = vld [vmem:[%s2] sm:$0x3]
  %v41 = vld [vmem:[%s2 + $0x2] sm:$0x3]
  %vm42 = vnez %v40
  %vm43 = vnez %v41
  %v44 = vld [vmem:[%s3] sm:$0xff]
  %v45 = vld [vmem:[%s3 + $0x8] sm:$0xff]
  %v46 = vld [vmem:[%s3 + $0x10] sm:$0xff]
  %v47 = vld [vmem:[%s3 + $0x18] sm:$0xff]
  %v48 = vld [vmem:[%s3 + $0x20] sm:$0xff]
  %v49 = vld [vmem:[%s3 + $0x28] sm:$0xff]
  %v50 = vld [vmem:[%s3 + $0x30] sm:$0xff]
  %v51 = vld [vmem:[%s3 + $0x38] sm:$0xff]
  %v52 = vld [vmem:[%s3 + $0x40] sm:$0xff]
  %v53 = vld [vmem:[%s3 + $0x48] sm:$0xff]
  %v54 = vld [vmem:[%s3 + $0x50] sm:$0xff]
  %v55 = vld [vmem:[%s3 + $0x58] sm:$0xff]
  %v56 = vld [vmem:[%s4] sm:$0xff]
  %v57 = vld [vmem:[%s4 + $0x8] sm:$0xff]
  %v58 = vld [vmem:[%s4 + $0x10] sm:$0xff]
  %v59 = vld [vmem:[%s4 + $0x18] sm:$0xff]
  %v60 = vld [vmem:[%s4 + $0x20] sm:$0xff]
  %v61 = vld [vmem:[%s4 + $0x28] sm:$0xff]
  %v62 = vld [vmem:[%s4 + $0x30] sm:$0xff]
  %v63 = vld [vmem:[%s4 + $0x38] sm:$0xff]
  %v64 = vld [vmem:[%s4 + $0x40] sm:$0xff]
  %v65 = vld [vmem:[%s4 + $0x48] sm:$0xff]
  %v66 = vld [vmem:[%s4 + $0x50] sm:$0xff]
  %v67 = vld [vmem:[%s4 + $0x58] sm:$0xff]
  %v68 = vld [vmem:[%s4 + $0x60] sm:$0xff]
  %v69 = vld [vmem:[%s4 + $0x68] sm:$0xff]
  %v70 = vld [vmem:[%s4 + $0x70] sm:$0xff]
  %v71 = vld [vmem:[%s4 + $0x78] sm:$0xff]
  %v72 = vld [vmem:[%s4 + $0x80] sm:$0xff]
  %v73 = vld [vmem:[%s4 + $0x88] sm:$0xff]
  %v74 = vld [vmem:[%s4 + $0x90] sm:$0xff]
  %v75 = vld [vmem:[%s4 + $0x98] sm:$0xff]
  %v76 = vld [vmem:[%s4 + $0xa0] sm:$0xff]
  %v77 = vld [vmem:[%s4 + $0xa8] sm:$0xff]
  %v78 = vld [vmem:[%s4 + $0xb0] sm:$0xff]
  %v79 = vld [vmem:[%s4 + $0xb8] sm:$0xff]
  %v80 = vld [vmem:[%s4 + $0xc0] sm:$0xff]
  %v81 = vld [vmem:[%s4 + $0xc8] sm:$0xff]
  %v82 = vld [vmem:[%s4 + $0xd0] sm:$0xff]
  %v83 = vld [vmem:[%s4 + $0xd8] sm:$0xff]
  %v84 = vld [vmem:[%s4 + $0xe0] sm:$0xff]
  %v85 = vld [vmem:[%s4 + $0xe8] sm:$0xff]
  %v86 = vld [vmem:[%s4 + $0xf0] sm:$0xff]
  %v87 = vld [vmem:[%s4 + $0xf8] sm:$0xff]
  %v88 = vld [vmem:[%s4 + $0x100] sm:$0xff]
  %v89 = vld [vmem:[%s4 + $0x108] sm:$0xff]
  %v90 = vld [vmem:[%s4 + $0x110] sm:$0xff]
  %v91 = vld [vmem:[%s4 + $0x118] sm:$0xff]
  %v92 = vld [vmem:[%s4 + $0x120] sm:$0xff]
  %v93 = vld [vmem:[%s4 + $0x128] sm:$0xff]
  %v94 = vld [vmem:[%s4 + $0x130] sm:$0xff]
  %v95 = vld [vmem:[%s4 + $0x138] sm:$0xff]
  %v96 = vld [vmem:[%s4 + $0x140] sm:$0xff]
  %v97 = vld [vmem:[%s4 + $0x148] sm:$0xff]
  %v98 = vld [vmem:[%s4 + $0x150] sm:$0xff]
  %v99 = vld [vmem:[%s4 + $0x158] sm:$0xff]
  %v100 = vld [vmem:[%s4 + $0x160] sm:$0xff]
  %v101 = vld [vmem:[%s4 + $0x168] sm:$0xff]
  %v102 = vld [vmem:[%s4 + $0x170] sm:$0xff]
  %v103 = vld [vmem:[%s4 + $0x178] sm:$0xff]
  %v104 = vld [vmem:[%s4 + $0x180] sm:$0xff]
  %v105 = vld [vmem:[%s4 + $0x188] sm:$0xff]
  %v106 = vld [vmem:[%s4 + $0x190] sm:$0xff]
  %v107 = vld [vmem:[%s4 + $0x198] sm:$0xff]
  %v108 = vld [vmem:[%s4 + $0x1a0] sm:$0xff]
  %v109 = vld [vmem:[%s4 + $0x1a8] sm:$0xff]
  %v110 = vld [vmem:[%s4 + $0x1b0] sm:$0xff]
  %v111 = vld [vmem:[%s4 + $0x1b8] sm:$0xff]
  %v112 = vld [vmem:[%s4 + $0x1c0] sm:$0xff]
  %v113 = vld [vmem:[%s4 + $0x1c8] sm:$0xff]
  %v114 = vld [vmem:[%s4 + $0x1d0] sm:$0xff]
  %v115 = vld [vmem:[%s4 + $0x1d8] sm:$0xff]
  %v116 = vld [vmem:[%s4 + $0x1e0] sm:$0xff]
  %v117 = vld [vmem:[%s4 + $0x1e8] sm:$0xff]
  %v118 = vld [vmem:[%s4 + $0x1f0] sm:$0xff]
  %v119 = vld [vmem:[%s4 + $0x1f8] sm:$0xff]
  %v120 = vld [vmem:[%s4 + $0x200] sm:$0xff]
  %v121 = vld [vmem:[%s4 + $0x208] sm:$0xff]
  %v122 = vld [vmem:[%s4 + $0x210] sm:$0xff]
  %v123 = vld [vmem:[%s4 + $0x218] sm:$0xff]
  %v124 = vld [vmem:[%s4 + $0x220] sm:$0xff]
  %v125 = vld [vmem:[%s4 + $0x228] sm:$0xff]
  %v126 = vld [vmem:[%s4 + $0x230] sm:$0xff]
  %v127 = vld [vmem:[%s4 + $0x238] sm:$0xff]
  %v128 = vld [vmem:[%s4 + $0x240] sm:$0xff]
  %v129 = vld [vmem:[%s4 + $0x248] sm:$0xff]
  %v130 = vld [vmem:[%s4 + $0x250] sm:$0xff]
  %v131 = vld [vmem:[%s4 + $0x258] sm:$0xff]
  %v132 = vld [vmem:[%s4 + $0x260] sm:$0xff]
  %v133 = vld [vmem:[%s4 + $0x268] sm:$0xff]
  %v134 = vld [vmem:[%s4 + $0x270] sm:$0xff]
  %v135 = vld [vmem:[%s4 + $0x278] sm:$0xff]
  %v136 = vld [vmem:[%s4 + $0x280] sm:$0xff]
  %v137 = vld [vmem:[%s4 + $0x288] sm:$0xff]
  %v138 = vld [vmem:[%s4 + $0x290] sm:$0xff]
  %v139 = vld [vmem:[%s4 + $0x298] sm:$0xff]
  %v140 = vld [vmem:[%s4 + $0x2a0] sm:$0xff]
  %v141 = vld [vmem:[%s4 + $0x2a8] sm:$0xff]
  %v142 = vld [vmem:[%s4 + $0x2b0] sm:$0xff]
  %v143 = vld [vmem:[%s4 + $0x2b8] sm:$0xff]
  %v144 = vld [vmem:[%s4 + $0x2c0] sm:$0xff]
  %v145 = vld [vmem:[%s4 + $0x2c8] sm:$0xff]
  %v146 = vld [vmem:[%s4 + $0x2d0] sm:$0xff]
  %v147 = vld [vmem:[%s4 + $0x2d8] sm:$0xff]
  %v148 = vld [vmem:[%s4 + $0x2e0] sm:$0xff]
  %v149 = vld [vmem:[%s4 + $0x2e8] sm:$0xff]
  %v150 = vld [vmem:[%s4 + $0x2f0] sm:$0xff]
  %v151 = vld [vmem:[%s4 + $0x2f8] sm:$0xff]
  %v152 = vld [vmem:[%s5] sm:$0x3]
  %vm153 = vcmask 130048
  %v155 = vsel %vm153, %v34, 0
  %v158 = vsel %vm153, %v35, 0
  %160 = vmatpush.msra.mxu0 0.0
  %161 = vmatpush.msra.mxu0 0.0
  %162 = vmatpush.msra.mxu0 0.0
  %163 = vmatpush.msra.mxu0 0.0
  %164 = vmatpush.msra.mxu0 0.0
  %165 = vmatpush.msra.mxu0 0.0
  %166 = vmatpush.msra.mxu0 0.0
  %167 = vmatpush.msra.mxu0 0.0
  %168 = vmatpush.msra.mxu0 0.0
  %169 = vmatpush.msra.mxu0 0.0
  %170 = vmatpush.msra.mxu0 0.0
  %171 = vmatpush.msra.mxu0 0.0
  %172 = vmatpush.msra.mxu0 0.0
  %173 = vmatpush.msra.mxu0 0.0
  %174 = vmatpush.msra.mxu0 %v50
  %175 = vmatpush.msra.mxu0 %v44
  %176 = vmatmul.f32.gmra.mxu0 %v155
  %v177 = vpop.f32.mrf.mxu0
  %v178 = vadd.f32 0.0, %v177
  %179 = vmatmul.f32.gmra.mxu0 %v158
  %v180 = vpop.f32.mrf.mxu0
  %v181 = vadd.f32 0.0, %v180
  %182 = vdwg.mxu0
  %183 = vmatpush.msra.mxu0 0.0
  %184 = vmatpush.msra.mxu0 0.0
  %185 = vmatpush.msra.mxu0 0.0
  %186 = vmatpush.msra.mxu0 0.0
  %187 = vmatpush.msra.mxu0 0.0
  %188 = vmatpush.msra.mxu0 0.0
  %189 = vmatpush.msra.mxu0 0.0
  %190 = vmatpush.msra.mxu0 0.0
  %191 = vmatpush.msra.mxu0 0.0
  %192 = vmatpush.msra.mxu0 0.0
  %193 = vmatpush.msra.mxu0 0.0
  %194 = vmatpush.msra.mxu0 0.0
  %195 = vmatpush.msra.mxu0 0.0
  %196 = vmatpush.msra.mxu0 0.0
  %197 = vmatpush.msra.mxu0 %v51
  %198 = vmatpush.msra.mxu0 %v45
  %199 = vmatmul.f32.gmra.mxu0 %v155
  %v200 = vpop.f32.mrf.mxu0
  %v201 = vadd.f32 0.0, %v200
  %202 = vmatmul.f32.gmra.mxu0 %v158
  %v203 = vpop.f32.mrf.mxu0
  %v204 = vadd.f32 0.0, %v203
  %205 = vdwg.mxu0
  %206 = vmatpush.msra.mxu0 0.0
  %207 = vmatpush.msra.mxu0 0.0
  %208 = vmatpush.msra.mxu0 0.0
  %209 = vmatpush.msra.mxu0 0.0
  %210 = vmatpush.msra.mxu0 0.0
  %211 = vmatpush.msra.mxu0 0.0
  %212 = vmatpush.msra.mxu0 0.0
  %213 = vmatpush.msra.mxu0 0.0
  %214 = vmatpush.msra.mxu0 0.0
  %215 = vmatpush.msra.mxu0 0.0
  %216 = vmatpush.msra.mxu0 0.0
  %217 = vmatpush.msra.mxu0 0.0
  %218 = vmatpush.msra.mxu0 0.0
  %219 = vmatpush.msra.mxu0 0.0
  %220 = vmatpush.msra.mxu0 %v52
  %221 = vmatpush.msra.mxu0 %v46
  %222 = vmatmul.f32.gmra.mxu0 %v155
  %v223 = vpop.f32.mrf.mxu0
  %v224 = vadd.f32 0.0, %v223
  %225 = vmatmul.f32.gmra.mxu0 %v158
  %v226 = vpop.f32.mrf.mxu0
  %v227 = vadd.f32 0.0, %v226
  %228 = vdwg.mxu0
  %229 = vmatpush.msra.mxu0 0.0
  %230 = vmatpush.msra.mxu0 0.0
  %231 = vmatpush.msra.mxu0 0.0
  %232 = vmatpush.msra.mxu0 0.0
  %233 = vmatpush.msra.mxu0 0.0
  %234 = vmatpush.msra.mxu0 0.0
  %235 = vmatpush.msra.mxu0 0.0
  %236 = vmatpush.msra.mxu0 0.0
  %237 = vmatpush.msra.mxu0 0.0
  %238 = vmatpush.msra.mxu0 0.0
  %239 = vmatpush.msra.mxu0 0.0
  %240 = vmatpush.msra.mxu0 0.0
  %241 = vmatpush.msra.mxu0 0.0
  %242 = vmatpush.msra.mxu0 0.0
  %243 = vmatpush.msra.mxu0 %v53
  %244 = vmatpush.msra.mxu0 %v47
  %245 = vmatmul.f32.gmra.mxu0 %v155
  %v246 = vpop.f32.mrf.mxu0
  %v247 = vadd.f32 0.0, %v246
  %248 = vmatmul.f32.gmra.mxu0 %v158
  %v249 = vpop.f32.mrf.mxu0
  %v250 = vadd.f32 0.0, %v249
  %251 = vdwg.mxu0
  %252 = vmatpush.msra.mxu0 0.0
  %253 = vmatpush.msra.mxu0 0.0
  %254 = vmatpush.msra.mxu0 0.0
  %255 = vmatpush.msra.mxu0 0.0
  %256 = vmatpush.msra.mxu0 0.0
  %257 = vmatpush.msra.mxu0 0.0
  %258 = vmatpush.msra.mxu0 0.0
  %259 = vmatpush.msra.mxu0 0.0
  %260 = vmatpush.msra.mxu0 0.0
  %261 = vmatpush.msra.mxu0 0.0
  %262 = vmatpush.msra.mxu0 0.0
  %263 = vmatpush.msra.mxu0 0.0
  %264 = vmatpush.msra.mxu0 0.0
  %265 = vmatpush.msra.mxu0 0.0
  %266 = vmatpush.msra.mxu0 %v54
  %267 = vmatpush.msra.mxu0 %v48
  %268 = vmatmul.f32.gmra.mxu0 %v155
  %v269 = vpop.f32.mrf.mxu0
  %v270 = vadd.f32 0.0, %v269
  %271 = vmatmul.f32.gmra.mxu0 %v158
  %v272 = vpop.f32.mrf.mxu0
  %v273 = vadd.f32 0.0, %v272
  %274 = vdwg.mxu0
  %275 = vmatpush.msra.mxu0 0.0
  %276 = vmatpush.msra.mxu0 0.0
  %277 = vmatpush.msra.mxu0 0.0
  %278 = vmatpush.msra.mxu0 0.0
  %279 = vmatpush.msra.mxu0 0.0
  %280 = vmatpush.msra.mxu0 0.0
  %281 = vmatpush.msra.mxu0 0.0
  %282 = vmatpush.msra.mxu0 0.0
  %283 = vmatpush.msra.mxu0 0.0
  %284 = vmatpush.msra.mxu0 0.0
  %285 = vmatpush.msra.mxu0 0.0
  %286 = vmatpush.msra.mxu0 0.0
  %287 = vmatpush.msra.mxu0 0.0
  %288 = vmatpush.msra.mxu0 0.0
  %289 = vmatpush.msra.mxu0 %v55
  %290 = vmatpush.msra.mxu0 %v49
  %291 = vmatmul.f32.gmra.mxu0 %v155
  %v292 = vpop.f32.mrf.mxu0
  %v293 = vadd.f32 0.0, %v292
  %294 = vmatmul.f32.gmra.mxu0 %v158
  %v295 = vpop.f32.mrf.mxu0
  %v296 = vadd.f32 0.0, %v295
  %297 = vdwg.mxu0
  %298 = vmatpush.msra.mxu0 %v71
  %299 = vmatpush.msra.mxu0 %v70
  %300 = vmatpush.msra.mxu0 %v69
  %301 = vmatpush.msra.mxu0 %v68
  %302 = vmatpush.msra.mxu0 %v67
  %303 = vmatpush.msra.mxu0 %v66
  %304 = vmatpush.msra.mxu0 %v65
  %305 = vmatpush.msra.mxu0 %v64
  %306 = vmatpush.msra.mxu0 %v63
  %307 = vmatpush.msra.mxu0 %v62
  %308 = vmatpush.msra.mxu0 %v61
  %309 = vmatpush.msra.mxu0 %v60
  %310 = vmatpush.msra.mxu0 %v59
  %311 = vmatpush.msra.mxu0 %v58
  %312 = vmatpush.msra.mxu0 %v57
  %313 = vmatpush.msra.mxu0 %v56
  %314 = vmatmul.f32.gmra.mxu0 %v178
  %v315 = vpop.f32.mrf.mxu0
  %v316 = vadd.f32 0.0, %v315
  %317 = vmatmul.f32.gmra.mxu0 %v181
  %v318 = vpop.f32.mrf.mxu0
  %v319 = vadd.f32 0.0, %v318
  %320 = vdwg.mxu0
  %321 = vmatpush.msra.mxu0 %v87
  %322 = vmatpush.msra.mxu0 %v86
  %323 = vmatpush.msra.mxu0 %v85
  %324 = vmatpush.msra.mxu0 %v84
  %325 = vmatpush.msra.mxu0 %v83
  %326 = vmatpush.msra.mxu0 %v82
  %327 = vmatpush.msra.mxu0 %v81
  %328 = vmatpush.msra.mxu0 %v80
  %329 = vmatpush.msra.mxu0 %v79
  %330 = vmatpush.msra.mxu0 %v78
  %331 = vmatpush.msra.mxu0 %v77
  %332 = vmatpush.msra.mxu0 %v76
  %333 = vmatpush.msra.mxu0 %v75
  %334 = vmatpush.msra.mxu0 %v74
  %335 = vmatpush.msra.mxu0 %v73
  %336 = vmatpush.msra.mxu0 %v72
  %337 = vmatmul.f32.gmra.mxu0 %v201
  %v338 = vpop.f32.mrf.mxu0
  %v339 = vadd.f32 %v316, %v338
  %340 = vmatmul.f32.gmra.mxu0 %v204
  %v341 = vpop.f32.mrf.mxu0
  %v342 = vadd.f32 %v319, %v341
  %343 = vdwg.mxu0
  %344 = vmatpush.msra.mxu0 %v103
  %345 = vmatpush.msra.mxu0 %v102
  %346 = vmatpush.msra.mxu0 %v101
  %347 = vmatpush.msra.mxu0 %v100
  %348 = vmatpush.msra.mxu0 %v99
  %349 = vmatpush.msra.mxu0 %v98
  %350 = vmatpush.msra.mxu0 %v97
  %351 = vmatpush.msra.mxu0 %v96
  %352 = vmatpush.msra.mxu0 %v95
  %353 = vmatpush.msra.mxu0 %v94
  %354 = vmatpush.msra.mxu0 %v93
  %355 = vmatpush.msra.mxu0 %v92
  %356 = vmatpush.msra.mxu0 %v91
  %357 = vmatpush.msra.mxu0 %v90
  %358 = vmatpush.msra.mxu0 %v89
  %359 = vmatpush.msra.mxu0 %v88
  %360 = vmatmul.f32.gmra.mxu0 %v224
  %v361 = vpop.f32.mrf.mxu0
  %v362 = vadd.f32 %v339, %v361
  %363 = vmatmul.f32.gmra.mxu0 %v227
  %v364 = vpop.f32.mrf.mxu0
  %v365 = vadd.f32 %v342, %v364
  %366 = vdwg.mxu0
  %367 = vmatpush.msra.mxu0 %v119
  %368 = vmatpush.msra.mxu0 %v118
  %369 = vmatpush.msra.mxu0 %v117
  %370 = vmatpush.msra.mxu0 %v116
  %371 = vmatpush.msra.mxu0 %v115
  %372 = vmatpush.msra.mxu0 %v114
  %373 = vmatpush.msra.mxu0 %v113
  %374 = vmatpush.msra.mxu0 %v112
  %375 = vmatpush.msra.mxu0 %v111
  %376 = vmatpush.msra.mxu0 %v110
  %377 = vmatpush.msra.mxu0 %v109
  %378 = vmatpush.msra.mxu0 %v108
  %379 = vmatpush.msra.mxu0 %v107
  %380 = vmatpush.msra.mxu0 %v106
  %381 = vmatpush.msra.mxu0 %v105
  %382 = vmatpush.msra.mxu0 %v104
  %383 = vmatmul.f32.gmra.mxu0 %v247
  %v384 = vpop.f32.mrf.mxu0
  %v385 = vadd.f32 %v362, %v384
  %386 = vmatmul.f32.gmra.mxu0 %v250
  %v387 = vpop.f32.mrf.mxu0
  %v388 = vadd.f32 %v365, %v387
  %389 = vdwg.mxu0
  %390 = vmatpush.msra.mxu0 %v135
  %391 = vmatpush.msra.mxu0 %v134
  %392 = vmatpush.msra.mxu0 %v133
  %393 = vmatpush.msra.mxu0 %v132
  %394 = vmatpush.msra.mxu0 %v131
  %395 = vmatpush.msra.mxu0 %v130
  %396 = vmatpush.msra.mxu0 %v129
  %397 = vmatpush.msra.mxu0 %v128
  %398 = vmatpush.msra.mxu0 %v127
  %399 = vmatpush.msra.mxu0 %v126
  %400 = vmatpush.msra.mxu0 %v125
  %401 = vmatpush.msra.mxu0 %v124
  %402 = vmatpush.msra.mxu0 %v123
  %403 = vmatpush.msra.mxu0 %v122
  %404 = vmatpush.msra.mxu0 %v121
  %405 = vmatpush.msra.mxu0 %v120
  %406 = vmatmul.f32.gmra.mxu0 %v270
  %v407 = vpop.f32.mrf.mxu0
  %v408 = vadd.f32 %v385, %v407
  %409 = vmatmul.f32.gmra.mxu0 %v273
  %v410 = vpop.f32.mrf.mxu0
  %v411 = vadd.f32 %v388, %v410
  %412 = vdwg.mxu0
  %413 = vmatpush.msra.mxu0 %v151
  %414 = vmatpush.msra.mxu0 %v150
  %415 = vmatpush.msra.mxu0 %v149
  %416 = vmatpush.msra.mxu0 %v148
  %417 = vmatpush.msra.mxu0 %v147
  %418 = vmatpush.msra.mxu0 %v146
  %419 = vmatpush.msra.mxu0 %v145
  %420 = vmatpush.msra.mxu0 %v144
  %421 = vmatpush.msra.mxu0 %v143
  %422 = vmatpush.msra.mxu0 %v142
  %423 = vmatpush.msra.mxu0 %v141
  %424 = vmatpush.msra.mxu0 %v140
  %425 = vmatpush.msra.mxu0 %v139
  %426 = vmatpush.msra.mxu0 %v138
  %427 = vmatpush.msra.mxu0 %v137
  %428 = vmatpush.msra.mxu0 %v136
  %429 = vmatmul.f32.gmra.mxu0 %v293
  %v430 = vpop.f32.mrf.mxu0
  %v431 = vadd.f32 %v408, %v430
  %432 = vmatmul.f32.gmra.mxu0 %v296
  %v433 = vpop.f32.mrf.mxu0
  %v434 = vadd.f32 %v411, %v433
  %435 = vdwg.mxu0
  %436 = vxpose.xlu0.b32.start [1/16] %v431, 128
  %437 = vxpose.xlu0.b32.cont [2/16] %v434, 128
  %438 = vxpose.xlu0.b32.cont [3/16] 0.0, 128
  %439 = vxpose.xlu0.b32.cont [4/16] 0.0, 128
  %440 = vxpose.xlu0.b32.cont [5/16] 0.0, 128
  %441 = vxpose.xlu0.b32.cont [6/16] 0.0, 128
  %442 = vxpose.xlu0.b32.cont [7/16] 0.0, 128
  %443 = vxpose.xlu0.b32.cont [8/16] 0.0, 128
  %444 = vxpose.xlu0.b32.cont [9/16] 0.0, 128
  %445 = vxpose.xlu0.b32.cont [10/16] 0.0, 128
  %446 = vxpose.xlu0.b32.cont [11/16] 0.0, 128
  %447 = vxpose.xlu0.b32.cont [12/16] 0.0, 128
  %448 = vxpose.xlu0.b32.cont [13/16] 0.0, 128
  %449 = vxpose.xlu0.b32.cont [14/16] 0.0, 128
  %450 = vxpose.xlu0.b32.cont [15/16] 0.0, 128
  %451 = vxpose.xlu0.b32.end [16/16] 0.0, 128
  %v452 = vpop.trf.xlu0
  %v453 = vpop.trf.xlu0
  %v454 = vpop.trf.xlu0
  %v455 = vpop.trf.xlu0
  %v456 = vpop.trf.xlu0
  %v457 = vpop.trf.xlu0
  %v458 = vpop.trf.xlu0
  %v459 = vpop.trf.xlu0
  %v460 = vpop.trf.xlu0
  %v461 = vpop.trf.xlu0
  %v462 = vpop.trf.xlu0
  %v463 = vpop.trf.xlu0
  %v464 = vpop.trf.xlu0
  %v465 = vpop.trf.xlu0
  %v466 = vpop.trf.xlu0
  %v467 = vpop.trf.xlu0
  %v469 = vperm.slane %v152, 0
  %v470 = vperm.slane %v152, 1
  %v473 = vadd.f32 %v270, %v469
  %v474 = vadd.f32 %v293, %v470
  %v475 = vadd.f32 %v273, %v469
  %v476 = vadd.f32 %v296, %v470
  %478 = vset.pattern.permute.xlu0 0
  %479 = vperm.xlu0 %478, %v431
  %v480 = vpop.permute.xlu0 %479
  %483 = vset.pattern.permute.xlu0 0
  %484 = vperm.xlu0 %483, %v434
  %v485 = vpop.permute.xlu0 %484
  %v487 = vperm.slane %v453, 4
  %v488 = vadd.f32 %v480, %v487
  %v489 = vadd.f32 %v485, %v487
  %vm490 = vcmp.gt.f32.partialorder %v488, 0.0
  %vm491 = vcmp.gt.f32.partialorder %v489, 0.0
  %v492 = vmul.f32 %v488, 0.2
  %v493 = vmul.f32 %v489, 0.2
  %v494 = vsel %vm490, %v488, %v492
  %v495 = vsel %vm491, %v489, %v493
  %v496 = vsel %vm38, 16843009, 0
  %v497 = vsel %vm39, 16843009, 0
  %v498 = vunpack.c.0.s8 %v496
  %v499 = vunpack.c.0.s8 %v497
  %vm500 = vcmp.ne.s32.totalorder %v498, 0
  %vm501 = vcmp.ne.s32.totalorder %v499, 0
  %v502 = vsel %vm500, %v494, -1e+30
  %v503 = vsel %vm501, %v495, -1e+30
  %v504 = vsel %vm153, %v502, -inf
  %505 = vmax.xlane.f32.xlu0 %v504
  %v506 = vpop.xlane.xlu0 %505
  %v507 = vsel %vm153, %v503, -inf
  %508 = vmax.xlane.f32.xlu0 %v507
  %v509 = vpop.xlane.xlu0 %508
  %v510 = vsub.f32 %v502, %v506
  %v511 = vsub.f32 %v503, %v509
  %v512 = vmul.f32 %v510, 1.442695
  %v513 = vpow.pop %v512
  %v514 = vmul.f32 %v511, 1.442695
  %v515 = vpow.pop %v514
  %v516 = vsel %vm500, %v513, 0.0
  %v517 = vsel %vm501, %v515, 0.0
  %v518 = vsel %vm153, %v516, 0.0
  %519 = vadd.xlane.f32.xlu0 %v518
  %v520 = vpop.xlane.xlu0 %519
  %v521 = vsel %vm153, %v517, 0.0
  %522 = vadd.xlane.f32.xlu0 %v521
  %v523 = vpop.xlane.xlu0 %522
  %v524 = vmax.f32 %v520, 1e-20
  %v525 = vmax.f32 %v523, 1e-20
  %v526 = vrcp.pop %v524
  %v527 = vrcp.pop %v525
  %v528 = vmul.f32 %v516, %v526
  %v529 = vmul.f32 %v517, %v527
  %v531 = vsel %vm153, %v528, 0
  %v534 = vsel %vm153, %v529, 0
  %536 = vmatpush.msra.mxu0 0.0
  %537 = vmatpush.msra.mxu0 0.0
  %538 = vmatpush.msra.mxu0 0.0
  %539 = vmatpush.msra.mxu0 0.0
  %540 = vmatpush.msra.mxu0 0.0
  %541 = vmatpush.msra.mxu0 0.0
  %542 = vmatpush.msra.mxu0 0.0
  %543 = vmatpush.msra.mxu0 0.0
  %544 = vmatpush.msra.mxu0 0.0
  %545 = vmatpush.msra.mxu0 0.0
  %546 = vmatpush.msra.mxu0 0.0
  %547 = vmatpush.msra.mxu0 0.0
  %548 = vmatpush.msra.mxu0 0.0
  %549 = vmatpush.msra.mxu0 0.0
  %550 = vmatpush.msra.mxu0 %v181
  %551 = vmatpush.msra.mxu0 %v178
  %552 = vmatmul.f32.gmra.mxu0 %v531
  %v553 = vpop.f32.mrf.mxu0
  %v554 = vadd.f32 0.0, %v553
  %555 = vmatmul.f32.gmra.mxu0 %v534
  %v556 = vpop.f32.mrf.mxu0
  %v557 = vadd.f32 0.0, %v556
  %558 = vdwg.mxu0
  %559 = vset.pattern.permute.xlu0 24
  %560 = vperm.xlu0 %559, %v431
  %v561 = vpop.permute.xlu0 %560
  %563 = vset.pattern.permute.xlu0 24
  %564 = vperm.xlu0 %563, %v434
  %v565 = vpop.permute.xlu0 %564
  %v567 = vperm.slane %v456, 4
  %v568 = vadd.f32 %v561, %v567
  %v569 = vadd.f32 %v565, %v567
  %vm570 = vcmp.gt.f32.partialorder %v568, 0.0
  %vm571 = vcmp.gt.f32.partialorder %v569, 0.0
  %v572 = vmul.f32 %v568, 0.2
  %v573 = vmul.f32 %v569, 0.2
  %v574 = vsel %vm570, %v568, %v572
  %v575 = vsel %vm571, %v569, %v573
  %v576 = vsel %vm42, 16843009, 0
  %v577 = vsel %vm43, 16843009, 0
  %v578 = vunpack.c.0.s8 %v576
  %v579 = vunpack.c.0.s8 %v577
  %vm580 = vcmp.ne.s32.totalorder %v578, 0
  %vm581 = vcmp.ne.s32.totalorder %v579, 0
  %v582 = vsel %vm580, %v574, -1e+30
  %v583 = vsel %vm581, %v575, -1e+30
  %v584 = vsel %vm153, %v582, -inf
  %585 = vmax.xlane.f32.xlu0 %v584
  %v586 = vpop.xlane.xlu0 %585
  %v587 = vsel %vm153, %v583, -inf
  %588 = vmax.xlane.f32.xlu0 %v587
  %v589 = vpop.xlane.xlu0 %588
  %v590 = vsub.f32 %v582, %v586
  %v591 = vsub.f32 %v583, %v589
  %v592 = vmul.f32 %v590, 1.442695
  %v593 = vpow.pop %v592
  %v594 = vmul.f32 %v591, 1.442695
  %v595 = vpow.pop %v594
  %v596 = vsel %vm580, %v593, 0.0
  %v597 = vsel %vm581, %v595, 0.0
  %v598 = vsel %vm153, %v596, 0.0
  %599 = vadd.xlane.f32.xlu0 %v598
  %v600 = vpop.xlane.xlu0 %599
  %v601 = vsel %vm153, %v597, 0.0
  %602 = vadd.xlane.f32.xlu0 %v601
  %v603 = vpop.xlane.xlu0 %602
  %v604 = vmax.f32 %v600, 1e-20
  %v605 = vmax.f32 %v603, 1e-20
  %v606 = vrcp.pop %v604
  %v607 = vrcp.pop %v605
  %v608 = vmul.f32 %v596, %v606
  %v609 = vmul.f32 %v597, %v607
  %v611 = vsel %vm153, %v608, 0
  %v614 = vsel %vm153, %v609, 0
  %616 = vmatpush.msra.mxu0 0.0
  %617 = vmatpush.msra.mxu0 0.0
  %618 = vmatpush.msra.mxu0 0.0
  %619 = vmatpush.msra.mxu0 0.0
  %620 = vmatpush.msra.mxu0 0.0
  %621 = vmatpush.msra.mxu0 0.0
  %622 = vmatpush.msra.mxu0 0.0
  %623 = vmatpush.msra.mxu0 0.0
  %624 = vmatpush.msra.mxu0 0.0
  %625 = vmatpush.msra.mxu0 0.0
  %626 = vmatpush.msra.mxu0 0.0
  %627 = vmatpush.msra.mxu0 0.0
  %628 = vmatpush.msra.mxu0 0.0
  %629 = vmatpush.msra.mxu0 0.0
  %630 = vmatpush.msra.mxu0 %v227
  %631 = vmatpush.msra.mxu0 %v224
  %632 = vmatmul.f32.gmra.mxu0 %v611
  %v633 = vpop.f32.mrf.mxu0
  %v634 = vadd.f32 0.0, %v633
  %635 = vmatmul.f32.gmra.mxu0 %v614
  %v636 = vpop.f32.mrf.mxu0
  %v637 = vadd.f32 0.0, %v636
  %638 = vdwg.mxu0
  %v639 = vmul.f32 %v634, 0.5
  %v640 = vmul.f32 %v637, 0.5
  %v641 = vmul.f32 %v554, 0.5
  %v642 = vmul.f32 %v557, 0.5
  %v643 = vadd.f32 %v639, %v641
  %v644 = vadd.f32 %v640, %v642
  %v645 = vadd.f32 %v643, %v473
  %v646 = vadd.f32 %v644, %v475
  %647 = vset.pattern.permute.xlu0 1
  %648 = vperm.xlu0 %647, %v431
  %v649 = vpop.permute.xlu0 %648
  %651 = vset.pattern.permute.xlu0 1
  %652 = vperm.xlu0 %651, %v434
  %v653 = vpop.permute.xlu0 %652
  %v655 = vperm.slane %v453, 5
  %v656 = vadd.f32 %v649, %v655
  %v657 = vadd.f32 %v653, %v655
  %vm658 = vcmp.gt.f32.partialorder %v656, 0.0
  %vm659 = vcmp.gt.f32.partialorder %v657, 0.0
  %v660 = vmul.f32 %v656, 0.2
  %v661 = vmul.f32 %v657, 0.2
  %v662 = vsel %vm658, %v656, %v660
  %v663 = vsel %vm659, %v657, %v661
  %v664 = vsel %vm500, %v662, -1e+30
  %v665 = vsel %vm501, %v663, -1e+30
  %v666 = vsel %vm153, %v664, -inf
  %667 = vmax.xlane.f32.xlu0 %v666
  %v668 = vpop.xlane.xlu0 %667
  %v669 = vsel %vm153, %v665, -inf
  %670 = vmax.xlane.f32.xlu0 %v669
  %v671 = vpop.xlane.xlu0 %670
  %v672 = vsub.f32 %v664, %v668
  %v673 = vsub.f32 %v665, %v671
  %v674 = vmul.f32 %v672, 1.442695
  %v675 = vpow.pop %v674
  %v676 = vmul.f32 %v673, 1.442695
  %v677 = vpow.pop %v676
  %v678 = vsel %vm500, %v675, 0.0
  %v679 = vsel %vm501, %v677, 0.0
  %v680 = vsel %vm153, %v678, 0.0
  %681 = vadd.xlane.f32.xlu0 %v680
  %v682 = vpop.xlane.xlu0 %681
  %v683 = vsel %vm153, %v679, 0.0
  %684 = vadd.xlane.f32.xlu0 %v683
  %v685 = vpop.xlane.xlu0 %684
  %v686 = vmax.f32 %v682, 1e-20
  %v687 = vmax.f32 %v685, 1e-20
  %v688 = vrcp.pop %v686
  %v689 = vrcp.pop %v687
  %v690 = vmul.f32 %v678, %v688
  %v691 = vmul.f32 %v679, %v689
  %694 = vrot.lane.b32.xlu0 %v178, 116
  %v695 = vpop.permute.xlu0 %694
  %696 = vrot.lane.b32.xlu0 %v181, 116
  %v697 = vpop.permute.xlu0 %696
  %v701 = vsel %vm153, %v690, 0
  %v704 = vsel %vm153, %v691, 0
  %706 = vmatpush.msra.mxu0 0.0
  %707 = vmatpush.msra.mxu0 0.0
  %708 = vmatpush.msra.mxu0 0.0
  %709 = vmatpush.msra.mxu0 0.0
  %710 = vmatpush.msra.mxu0 0.0
  %711 = vmatpush.msra.mxu0 0.0
  %712 = vmatpush.msra.mxu0 0.0
  %713 = vmatpush.msra.mxu0 0.0
  %714 = vmatpush.msra.mxu0 0.0
  %715 = vmatpush.msra.mxu0 0.0
  %716 = vmatpush.msra.mxu0 0.0
  %717 = vmatpush.msra.mxu0 0.0
  %718 = vmatpush.msra.mxu0 0.0
  %719 = vmatpush.msra.mxu0 0.0
  %720 = vmatpush.msra.mxu0 %v697
  %721 = vmatpush.msra.mxu0 %v695
  %722 = vmatmul.f32.gmra.mxu0 %v701
  %v723 = vpop.f32.mrf.mxu0
  %v724 = vadd.f32 0.0, %v723
  %725 = vmatmul.f32.gmra.mxu0 %v704
  %v726 = vpop.f32.mrf.mxu0
  %v727 = vadd.f32 0.0, %v726
  %728 = vdwg.mxu0
  %729 = vset.pattern.permute.xlu0 25
  %730 = vperm.xlu0 %729, %v431
  %v731 = vpop.permute.xlu0 %730
  %733 = vset.pattern.permute.xlu0 25
  %734 = vperm.xlu0 %733, %v434
  %v735 = vpop.permute.xlu0 %734
  %v737 = vperm.slane %v456, 5
  %v738 = vadd.f32 %v731, %v737
  %v739 = vadd.f32 %v735, %v737
  %vm740 = vcmp.gt.f32.partialorder %v738, 0.0
  %vm741 = vcmp.gt.f32.partialorder %v739, 0.0
  %v742 = vmul.f32 %v738, 0.2
  %v743 = vmul.f32 %v739, 0.2
  %v744 = vsel %vm740, %v738, %v742
  %v745 = vsel %vm741, %v739, %v743
  %v746 = vsel %vm580, %v744, -1e+30
  %v747 = vsel %vm581, %v745, -1e+30
  %v748 = vsel %vm153, %v746, -inf
  %749 = vmax.xlane.f32.xlu0 %v748
  %v750 = vpop.xlane.xlu0 %749
  %v751 = vsel %vm153, %v747, -inf
  %752 = vmax.xlane.f32.xlu0 %v751
  %v753 = vpop.xlane.xlu0 %752
  %v754 = vsub.f32 %v746, %v750
  %v755 = vsub.f32 %v747, %v753
  %v756 = vmul.f32 %v754, 1.442695
  %v757 = vpow.pop %v756
  %v758 = vmul.f32 %v755, 1.442695
  %v759 = vpow.pop %v758
  %v760 = vsel %vm580, %v757, 0.0
  %v761 = vsel %vm581, %v759, 0.0
  %v762 = vsel %vm153, %v760, 0.0
  %763 = vadd.xlane.f32.xlu0 %v762
  %v764 = vpop.xlane.xlu0 %763
  %v765 = vsel %vm153, %v761, 0.0
  %766 = vadd.xlane.f32.xlu0 %v765
  %v767 = vpop.xlane.xlu0 %766
  %v768 = vmax.f32 %v764, 1e-20
  %v769 = vmax.f32 %v767, 1e-20
  %v770 = vrcp.pop %v768
  %v771 = vrcp.pop %v769
  %v772 = vmul.f32 %v760, %v770
  %v773 = vmul.f32 %v761, %v771
  %776 = vrot.lane.b32.xlu0 %v224, 116
  %v777 = vpop.permute.xlu0 %776
  %778 = vrot.lane.b32.xlu0 %v227, 116
  %v779 = vpop.permute.xlu0 %778
  %v783 = vsel %vm153, %v772, 0
  %v786 = vsel %vm153, %v773, 0
  %788 = vmatpush.msra.mxu0 0.0
  %789 = vmatpush.msra.mxu0 0.0
  %790 = vmatpush.msra.mxu0 0.0
  %791 = vmatpush.msra.mxu0 0.0
  %792 = vmatpush.msra.mxu0 0.0
  %793 = vmatpush.msra.mxu0 0.0
  %794 = vmatpush.msra.mxu0 0.0
  %795 = vmatpush.msra.mxu0 0.0
  %796 = vmatpush.msra.mxu0 0.0
  %797 = vmatpush.msra.mxu0 0.0
  %798 = vmatpush.msra.mxu0 0.0
  %799 = vmatpush.msra.mxu0 0.0
  %800 = vmatpush.msra.mxu0 0.0
  %801 = vmatpush.msra.mxu0 0.0
  %802 = vmatpush.msra.mxu0 %v779
  %803 = vmatpush.msra.mxu0 %v777
  %804 = vmatmul.f32.gmra.mxu0 %v783
  %v805 = vpop.f32.mrf.mxu0
  %v806 = vadd.f32 0.0, %v805
  %807 = vmatmul.f32.gmra.mxu0 %v786
  %v808 = vpop.f32.mrf.mxu0
  %v809 = vadd.f32 0.0, %v808
  %810 = vdwg.mxu0
  %v811 = vmul.f32 %v806, 0.5
  %v812 = vmul.f32 %v809, 0.5
  %v813 = vmul.f32 %v724, 0.5
  %v814 = vmul.f32 %v727, 0.5
  %v815 = vadd.f32 %v811, %v813
  %v816 = vadd.f32 %v812, %v814
  %819 = vrot.lane.b32.xlu0 %v473, 116
  %v820 = vpop.permute.xlu0 %819
  %821 = vrot.lane.b32.xlu0 %v475, 116
  %v822 = vpop.permute.xlu0 %821
  %v825 = vadd.f32 %v815, %v820
  %v826 = vadd.f32 %v816, %v822
  %827 = vset.pattern.permute.xlu0 2
  %828 = vperm.xlu0 %827, %v431
  %v829 = vpop.permute.xlu0 %828
  %831 = vset.pattern.permute.xlu0 2
  %832 = vperm.xlu0 %831, %v434
  %v833 = vpop.permute.xlu0 %832
  %v835 = vperm.slane %v453, 6
  %v836 = vadd.f32 %v829, %v835
  %v837 = vadd.f32 %v833, %v835
  %vm838 = vcmp.gt.f32.partialorder %v836, 0.0
  %vm839 = vcmp.gt.f32.partialorder %v837, 0.0
  %v840 = vmul.f32 %v836, 0.2
  %v841 = vmul.f32 %v837, 0.2
  %v842 = vsel %vm838, %v836, %v840
  %v843 = vsel %vm839, %v837, %v841
  %v844 = vsel %vm500, %v842, -1e+30
  %v845 = vsel %vm501, %v843, -1e+30
  %v846 = vsel %vm153, %v844, -inf
  %847 = vmax.xlane.f32.xlu0 %v846
  %v848 = vpop.xlane.xlu0 %847
  %v849 = vsel %vm153, %v845, -inf
  %850 = vmax.xlane.f32.xlu0 %v849
  %v851 = vpop.xlane.xlu0 %850
  %v852 = vsub.f32 %v844, %v848
  %v853 = vsub.f32 %v845, %v851
  %v854 = vmul.f32 %v852, 1.442695
  %v855 = vpow.pop %v854
  %v856 = vmul.f32 %v853, 1.442695
  %v857 = vpow.pop %v856
  %v858 = vsel %vm500, %v855, 0.0
  %v859 = vsel %vm501, %v857, 0.0
  %v860 = vsel %vm153, %v858, 0.0
  %861 = vadd.xlane.f32.xlu0 %v860
  %v862 = vpop.xlane.xlu0 %861
  %v863 = vsel %vm153, %v859, 0.0
  %864 = vadd.xlane.f32.xlu0 %v863
  %v865 = vpop.xlane.xlu0 %864
  %v866 = vmax.f32 %v862, 1e-20
  %v867 = vmax.f32 %v865, 1e-20
  %v868 = vrcp.pop %v866
  %v869 = vrcp.pop %v867
  %v870 = vmul.f32 %v858, %v868
  %v871 = vmul.f32 %v859, %v869
  %872 = vrot.lane.b32.xlu0 %v178, 104
  %v873 = vpop.permute.xlu0 %872
  %874 = vrot.lane.b32.xlu0 %v181, 104
  %v875 = vpop.permute.xlu0 %874
  %v879 = vsel %vm153, %v870, 0
  %v882 = vsel %vm153, %v871, 0
  %884 = vmatpush.msra.mxu0 0.0
  %885 = vmatpush.msra.mxu0 0.0
  %886 = vmatpush.msra.mxu0 0.0
  %887 = vmatpush.msra.mxu0 0.0
  %888 = vmatpush.msra.mxu0 0.0
  %889 = vmatpush.msra.mxu0 0.0
  %890 = vmatpush.msra.mxu0 0.0
  %891 = vmatpush.msra.mxu0 0.0
  %892 = vmatpush.msra.mxu0 0.0
  %893 = vmatpush.msra.mxu0 0.0
  %894 = vmatpush.msra.mxu0 0.0
  %895 = vmatpush.msra.mxu0 0.0
  %896 = vmatpush.msra.mxu0 0.0
  %897 = vmatpush.msra.mxu0 0.0
  %898 = vmatpush.msra.mxu0 %v875
  %899 = vmatpush.msra.mxu0 %v873
  %900 = vmatmul.f32.gmra.mxu0 %v879
  %v901 = vpop.f32.mrf.mxu0
  %v902 = vadd.f32 0.0, %v901
  %903 = vmatmul.f32.gmra.mxu0 %v882
  %v904 = vpop.f32.mrf.mxu0
  %v905 = vadd.f32 0.0, %v904
  %906 = vdwg.mxu0
  %907 = vset.pattern.permute.xlu0 26
  %908 = vperm.xlu0 %907, %v431
  %v909 = vpop.permute.xlu0 %908
  %911 = vset.pattern.permute.xlu0 26
  %912 = vperm.xlu0 %911, %v434
  %v913 = vpop.permute.xlu0 %912
  %v915 = vperm.slane %v456, 6
  %v916 = vadd.f32 %v909, %v915
  %v917 = vadd.f32 %v913, %v915
  %vm918 = vcmp.gt.f32.partialorder %v916, 0.0
  %vm919 = vcmp.gt.f32.partialorder %v917, 0.0
  %v920 = vmul.f32 %v916, 0.2
  %v921 = vmul.f32 %v917, 0.2
  %v922 = vsel %vm918, %v916, %v920
  %v923 = vsel %vm919, %v917, %v921
  %v924 = vsel %vm580, %v922, -1e+30
  %v925 = vsel %vm581, %v923, -1e+30
  %v926 = vsel %vm153, %v924, -inf
  %927 = vmax.xlane.f32.xlu0 %v926
  %v928 = vpop.xlane.xlu0 %927
  %v929 = vsel %vm153, %v925, -inf
  %930 = vmax.xlane.f32.xlu0 %v929
  %v931 = vpop.xlane.xlu0 %930
  %v932 = vsub.f32 %v924, %v928
  %v933 = vsub.f32 %v925, %v931
  %v934 = vmul.f32 %v932, 1.442695
  %v935 = vpow.pop %v934
  %v936 = vmul.f32 %v933, 1.442695
  %v937 = vpow.pop %v936
  %v938 = vsel %vm580, %v935, 0.0
  %v939 = vsel %vm581, %v937, 0.0
  %v940 = vsel %vm153, %v938, 0.0
  %941 = vadd.xlane.f32.xlu0 %v940
  %v942 = vpop.xlane.xlu0 %941
  %v943 = vsel %vm153, %v939, 0.0
  %944 = vadd.xlane.f32.xlu0 %v943
  %v945 = vpop.xlane.xlu0 %944
  %v946 = vmax.f32 %v942, 1e-20
  %v947 = vmax.f32 %v945, 1e-20
  %v948 = vrcp.pop %v946
  %v949 = vrcp.pop %v947
  %v950 = vmul.f32 %v938, %v948
  %v951 = vmul.f32 %v939, %v949
  %952 = vrot.lane.b32.xlu0 %v224, 104
  %v953 = vpop.permute.xlu0 %952
  %954 = vrot.lane.b32.xlu0 %v227, 104
  %v955 = vpop.permute.xlu0 %954
  %v959 = vsel %vm153, %v950, 0
  %v962 = vsel %vm153, %v951, 0
  %964 = vmatpush.msra.mxu0 0.0
  %965 = vmatpush.msra.mxu0 0.0
  %966 = vmatpush.msra.mxu0 0.0
  %967 = vmatpush.msra.mxu0 0.0
  %968 = vmatpush.msra.mxu0 0.0
  %969 = vmatpush.msra.mxu0 0.0
  %970 = vmatpush.msra.mxu0 0.0
  %971 = vmatpush.msra.mxu0 0.0
  %972 = vmatpush.msra.mxu0 0.0
  %973 = vmatpush.msra.mxu0 0.0
  %974 = vmatpush.msra.mxu0 0.0
  %975 = vmatpush.msra.mxu0 0.0
  %976 = vmatpush.msra.mxu0 0.0
  %977 = vmatpush.msra.mxu0 0.0
  %978 = vmatpush.msra.mxu0 %v955
  %979 = vmatpush.msra.mxu0 %v953
  %980 = vmatmul.f32.gmra.mxu0 %v959
  %v981 = vpop.f32.mrf.mxu0
  %v982 = vadd.f32 0.0, %v981
  %983 = vmatmul.f32.gmra.mxu0 %v962
  %v984 = vpop.f32.mrf.mxu0
  %v985 = vadd.f32 0.0, %v984
  %986 = vdwg.mxu0
  %v987 = vmul.f32 %v982, 0.5
  %v988 = vmul.f32 %v985, 0.5
  %v989 = vmul.f32 %v902, 0.5
  %v990 = vmul.f32 %v905, 0.5
  %v991 = vadd.f32 %v987, %v989
  %v992 = vadd.f32 %v988, %v990
  %993 = vrot.lane.b32.xlu0 %v473, 104
  %v994 = vpop.permute.xlu0 %993
  %995 = vrot.lane.b32.xlu0 %v475, 104
  %v996 = vpop.permute.xlu0 %995
  %v999 = vadd.f32 %v991, %v994
  %v1000 = vadd.f32 %v992, %v996
  %1001 = vset.pattern.permute.xlu0 3
  %1002 = vperm.xlu0 %1001, %v431
  %v1003 = vpop.permute.xlu0 %1002
  %1005 = vset.pattern.permute.xlu0 3
  %1006 = vperm.xlu0 %1005, %v434
  %v1007 = vpop.permute.xlu0 %1006
  %v1009 = vperm.slane %v453, 7
  %v1010 = vadd.f32 %v1003, %v1009
  %v1011 = vadd.f32 %v1007, %v1009
  %vm1012 = vcmp.gt.f32.partialorder %v1010, 0.0
  %vm1013 = vcmp.gt.f32.partialorder %v1011, 0.0
  %v1014 = vmul.f32 %v1010, 0.2
  %v1015 = vmul.f32 %v1011, 0.2
  %v1016 = vsel %vm1012, %v1010, %v1014
  %v1017 = vsel %vm1013, %v1011, %v1015
  %v1018 = vsel %vm500, %v1016, -1e+30
  %v1019 = vsel %vm501, %v1017, -1e+30
  %v1020 = vsel %vm153, %v1018, -inf
  %1021 = vmax.xlane.f32.xlu0 %v1020
  %v1022 = vpop.xlane.xlu0 %1021
  %v1023 = vsel %vm153, %v1019, -inf
  %1024 = vmax.xlane.f32.xlu0 %v1023
  %v1025 = vpop.xlane.xlu0 %1024
  %v1026 = vsub.f32 %v1018, %v1022
  %v1027 = vsub.f32 %v1019, %v1025
  %v1028 = vmul.f32 %v1026, 1.442695
  %v1029 = vpow.pop %v1028
  %v1030 = vmul.f32 %v1027, 1.442695
  %v1031 = vpow.pop %v1030
  %v1032 = vsel %vm500, %v1029, 0.0
  %v1033 = vsel %vm501, %v1031, 0.0
  %v1034 = vsel %vm153, %v1032, 0.0
  %1035 = vadd.xlane.f32.xlu0 %v1034
  %v1036 = vpop.xlane.xlu0 %1035
  %v1037 = vsel %vm153, %v1033, 0.0
  %1038 = vadd.xlane.f32.xlu0 %v1037
  %v1039 = vpop.xlane.xlu0 %1038
  %v1040 = vmax.f32 %v1036, 1e-20
  %v1041 = vmax.f32 %v1039, 1e-20
  %v1042 = vrcp.pop %v1040
  %v1043 = vrcp.pop %v1041
  %v1044 = vmul.f32 %v1032, %v1042
  %v1045 = vmul.f32 %v1033, %v1043
  %1046 = vrot.lane.b32.xlu0 %v178, 92
  %v1047 = vpop.permute.xlu0 %1046
  %1048 = vrot.lane.b32.xlu0 %v181, 92
  %v1049 = vpop.permute.xlu0 %1048
  %v1053 = vsel %vm153, %v1044, 0
  %v1056 = vsel %vm153, %v1045, 0
  %1058 = vmatpush.msra.mxu0 0.0
  %1059 = vmatpush.msra.mxu0 0.0
  %1060 = vmatpush.msra.mxu0 0.0
  %1061 = vmatpush.msra.mxu0 0.0
  %1062 = vmatpush.msra.mxu0 0.0
  %1063 = vmatpush.msra.mxu0 0.0
  %1064 = vmatpush.msra.mxu0 0.0
  %1065 = vmatpush.msra.mxu0 0.0
  %1066 = vmatpush.msra.mxu0 0.0
  %1067 = vmatpush.msra.mxu0 0.0
  %1068 = vmatpush.msra.mxu0 0.0
  %1069 = vmatpush.msra.mxu0 0.0
  %1070 = vmatpush.msra.mxu0 0.0
  %1071 = vmatpush.msra.mxu0 0.0
  %1072 = vmatpush.msra.mxu0 %v1049
  %1073 = vmatpush.msra.mxu0 %v1047
  %1074 = vmatmul.f32.gmra.mxu0 %v1053
  %v1075 = vpop.f32.mrf.mxu0
  %v1076 = vadd.f32 0.0, %v1075
  %1077 = vmatmul.f32.gmra.mxu0 %v1056
  %v1078 = vpop.f32.mrf.mxu0
  %v1079 = vadd.f32 0.0, %v1078
  %1080 = vdwg.mxu0
  %1081 = vset.pattern.permute.xlu0 27
  %1082 = vperm.xlu0 %1081, %v431
  %v1083 = vpop.permute.xlu0 %1082
  %1085 = vset.pattern.permute.xlu0 27
  %1086 = vperm.xlu0 %1085, %v434
  %v1087 = vpop.permute.xlu0 %1086
  %v1089 = vperm.slane %v456, 7
  %v1090 = vadd.f32 %v1083, %v1089
  %v1091 = vadd.f32 %v1087, %v1089
  %vm1092 = vcmp.gt.f32.partialorder %v1090, 0.0
  %vm1093 = vcmp.gt.f32.partialorder %v1091, 0.0
  %v1094 = vmul.f32 %v1090, 0.2
  %v1095 = vmul.f32 %v1091, 0.2
  %v1096 = vsel %vm1092, %v1090, %v1094
  %v1097 = vsel %vm1093, %v1091, %v1095
  %v1098 = vsel %vm580, %v1096, -1e+30
  %v1099 = vsel %vm581, %v1097, -1e+30
  %v1100 = vsel %vm153, %v1098, -inf
  %1101 = vmax.xlane.f32.xlu0 %v1100
  %v1102 = vpop.xlane.xlu0 %1101
  %v1103 = vsel %vm153, %v1099, -inf
  %1104 = vmax.xlane.f32.xlu0 %v1103
  %v1105 = vpop.xlane.xlu0 %1104
  %v1106 = vsub.f32 %v1098, %v1102
  %v1107 = vsub.f32 %v1099, %v1105
  %v1108 = vmul.f32 %v1106, 1.442695
  %v1109 = vpow.pop %v1108
  %v1110 = vmul.f32 %v1107, 1.442695
  %v1111 = vpow.pop %v1110
  %v1112 = vsel %vm580, %v1109, 0.0
  %v1113 = vsel %vm581, %v1111, 0.0
  %v1114 = vsel %vm153, %v1112, 0.0
  %1115 = vadd.xlane.f32.xlu0 %v1114
  %v1116 = vpop.xlane.xlu0 %1115
  %v1117 = vsel %vm153, %v1113, 0.0
  %1118 = vadd.xlane.f32.xlu0 %v1117
  %v1119 = vpop.xlane.xlu0 %1118
  %v1120 = vmax.f32 %v1116, 1e-20
  %v1121 = vmax.f32 %v1119, 1e-20
  %v1122 = vrcp.pop %v1120
  %v1123 = vrcp.pop %v1121
  %v1124 = vmul.f32 %v1112, %v1122
  %v1125 = vmul.f32 %v1113, %v1123
  %1126 = vrot.lane.b32.xlu0 %v224, 92
  %v1127 = vpop.permute.xlu0 %1126
  %1128 = vrot.lane.b32.xlu0 %v227, 92
  %v1129 = vpop.permute.xlu0 %1128
  %v1133 = vsel %vm153, %v1124, 0
  %v1136 = vsel %vm153, %v1125, 0
  %1138 = vmatpush.msra.mxu0 0.0
  %1139 = vmatpush.msra.mxu0 0.0
  %1140 = vmatpush.msra.mxu0 0.0
  %1141 = vmatpush.msra.mxu0 0.0
  %1142 = vmatpush.msra.mxu0 0.0
  %1143 = vmatpush.msra.mxu0 0.0
  %1144 = vmatpush.msra.mxu0 0.0
  %1145 = vmatpush.msra.mxu0 0.0
  %1146 = vmatpush.msra.mxu0 0.0
  %1147 = vmatpush.msra.mxu0 0.0
  %1148 = vmatpush.msra.mxu0 0.0
  %1149 = vmatpush.msra.mxu0 0.0
  %1150 = vmatpush.msra.mxu0 0.0
  %1151 = vmatpush.msra.mxu0 0.0
  %1152 = vmatpush.msra.mxu0 %v1129
  %1153 = vmatpush.msra.mxu0 %v1127
  %1154 = vmatmul.f32.gmra.mxu0 %v1133
  %v1155 = vpop.f32.mrf.mxu0
  %v1156 = vadd.f32 0.0, %v1155
  %1157 = vmatmul.f32.gmra.mxu0 %v1136
  %v1158 = vpop.f32.mrf.mxu0
  %v1159 = vadd.f32 0.0, %v1158
  %1160 = vdwg.mxu0
  %v1161 = vmul.f32 %v1156, 0.5
  %v1162 = vmul.f32 %v1159, 0.5
  %v1163 = vmul.f32 %v1076, 0.5
  %v1164 = vmul.f32 %v1079, 0.5
  %v1165 = vadd.f32 %v1161, %v1163
  %v1166 = vadd.f32 %v1162, %v1164
  %1167 = vrot.lane.b32.xlu0 %v473, 92
  %v1168 = vpop.permute.xlu0 %1167
  %1169 = vrot.lane.b32.xlu0 %v475, 92
  %v1170 = vpop.permute.xlu0 %1169
  %v1173 = vadd.f32 %v1165, %v1168
  %v1174 = vadd.f32 %v1166, %v1170
  %1175 = vset.pattern.permute.xlu0 4
  %1176 = vperm.xlu0 %1175, %v431
  %v1177 = vpop.permute.xlu0 %1176
  %1179 = vset.pattern.permute.xlu0 4
  %1180 = vperm.xlu0 %1179, %v434
  %v1181 = vpop.permute.xlu0 %1180
  %v1183 = vperm.slane %v454, 0
  %v1184 = vadd.f32 %v1177, %v1183
  %v1185 = vadd.f32 %v1181, %v1183
  %vm1186 = vcmp.gt.f32.partialorder %v1184, 0.0
  %vm1187 = vcmp.gt.f32.partialorder %v1185, 0.0
  %v1188 = vmul.f32 %v1184, 0.2
  %v1189 = vmul.f32 %v1185, 0.2
  %v1190 = vsel %vm1186, %v1184, %v1188
  %v1191 = vsel %vm1187, %v1185, %v1189
  %v1192 = vsel %vm500, %v1190, -1e+30
  %v1193 = vsel %vm501, %v1191, -1e+30
  %v1194 = vsel %vm153, %v1192, -inf
  %1195 = vmax.xlane.f32.xlu0 %v1194
  %v1196 = vpop.xlane.xlu0 %1195
  %v1197 = vsel %vm153, %v1193, -inf
  %1198 = vmax.xlane.f32.xlu0 %v1197
  %v1199 = vpop.xlane.xlu0 %1198
  %v1200 = vsub.f32 %v1192, %v1196
  %v1201 = vsub.f32 %v1193, %v1199
  %v1202 = vmul.f32 %v1200, 1.442695
  %v1203 = vpow.pop %v1202
  %v1204 = vmul.f32 %v1201, 1.442695
  %v1205 = vpow.pop %v1204
  %v1206 = vsel %vm500, %v1203, 0.0
  %v1207 = vsel %vm501, %v1205, 0.0
  %v1208 = vsel %vm153, %v1206, 0.0
  %1209 = vadd.xlane.f32.xlu0 %v1208
  %v1210 = vpop.xlane.xlu0 %1209
  %v1211 = vsel %vm153, %v1207, 0.0
  %1212 = vadd.xlane.f32.xlu0 %v1211
  %v1213 = vpop.xlane.xlu0 %1212
  %v1214 = vmax.f32 %v1210, 1e-20
  %v1215 = vmax.f32 %v1213, 1e-20
  %v1216 = vrcp.pop %v1214
  %v1217 = vrcp.pop %v1215
  %v1218 = vmul.f32 %v1206, %v1216
  %v1219 = vmul.f32 %v1207, %v1217
  %1220 = vrot.lane.b32.xlu0 %v178, 80
  %v1221 = vpop.permute.xlu0 %1220
  %1222 = vrot.lane.b32.xlu0 %v181, 80
  %v1223 = vpop.permute.xlu0 %1222
  %v1227 = vsel %vm153, %v1218, 0
  %v1230 = vsel %vm153, %v1219, 0
  %1232 = vmatpush.msra.mxu0 0.0
  %1233 = vmatpush.msra.mxu0 0.0
  %1234 = vmatpush.msra.mxu0 0.0
  %1235 = vmatpush.msra.mxu0 0.0
  %1236 = vmatpush.msra.mxu0 0.0
  %1237 = vmatpush.msra.mxu0 0.0
  %1238 = vmatpush.msra.mxu0 0.0
  %1239 = vmatpush.msra.mxu0 0.0
  %1240 = vmatpush.msra.mxu0 0.0
  %1241 = vmatpush.msra.mxu0 0.0
  %1242 = vmatpush.msra.mxu0 0.0
  %1243 = vmatpush.msra.mxu0 0.0
  %1244 = vmatpush.msra.mxu0 0.0
  %1245 = vmatpush.msra.mxu0 0.0
  %1246 = vmatpush.msra.mxu0 %v1223
  %1247 = vmatpush.msra.mxu0 %v1221
  %1248 = vmatmul.f32.gmra.mxu0 %v1227
  %v1249 = vpop.f32.mrf.mxu0
  %v1250 = vadd.f32 0.0, %v1249
  %1251 = vmatmul.f32.gmra.mxu0 %v1230
  %v1252 = vpop.f32.mrf.mxu0
  %v1253 = vadd.f32 0.0, %v1252
  %1254 = vdwg.mxu0
  %1255 = vset.pattern.permute.xlu0 28
  %1256 = vperm.xlu0 %1255, %v431
  %v1257 = vpop.permute.xlu0 %1256
  %1259 = vset.pattern.permute.xlu0 28
  %1260 = vperm.xlu0 %1259, %v434
  %v1261 = vpop.permute.xlu0 %1260
  %v1263 = vperm.slane %v457, 0
  %v1264 = vadd.f32 %v1257, %v1263
  %v1265 = vadd.f32 %v1261, %v1263
  %vm1266 = vcmp.gt.f32.partialorder %v1264, 0.0
  %vm1267 = vcmp.gt.f32.partialorder %v1265, 0.0
  %v1268 = vmul.f32 %v1264, 0.2
  %v1269 = vmul.f32 %v1265, 0.2
  %v1270 = vsel %vm1266, %v1264, %v1268
  %v1271 = vsel %vm1267, %v1265, %v1269
  %v1272 = vsel %vm580, %v1270, -1e+30
  %v1273 = vsel %vm581, %v1271, -1e+30
  %v1274 = vsel %vm153, %v1272, -inf
  %1275 = vmax.xlane.f32.xlu0 %v1274
  %v1276 = vpop.xlane.xlu0 %1275
  %v1277 = vsel %vm153, %v1273, -inf
  %1278 = vmax.xlane.f32.xlu0 %v1277
  %v1279 = vpop.xlane.xlu0 %1278
  %v1280 = vsub.f32 %v1272, %v1276
  %v1281 = vsub.f32 %v1273, %v1279
  %v1282 = vmul.f32 %v1280, 1.442695
  %v1283 = vpow.pop %v1282
  %v1284 = vmul.f32 %v1281, 1.442695
  %v1285 = vpow.pop %v1284
  %v1286 = vsel %vm580, %v1283, 0.0
  %v1287 = vsel %vm581, %v1285, 0.0
  %v1288 = vsel %vm153, %v1286, 0.0
  %1289 = vadd.xlane.f32.xlu0 %v1288
  %v1290 = vpop.xlane.xlu0 %1289
  %v1291 = vsel %vm153, %v1287, 0.0
  %1292 = vadd.xlane.f32.xlu0 %v1291
  %v1293 = vpop.xlane.xlu0 %1292
  %v1294 = vmax.f32 %v1290, 1e-20
  %v1295 = vmax.f32 %v1293, 1e-20
  %v1296 = vrcp.pop %v1294
  %v1297 = vrcp.pop %v1295
  %v1298 = vmul.f32 %v1286, %v1296
  %v1299 = vmul.f32 %v1287, %v1297
  %1300 = vrot.lane.b32.xlu0 %v224, 80
  %v1301 = vpop.permute.xlu0 %1300
  %1302 = vrot.lane.b32.xlu0 %v227, 80
  %v1303 = vpop.permute.xlu0 %1302
  %v1307 = vsel %vm153, %v1298, 0
  %v1310 = vsel %vm153, %v1299, 0
  %1312 = vmatpush.msra.mxu0 0.0
  %1313 = vmatpush.msra.mxu0 0.0
  %1314 = vmatpush.msra.mxu0 0.0
  %1315 = vmatpush.msra.mxu0 0.0
  %1316 = vmatpush.msra.mxu0 0.0
  %1317 = vmatpush.msra.mxu0 0.0
  %1318 = vmatpush.msra.mxu0 0.0
  %1319 = vmatpush.msra.mxu0 0.0
  %1320 = vmatpush.msra.mxu0 0.0
  %1321 = vmatpush.msra.mxu0 0.0
  %1322 = vmatpush.msra.mxu0 0.0
  %1323 = vmatpush.msra.mxu0 0.0
  %1324 = vmatpush.msra.mxu0 0.0
  %1325 = vmatpush.msra.mxu0 0.0
  %1326 = vmatpush.msra.mxu0 %v1303
  %1327 = vmatpush.msra.mxu0 %v1301
  %1328 = vmatmul.f32.gmra.mxu0 %v1307
  %v1329 = vpop.f32.mrf.mxu0
  %v1330 = vadd.f32 0.0, %v1329
  %1331 = vmatmul.f32.gmra.mxu0 %v1310
  %v1332 = vpop.f32.mrf.mxu0
  %v1333 = vadd.f32 0.0, %v1332
  %1334 = vdwg.mxu0
  %v1335 = vmul.f32 %v1330, 0.5
  %v1336 = vmul.f32 %v1333, 0.5
  %v1337 = vmul.f32 %v1250, 0.5
  %v1338 = vmul.f32 %v1253, 0.5
  %v1339 = vadd.f32 %v1335, %v1337
  %v1340 = vadd.f32 %v1336, %v1338
  %1341 = vrot.lane.b32.xlu0 %v473, 80
  %v1342 = vpop.permute.xlu0 %1341
  %1343 = vrot.lane.b32.xlu0 %v475, 80
  %v1344 = vpop.permute.xlu0 %1343
  %v1347 = vadd.f32 %v1339, %v1342
  %v1348 = vadd.f32 %v1340, %v1344
  %1349 = vset.pattern.permute.xlu0 5
  %1350 = vperm.xlu0 %1349, %v431
  %v1351 = vpop.permute.xlu0 %1350
  %1353 = vset.pattern.permute.xlu0 5
  %1354 = vperm.xlu0 %1353, %v434
  %v1355 = vpop.permute.xlu0 %1354
  %v1357 = vperm.slane %v454, 1
  %v1358 = vadd.f32 %v1351, %v1357
  %v1359 = vadd.f32 %v1355, %v1357
  %vm1360 = vcmp.gt.f32.partialorder %v1358, 0.0
  %vm1361 = vcmp.gt.f32.partialorder %v1359, 0.0
  %v1362 = vmul.f32 %v1358, 0.2
  %v1363 = vmul.f32 %v1359, 0.2
  %v1364 = vsel %vm1360, %v1358, %v1362
  %v1365 = vsel %vm1361, %v1359, %v1363
  %v1366 = vsel %vm500, %v1364, -1e+30
  %v1367 = vsel %vm501, %v1365, -1e+30
  %v1368 = vsel %vm153, %v1366, -inf
  %1369 = vmax.xlane.f32.xlu0 %v1368
  %v1370 = vpop.xlane.xlu0 %1369
  %v1371 = vsel %vm153, %v1367, -inf
  %1372 = vmax.xlane.f32.xlu0 %v1371
  %v1373 = vpop.xlane.xlu0 %1372
  %v1374 = vsub.f32 %v1366, %v1370
  %v1375 = vsub.f32 %v1367, %v1373
  %v1376 = vmul.f32 %v1374, 1.442695
  %v1377 = vpow.pop %v1376
  %v1378 = vmul.f32 %v1375, 1.442695
  %v1379 = vpow.pop %v1378
  %v1380 = vsel %vm500, %v1377, 0.0
  %v1381 = vsel %vm501, %v1379, 0.0
  %v1382 = vsel %vm153, %v1380, 0.0
  %1383 = vadd.xlane.f32.xlu0 %v1382
  %v1384 = vpop.xlane.xlu0 %1383
  %v1385 = vsel %vm153, %v1381, 0.0
  %1386 = vadd.xlane.f32.xlu0 %v1385
  %v1387 = vpop.xlane.xlu0 %1386
  %v1388 = vmax.f32 %v1384, 1e-20
  %v1389 = vmax.f32 %v1387, 1e-20
  %v1390 = vrcp.pop %v1388
  %v1391 = vrcp.pop %v1389
  %v1392 = vmul.f32 %v1380, %v1390
  %v1393 = vmul.f32 %v1381, %v1391
  %1394 = vrot.lane.b32.xlu0 %v178, 68
  %v1395 = vpop.permute.xlu0 %1394
  %1396 = vrot.lane.b32.xlu0 %v181, 68
  %v1397 = vpop.permute.xlu0 %1396
  %v1401 = vsel %vm153, %v1392, 0
  %v1404 = vsel %vm153, %v1393, 0
  %1406 = vmatpush.msra.mxu0 0.0
  %1407 = vmatpush.msra.mxu0 0.0
  %1408 = vmatpush.msra.mxu0 0.0
  %1409 = vmatpush.msra.mxu0 0.0
  %1410 = vmatpush.msra.mxu0 0.0
  %1411 = vmatpush.msra.mxu0 0.0
  %1412 = vmatpush.msra.mxu0 0.0
  %1413 = vmatpush.msra.mxu0 0.0
  %1414 = vmatpush.msra.mxu0 0.0
  %1415 = vmatpush.msra.mxu0 0.0
  %1416 = vmatpush.msra.mxu0 0.0
  %1417 = vmatpush.msra.mxu0 0.0
  %1418 = vmatpush.msra.mxu0 0.0
  %1419 = vmatpush.msra.mxu0 0.0
  %1420 = vmatpush.msra.mxu0 %v1397
  %1421 = vmatpush.msra.mxu0 %v1395
  %1422 = vmatmul.f32.gmra.mxu0 %v1401
  %v1423 = vpop.f32.mrf.mxu0
  %v1424 = vadd.f32 0.0, %v1423
  %1425 = vmatmul.f32.gmra.mxu0 %v1404
  %v1426 = vpop.f32.mrf.mxu0
  %v1427 = vadd.f32 0.0, %v1426
  %1428 = vdwg.mxu0
  %1429 = vset.pattern.permute.xlu0 29
  %1430 = vperm.xlu0 %1429, %v431
  %v1431 = vpop.permute.xlu0 %1430
  %1433 = vset.pattern.permute.xlu0 29
  %1434 = vperm.xlu0 %1433, %v434
  %v1435 = vpop.permute.xlu0 %1434
  %v1437 = vperm.slane %v457, 1
  %v1438 = vadd.f32 %v1431, %v1437
  %v1439 = vadd.f32 %v1435, %v1437
  %vm1440 = vcmp.gt.f32.partialorder %v1438, 0.0
  %vm1441 = vcmp.gt.f32.partialorder %v1439, 0.0
  %v1442 = vmul.f32 %v1438, 0.2
  %v1443 = vmul.f32 %v1439, 0.2
  %v1444 = vsel %vm1440, %v1438, %v1442
  %v1445 = vsel %vm1441, %v1439, %v1443
  %v1446 = vsel %vm580, %v1444, -1e+30
  %v1447 = vsel %vm581, %v1445, -1e+30
  %v1448 = vsel %vm153, %v1446, -inf
  %1449 = vmax.xlane.f32.xlu0 %v1448
  %v1450 = vpop.xlane.xlu0 %1449
  %v1451 = vsel %vm153, %v1447, -inf
  %1452 = vmax.xlane.f32.xlu0 %v1451
  %v1453 = vpop.xlane.xlu0 %1452
  %v1454 = vsub.f32 %v1446, %v1450
  %v1455 = vsub.f32 %v1447, %v1453
  %v1456 = vmul.f32 %v1454, 1.442695
  %v1457 = vpow.pop %v1456
  %v1458 = vmul.f32 %v1455, 1.442695
  %v1459 = vpow.pop %v1458
  %v1460 = vsel %vm580, %v1457, 0.0
  %v1461 = vsel %vm581, %v1459, 0.0
  %v1462 = vsel %vm153, %v1460, 0.0
  %1463 = vadd.xlane.f32.xlu0 %v1462
  %v1464 = vpop.xlane.xlu0 %1463
  %v1465 = vsel %vm153, %v1461, 0.0
  %1466 = vadd.xlane.f32.xlu0 %v1465
  %v1467 = vpop.xlane.xlu0 %1466
  %v1468 = vmax.f32 %v1464, 1e-20
  %v1469 = vmax.f32 %v1467, 1e-20
  %v1470 = vrcp.pop %v1468
  %v1471 = vrcp.pop %v1469
  %v1472 = vmul.f32 %v1460, %v1470
  %v1473 = vmul.f32 %v1461, %v1471
  %1474 = vrot.lane.b32.xlu0 %v224, 68
  %v1475 = vpop.permute.xlu0 %1474
  %1476 = vrot.lane.b32.xlu0 %v227, 68
  %v1477 = vpop.permute.xlu0 %1476
  %v1481 = vsel %vm153, %v1472, 0
  %v1484 = vsel %vm153, %v1473, 0
  %1486 = vmatpush.msra.mxu0 0.0
  %1487 = vmatpush.msra.mxu0 0.0
  %1488 = vmatpush.msra.mxu0 0.0
  %1489 = vmatpush.msra.mxu0 0.0
  %1490 = vmatpush.msra.mxu0 0.0
  %1491 = vmatpush.msra.mxu0 0.0
  %1492 = vmatpush.msra.mxu0 0.0
  %1493 = vmatpush.msra.mxu0 0.0
  %1494 = vmatpush.msra.mxu0 0.0
  %1495 = vmatpush.msra.mxu0 0.0
  %1496 = vmatpush.msra.mxu0 0.0
  %1497 = vmatpush.msra.mxu0 0.0
  %1498 = vmatpush.msra.mxu0 0.0
  %1499 = vmatpush.msra.mxu0 0.0
  %1500 = vmatpush.msra.mxu0 %v1477
  %1501 = vmatpush.msra.mxu0 %v1475
  %1502 = vmatmul.f32.gmra.mxu0 %v1481
  %v1503 = vpop.f32.mrf.mxu0
  %v1504 = vadd.f32 0.0, %v1503
  %1505 = vmatmul.f32.gmra.mxu0 %v1484
  %v1506 = vpop.f32.mrf.mxu0
  %v1507 = vadd.f32 0.0, %v1506
  %1508 = vdwg.mxu0
  %v1509 = vmul.f32 %v1504, 0.5
  %v1510 = vmul.f32 %v1507, 0.5
  %v1511 = vmul.f32 %v1424, 0.5
  %v1512 = vmul.f32 %v1427, 0.5
  %v1513 = vadd.f32 %v1509, %v1511
  %v1514 = vadd.f32 %v1510, %v1512
  %1515 = vrot.lane.b32.xlu0 %v473, 68
  %v1516 = vpop.permute.xlu0 %1515
  %1517 = vrot.lane.b32.xlu0 %v475, 68
  %v1518 = vpop.permute.xlu0 %1517
  %v1521 = vadd.f32 %v1513, %v1516
  %v1522 = vadd.f32 %v1514, %v1518
  %1523 = vset.pattern.permute.xlu0 6
  %1524 = vperm.xlu0 %1523, %v431
  %v1525 = vpop.permute.xlu0 %1524
  %1527 = vset.pattern.permute.xlu0 6
  %1528 = vperm.xlu0 %1527, %v434
  %v1529 = vpop.permute.xlu0 %1528
  %v1531 = vperm.slane %v454, 2
  %v1532 = vadd.f32 %v1525, %v1531
  %v1533 = vadd.f32 %v1529, %v1531
  %vm1534 = vcmp.gt.f32.partialorder %v1532, 0.0
  %vm1535 = vcmp.gt.f32.partialorder %v1533, 0.0
  %v1536 = vmul.f32 %v1532, 0.2
  %v1537 = vmul.f32 %v1533, 0.2
  %v1538 = vsel %vm1534, %v1532, %v1536
  %v1539 = vsel %vm1535, %v1533, %v1537
  %v1540 = vsel %vm500, %v1538, -1e+30
  %v1541 = vsel %vm501, %v1539, -1e+30
  %v1542 = vsel %vm153, %v1540, -inf
  %1543 = vmax.xlane.f32.xlu0 %v1542
  %v1544 = vpop.xlane.xlu0 %1543
  %v1545 = vsel %vm153, %v1541, -inf
  %1546 = vmax.xlane.f32.xlu0 %v1545
  %v1547 = vpop.xlane.xlu0 %1546
  %v1548 = vsub.f32 %v1540, %v1544
  %v1549 = vsub.f32 %v1541, %v1547
  %v1550 = vmul.f32 %v1548, 1.442695
  %v1551 = vpow.pop %v1550
  %v1552 = vmul.f32 %v1549, 1.442695
  %v1553 = vpow.pop %v1552
  %v1554 = vsel %vm500, %v1551, 0.0
  %v1555 = vsel %vm501, %v1553, 0.0
  %v1556 = vsel %vm153, %v1554, 0.0
  %1557 = vadd.xlane.f32.xlu0 %v1556
  %v1558 = vpop.xlane.xlu0 %1557
  %v1559 = vsel %vm153, %v1555, 0.0
  %1560 = vadd.xlane.f32.xlu0 %v1559
  %v1561 = vpop.xlane.xlu0 %1560
  %v1562 = vmax.f32 %v1558, 1e-20
  %v1563 = vmax.f32 %v1561, 1e-20
  %v1564 = vrcp.pop %v1562
  %v1565 = vrcp.pop %v1563
  %v1566 = vmul.f32 %v1554, %v1564
  %v1567 = vmul.f32 %v1555, %v1565
  %1568 = vrot.lane.b32.xlu0 %v178, 56
  %v1569 = vpop.permute.xlu0 %1568
  %1570 = vrot.lane.b32.xlu0 %v181, 56
  %v1571 = vpop.permute.xlu0 %1570
  %v1575 = vsel %vm153, %v1566, 0
  %v1578 = vsel %vm153, %v1567, 0
  %1580 = vmatpush.msra.mxu0 0.0
  %1581 = vmatpush.msra.mxu0 0.0
  %1582 = vmatpush.msra.mxu0 0.0
  %1583 = vmatpush.msra.mxu0 0.0
  %1584 = vmatpush.msra.mxu0 0.0
  %1585 = vmatpush.msra.mxu0 0.0
  %1586 = vmatpush.msra.mxu0 0.0
  %1587 = vmatpush.msra.mxu0 0.0
  %1588 = vmatpush.msra.mxu0 0.0
  %1589 = vmatpush.msra.mxu0 0.0
  %1590 = vmatpush.msra.mxu0 0.0
  %1591 = vmatpush.msra.mxu0 0.0
  %1592 = vmatpush.msra.mxu0 0.0
  %1593 = vmatpush.msra.mxu0 0.0
  %1594 = vmatpush.msra.mxu0 %v1571
  %1595 = vmatpush.msra.mxu0 %v1569
  %1596 = vmatmul.f32.gmra.mxu0 %v1575
  %v1597 = vpop.f32.mrf.mxu0
  %v1598 = vadd.f32 0.0, %v1597
  %1599 = vmatmul.f32.gmra.mxu0 %v1578
  %v1600 = vpop.f32.mrf.mxu0
  %v1601 = vadd.f32 0.0, %v1600
  %1602 = vdwg.mxu0
  %1603 = vset.pattern.permute.xlu0 30
  %1604 = vperm.xlu0 %1603, %v431
  %v1605 = vpop.permute.xlu0 %1604
  %1607 = vset.pattern.permute.xlu0 30
  %1608 = vperm.xlu0 %1607, %v434
  %v1609 = vpop.permute.xlu0 %1608
  %v1611 = vperm.slane %v457, 2
  %v1612 = vadd.f32 %v1605, %v1611
  %v1613 = vadd.f32 %v1609, %v1611
  %vm1614 = vcmp.gt.f32.partialorder %v1612, 0.0
  %vm1615 = vcmp.gt.f32.partialorder %v1613, 0.0
  %v1616 = vmul.f32 %v1612, 0.2
  %v1617 = vmul.f32 %v1613, 0.2
  %v1618 = vsel %vm1614, %v1612, %v1616
  %v1619 = vsel %vm1615, %v1613, %v1617
  %v1620 = vsel %vm580, %v1618, -1e+30
  %v1621 = vsel %vm581, %v1619, -1e+30
  %v1622 = vsel %vm153, %v1620, -inf
  %1623 = vmax.xlane.f32.xlu0 %v1622
  %v1624 = vpop.xlane.xlu0 %1623
  %v1625 = vsel %vm153, %v1621, -inf
  %1626 = vmax.xlane.f32.xlu0 %v1625
  %v1627 = vpop.xlane.xlu0 %1626
  %v1628 = vsub.f32 %v1620, %v1624
  %v1629 = vsub.f32 %v1621, %v1627
  %v1630 = vmul.f32 %v1628, 1.442695
  %v1631 = vpow.pop %v1630
  %v1632 = vmul.f32 %v1629, 1.442695
  %v1633 = vpow.pop %v1632
  %v1634 = vsel %vm580, %v1631, 0.0
  %v1635 = vsel %vm581, %v1633, 0.0
  %v1636 = vsel %vm153, %v1634, 0.0
  %1637 = vadd.xlane.f32.xlu0 %v1636
  %v1638 = vpop.xlane.xlu0 %1637
  %v1639 = vsel %vm153, %v1635, 0.0
  %1640 = vadd.xlane.f32.xlu0 %v1639
  %v1641 = vpop.xlane.xlu0 %1640
  %v1642 = vmax.f32 %v1638, 1e-20
  %v1643 = vmax.f32 %v1641, 1e-20
  %v1644 = vrcp.pop %v1642
  %v1645 = vrcp.pop %v1643
  %v1646 = vmul.f32 %v1634, %v1644
  %v1647 = vmul.f32 %v1635, %v1645
  %1648 = vrot.lane.b32.xlu0 %v224, 56
  %v1649 = vpop.permute.xlu0 %1648
  %1650 = vrot.lane.b32.xlu0 %v227, 56
  %v1651 = vpop.permute.xlu0 %1650
  %v1655 = vsel %vm153, %v1646, 0
  %v1658 = vsel %vm153, %v1647, 0
  %1660 = vmatpush.msra.mxu0 0.0
  %1661 = vmatpush.msra.mxu0 0.0
  %1662 = vmatpush.msra.mxu0 0.0
  %1663 = vmatpush.msra.mxu0 0.0
  %1664 = vmatpush.msra.mxu0 0.0
  %1665 = vmatpush.msra.mxu0 0.0
  %1666 = vmatpush.msra.mxu0 0.0
  %1667 = vmatpush.msra.mxu0 0.0
  %1668 = vmatpush.msra.mxu0 0.0
  %1669 = vmatpush.msra.mxu0 0.0
  %1670 = vmatpush.msra.mxu0 0.0
  %1671 = vmatpush.msra.mxu0 0.0
  %1672 = vmatpush.msra.mxu0 0.0
  %1673 = vmatpush.msra.mxu0 0.0
  %1674 = vmatpush.msra.mxu0 %v1651
  %1675 = vmatpush.msra.mxu0 %v1649
  %1676 = vmatmul.f32.gmra.mxu0 %v1655
  %v1677 = vpop.f32.mrf.mxu0
  %v1678 = vadd.f32 0.0, %v1677
  %1679 = vmatmul.f32.gmra.mxu0 %v1658
  %v1680 = vpop.f32.mrf.mxu0
  %v1681 = vadd.f32 0.0, %v1680
  %1682 = vdwg.mxu0
  %v1683 = vmul.f32 %v1678, 0.5
  %v1684 = vmul.f32 %v1681, 0.5
  %v1685 = vmul.f32 %v1598, 0.5
  %v1686 = vmul.f32 %v1601, 0.5
  %v1687 = vadd.f32 %v1683, %v1685
  %v1688 = vadd.f32 %v1684, %v1686
  %1689 = vrot.lane.b32.xlu0 %v473, 56
  %v1690 = vpop.permute.xlu0 %1689
  %1691 = vrot.lane.b32.xlu0 %v475, 56
  %v1692 = vpop.permute.xlu0 %1691
  %v1695 = vadd.f32 %v1687, %v1690
  %v1696 = vadd.f32 %v1688, %v1692
  %1697 = vset.pattern.permute.xlu0 7
  %1698 = vperm.xlu0 %1697, %v431
  %v1699 = vpop.permute.xlu0 %1698
  %1701 = vset.pattern.permute.xlu0 7
  %1702 = vperm.xlu0 %1701, %v434
  %v1703 = vpop.permute.xlu0 %1702
  %v1705 = vperm.slane %v454, 3
  %v1706 = vadd.f32 %v1699, %v1705
  %v1707 = vadd.f32 %v1703, %v1705
  %vm1708 = vcmp.gt.f32.partialorder %v1706, 0.0
  %vm1709 = vcmp.gt.f32.partialorder %v1707, 0.0
  %v1710 = vmul.f32 %v1706, 0.2
  %v1711 = vmul.f32 %v1707, 0.2
  %v1712 = vsel %vm1708, %v1706, %v1710
  %v1713 = vsel %vm1709, %v1707, %v1711
  %v1714 = vsel %vm500, %v1712, -1e+30
  %v1715 = vsel %vm501, %v1713, -1e+30
  %v1716 = vsel %vm153, %v1714, -inf
  %1717 = vmax.xlane.f32.xlu0 %v1716
  %v1718 = vpop.xlane.xlu0 %1717
  %v1719 = vsel %vm153, %v1715, -inf
  %1720 = vmax.xlane.f32.xlu0 %v1719
  %v1721 = vpop.xlane.xlu0 %1720
  %v1722 = vsub.f32 %v1714, %v1718
  %v1723 = vsub.f32 %v1715, %v1721
  %v1724 = vmul.f32 %v1722, 1.442695
  %v1725 = vpow.pop %v1724
  %v1726 = vmul.f32 %v1723, 1.442695
  %v1727 = vpow.pop %v1726
  %v1728 = vsel %vm500, %v1725, 0.0
  %v1729 = vsel %vm501, %v1727, 0.0
  %v1730 = vsel %vm153, %v1728, 0.0
  %1731 = vadd.xlane.f32.xlu0 %v1730
  %v1732 = vpop.xlane.xlu0 %1731
  %v1733 = vsel %vm153, %v1729, 0.0
  %1734 = vadd.xlane.f32.xlu0 %v1733
  %v1735 = vpop.xlane.xlu0 %1734
  %v1736 = vmax.f32 %v1732, 1e-20
  %v1737 = vmax.f32 %v1735, 1e-20
  %v1738 = vrcp.pop %v1736
  %v1739 = vrcp.pop %v1737
  %v1740 = vmul.f32 %v1728, %v1738
  %v1741 = vmul.f32 %v1729, %v1739
  %1742 = vrot.lane.b32.xlu0 %v178, 44
  %v1743 = vpop.permute.xlu0 %1742
  %1744 = vrot.lane.b32.xlu0 %v181, 44
  %v1745 = vpop.permute.xlu0 %1744
  %v1749 = vsel %vm153, %v1740, 0
  %v1752 = vsel %vm153, %v1741, 0
  %1754 = vmatpush.msra.mxu0 0.0
  %1755 = vmatpush.msra.mxu0 0.0
  %1756 = vmatpush.msra.mxu0 0.0
  %1757 = vmatpush.msra.mxu0 0.0
  %1758 = vmatpush.msra.mxu0 0.0
  %1759 = vmatpush.msra.mxu0 0.0
  %1760 = vmatpush.msra.mxu0 0.0
  %1761 = vmatpush.msra.mxu0 0.0
  %1762 = vmatpush.msra.mxu0 0.0
  %1763 = vmatpush.msra.mxu0 0.0
  %1764 = vmatpush.msra.mxu0 0.0
  %1765 = vmatpush.msra.mxu0 0.0
  %1766 = vmatpush.msra.mxu0 0.0
  %1767 = vmatpush.msra.mxu0 0.0
  %1768 = vmatpush.msra.mxu0 %v1745
  %1769 = vmatpush.msra.mxu0 %v1743
  %1770 = vmatmul.f32.gmra.mxu0 %v1749
  %v1771 = vpop.f32.mrf.mxu0
  %v1772 = vadd.f32 0.0, %v1771
  %1773 = vmatmul.f32.gmra.mxu0 %v1752
  %v1774 = vpop.f32.mrf.mxu0
  %v1775 = vadd.f32 0.0, %v1774
  %1776 = vdwg.mxu0
  %1777 = vset.pattern.permute.xlu0 31
  %1778 = vperm.xlu0 %1777, %v431
  %v1779 = vpop.permute.xlu0 %1778
  %1781 = vset.pattern.permute.xlu0 31
  %1782 = vperm.xlu0 %1781, %v434
  %v1783 = vpop.permute.xlu0 %1782
  %v1785 = vperm.slane %v457, 3
  %v1786 = vadd.f32 %v1779, %v1785
  %v1787 = vadd.f32 %v1783, %v1785
  %vm1788 = vcmp.gt.f32.partialorder %v1786, 0.0
  %vm1789 = vcmp.gt.f32.partialorder %v1787, 0.0
  %v1790 = vmul.f32 %v1786, 0.2
  %v1791 = vmul.f32 %v1787, 0.2
  %v1792 = vsel %vm1788, %v1786, %v1790
  %v1793 = vsel %vm1789, %v1787, %v1791
  %v1794 = vsel %vm580, %v1792, -1e+30
  %v1795 = vsel %vm581, %v1793, -1e+30
  %v1796 = vsel %vm153, %v1794, -inf
  %1797 = vmax.xlane.f32.xlu0 %v1796
  %v1798 = vpop.xlane.xlu0 %1797
  %v1799 = vsel %vm153, %v1795, -inf
  %1800 = vmax.xlane.f32.xlu0 %v1799
  %v1801 = vpop.xlane.xlu0 %1800
  %v1802 = vsub.f32 %v1794, %v1798
  %v1803 = vsub.f32 %v1795, %v1801
  %v1804 = vmul.f32 %v1802, 1.442695
  %v1805 = vpow.pop %v1804
  %v1806 = vmul.f32 %v1803, 1.442695
  %v1807 = vpow.pop %v1806
  %v1808 = vsel %vm580, %v1805, 0.0
  %v1809 = vsel %vm581, %v1807, 0.0
  %v1810 = vsel %vm153, %v1808, 0.0
  %1811 = vadd.xlane.f32.xlu0 %v1810
  %v1812 = vpop.xlane.xlu0 %1811
  %v1813 = vsel %vm153, %v1809, 0.0
  %1814 = vadd.xlane.f32.xlu0 %v1813
  %v1815 = vpop.xlane.xlu0 %1814
  %v1816 = vmax.f32 %v1812, 1e-20
  %v1817 = vmax.f32 %v1815, 1e-20
  %v1818 = vrcp.pop %v1816
  %v1819 = vrcp.pop %v1817
  %v1820 = vmul.f32 %v1808, %v1818
  %v1821 = vmul.f32 %v1809, %v1819
  %1822 = vrot.lane.b32.xlu0 %v224, 44
  %v1823 = vpop.permute.xlu0 %1822
  %1824 = vrot.lane.b32.xlu0 %v227, 44
  %v1825 = vpop.permute.xlu0 %1824
  %v1829 = vsel %vm153, %v1820, 0
  %v1832 = vsel %vm153, %v1821, 0
  %1834 = vmatpush.msra.mxu0 0.0
  %1835 = vmatpush.msra.mxu0 0.0
  %1836 = vmatpush.msra.mxu0 0.0
  %1837 = vmatpush.msra.mxu0 0.0
  %1838 = vmatpush.msra.mxu0 0.0
  %1839 = vmatpush.msra.mxu0 0.0
  %1840 = vmatpush.msra.mxu0 0.0
  %1841 = vmatpush.msra.mxu0 0.0
  %1842 = vmatpush.msra.mxu0 0.0
  %1843 = vmatpush.msra.mxu0 0.0
  %1844 = vmatpush.msra.mxu0 0.0
  %1845 = vmatpush.msra.mxu0 0.0
  %1846 = vmatpush.msra.mxu0 0.0
  %1847 = vmatpush.msra.mxu0 0.0
  %1848 = vmatpush.msra.mxu0 %v1825
  %1849 = vmatpush.msra.mxu0 %v1823
  %1850 = vmatmul.f32.gmra.mxu0 %v1829
  %v1851 = vpop.f32.mrf.mxu0
  %v1852 = vadd.f32 0.0, %v1851
  %1853 = vmatmul.f32.gmra.mxu0 %v1832
  %v1854 = vpop.f32.mrf.mxu0
  %v1855 = vadd.f32 0.0, %v1854
  %1856 = vdwg.mxu0
  %v1857 = vmul.f32 %v1852, 0.5
  %v1858 = vmul.f32 %v1855, 0.5
  %v1859 = vmul.f32 %v1772, 0.5
  %v1860 = vmul.f32 %v1775, 0.5
  %v1861 = vadd.f32 %v1857, %v1859
  %v1862 = vadd.f32 %v1858, %v1860
  %1863 = vrot.lane.b32.xlu0 %v473, 44
  %v1864 = vpop.permute.xlu0 %1863
  %1865 = vrot.lane.b32.xlu0 %v475, 44
  %v1866 = vpop.permute.xlu0 %1865
  %v1869 = vadd.f32 %v1861, %v1864
  %v1870 = vadd.f32 %v1862, %v1866
  %1871 = vset.pattern.permute.xlu0 8
  %1872 = vperm.xlu0 %1871, %v431
  %v1873 = vpop.permute.xlu0 %1872
  %1875 = vset.pattern.permute.xlu0 8
  %1876 = vperm.xlu0 %1875, %v434
  %v1877 = vpop.permute.xlu0 %1876
  %v1879 = vperm.slane %v454, 4
  %v1880 = vadd.f32 %v1873, %v1879
  %v1881 = vadd.f32 %v1877, %v1879
  %vm1882 = vcmp.gt.f32.partialorder %v1880, 0.0
  %vm1883 = vcmp.gt.f32.partialorder %v1881, 0.0
  %v1884 = vmul.f32 %v1880, 0.2
  %v1885 = vmul.f32 %v1881, 0.2
  %v1886 = vsel %vm1882, %v1880, %v1884
  %v1887 = vsel %vm1883, %v1881, %v1885
  %v1888 = vsel %vm500, %v1886, -1e+30
  %v1889 = vsel %vm501, %v1887, -1e+30
  %v1890 = vsel %vm153, %v1888, -inf
  %1891 = vmax.xlane.f32.xlu0 %v1890
  %v1892 = vpop.xlane.xlu0 %1891
  %v1893 = vsel %vm153, %v1889, -inf
  %1894 = vmax.xlane.f32.xlu0 %v1893
  %v1895 = vpop.xlane.xlu0 %1894
  %v1896 = vsub.f32 %v1888, %v1892
  %v1897 = vsub.f32 %v1889, %v1895
  %v1898 = vmul.f32 %v1896, 1.442695
  %v1899 = vpow.pop %v1898
  %v1900 = vmul.f32 %v1897, 1.442695
  %v1901 = vpow.pop %v1900
  %v1902 = vsel %vm500, %v1899, 0.0
  %v1903 = vsel %vm501, %v1901, 0.0
  %v1904 = vsel %vm153, %v1902, 0.0
  %1905 = vadd.xlane.f32.xlu0 %v1904
  %v1906 = vpop.xlane.xlu0 %1905
  %v1907 = vsel %vm153, %v1903, 0.0
  %1908 = vadd.xlane.f32.xlu0 %v1907
  %v1909 = vpop.xlane.xlu0 %1908
  %v1910 = vmax.f32 %v1906, 1e-20
  %v1911 = vmax.f32 %v1909, 1e-20
  %v1912 = vrcp.pop %v1910
  %v1913 = vrcp.pop %v1911
  %v1914 = vmul.f32 %v1902, %v1912
  %v1915 = vmul.f32 %v1903, %v1913
  %1916 = vrot.lane.b32.xlu0 %v178, 32
  %v1917 = vpop.permute.xlu0 %1916
  %1918 = vrot.lane.b32.xlu0 %v181, 32
  %v1919 = vpop.permute.xlu0 %1918
  %v1923 = vsel %vm153, %v1914, 0
  %v1926 = vsel %vm153, %v1915, 0
  %1928 = vmatpush.msra.mxu0 0.0
  %1929 = vmatpush.msra.mxu0 0.0
  %1930 = vmatpush.msra.mxu0 0.0
  %1931 = vmatpush.msra.mxu0 0.0
  %1932 = vmatpush.msra.mxu0 0.0
  %1933 = vmatpush.msra.mxu0 0.0
  %1934 = vmatpush.msra.mxu0 0.0
  %1935 = vmatpush.msra.mxu0 0.0
  %1936 = vmatpush.msra.mxu0 0.0
  %1937 = vmatpush.msra.mxu0 0.0
  %1938 = vmatpush.msra.mxu0 0.0
  %1939 = vmatpush.msra.mxu0 0.0
  %1940 = vmatpush.msra.mxu0 0.0
  %1941 = vmatpush.msra.mxu0 0.0
  %1942 = vmatpush.msra.mxu0 %v1919
  %1943 = vmatpush.msra.mxu0 %v1917
  %1944 = vmatmul.f32.gmra.mxu0 %v1923
  %v1945 = vpop.f32.mrf.mxu0
  %v1946 = vadd.f32 0.0, %v1945
  %1947 = vmatmul.f32.gmra.mxu0 %v1926
  %v1948 = vpop.f32.mrf.mxu0
  %v1949 = vadd.f32 0.0, %v1948
  %1950 = vdwg.mxu0
  %1951 = vset.pattern.permute.xlu0 32
  %1952 = vperm.xlu0 %1951, %v431
  %v1953 = vpop.permute.xlu0 %1952
  %1955 = vset.pattern.permute.xlu0 32
  %1956 = vperm.xlu0 %1955, %v434
  %v1957 = vpop.permute.xlu0 %1956
  %v1959 = vperm.slane %v457, 4
  %v1960 = vadd.f32 %v1953, %v1959
  %v1961 = vadd.f32 %v1957, %v1959
  %vm1962 = vcmp.gt.f32.partialorder %v1960, 0.0
  %vm1963 = vcmp.gt.f32.partialorder %v1961, 0.0
  %v1964 = vmul.f32 %v1960, 0.2
  %v1965 = vmul.f32 %v1961, 0.2
  %v1966 = vsel %vm1962, %v1960, %v1964
  %v1967 = vsel %vm1963, %v1961, %v1965
  %v1968 = vsel %vm580, %v1966, -1e+30
  %v1969 = vsel %vm581, %v1967, -1e+30
  %v1970 = vsel %vm153, %v1968, -inf
  %1971 = vmax.xlane.f32.xlu0 %v1970
  %v1972 = vpop.xlane.xlu0 %1971
  %v1973 = vsel %vm153, %v1969, -inf
  %1974 = vmax.xlane.f32.xlu0 %v1973
  %v1975 = vpop.xlane.xlu0 %1974
  %v1976 = vsub.f32 %v1968, %v1972
  %v1977 = vsub.f32 %v1969, %v1975
  %v1978 = vmul.f32 %v1976, 1.442695
  %v1979 = vpow.pop %v1978
  %v1980 = vmul.f32 %v1977, 1.442695
  %v1981 = vpow.pop %v1980
  %v1982 = vsel %vm580, %v1979, 0.0
  %v1983 = vsel %vm581, %v1981, 0.0
  %v1984 = vsel %vm153, %v1982, 0.0
  %1985 = vadd.xlane.f32.xlu0 %v1984
  %v1986 = vpop.xlane.xlu0 %1985
  %v1987 = vsel %vm153, %v1983, 0.0
  %1988 = vadd.xlane.f32.xlu0 %v1987
  %v1989 = vpop.xlane.xlu0 %1988
  %v1990 = vmax.f32 %v1986, 1e-20
  %v1991 = vmax.f32 %v1989, 1e-20
  %v1992 = vrcp.pop %v1990
  %v1993 = vrcp.pop %v1991
  %v1994 = vmul.f32 %v1982, %v1992
  %v1995 = vmul.f32 %v1983, %v1993
  %1996 = vrot.lane.b32.xlu0 %v224, 32
  %v1997 = vpop.permute.xlu0 %1996
  %1998 = vrot.lane.b32.xlu0 %v227, 32
  %v1999 = vpop.permute.xlu0 %1998
  %v2003 = vsel %vm153, %v1994, 0
  %v2006 = vsel %vm153, %v1995, 0
  %2008 = vmatpush.msra.mxu0 0.0
  %2009 = vmatpush.msra.mxu0 0.0
  %2010 = vmatpush.msra.mxu0 0.0
  %2011 = vmatpush.msra.mxu0 0.0
  %2012 = vmatpush.msra.mxu0 0.0
  %2013 = vmatpush.msra.mxu0 0.0
  %2014 = vmatpush.msra.mxu0 0.0
  %2015 = vmatpush.msra.mxu0 0.0
  %2016 = vmatpush.msra.mxu0 0.0
  %2017 = vmatpush.msra.mxu0 0.0
  %2018 = vmatpush.msra.mxu0 0.0
  %2019 = vmatpush.msra.mxu0 0.0
  %2020 = vmatpush.msra.mxu0 0.0
  %2021 = vmatpush.msra.mxu0 0.0
  %2022 = vmatpush.msra.mxu0 %v1999
  %2023 = vmatpush.msra.mxu0 %v1997
  %2024 = vmatmul.f32.gmra.mxu0 %v2003
  %v2025 = vpop.f32.mrf.mxu0
  %v2026 = vadd.f32 0.0, %v2025
  %2027 = vmatmul.f32.gmra.mxu0 %v2006
  %v2028 = vpop.f32.mrf.mxu0
  %v2029 = vadd.f32 0.0, %v2028
  %2030 = vdwg.mxu0
  %v2031 = vmul.f32 %v2026, 0.5
  %v2032 = vmul.f32 %v2029, 0.5
  %v2033 = vmul.f32 %v1946, 0.5
  %v2034 = vmul.f32 %v1949, 0.5
  %v2035 = vadd.f32 %v2031, %v2033
  %v2036 = vadd.f32 %v2032, %v2034
  %2037 = vrot.lane.b32.xlu0 %v473, 32
  %v2038 = vpop.permute.xlu0 %2037
  %2039 = vrot.lane.b32.xlu0 %v475, 32
  %v2040 = vpop.permute.xlu0 %2039
  %v2043 = vadd.f32 %v2035, %v2038
  %v2044 = vadd.f32 %v2036, %v2040
  %2045 = vset.pattern.permute.xlu0 9
  %2046 = vperm.xlu0 %2045, %v431
  %v2047 = vpop.permute.xlu0 %2046
  %2049 = vset.pattern.permute.xlu0 9
  %2050 = vperm.xlu0 %2049, %v434
  %v2051 = vpop.permute.xlu0 %2050
  %v2053 = vperm.slane %v454, 5
  %v2054 = vadd.f32 %v2047, %v2053
  %v2055 = vadd.f32 %v2051, %v2053
  %vm2056 = vcmp.gt.f32.partialorder %v2054, 0.0
  %vm2057 = vcmp.gt.f32.partialorder %v2055, 0.0
  %v2058 = vmul.f32 %v2054, 0.2
  %v2059 = vmul.f32 %v2055, 0.2
  %v2060 = vsel %vm2056, %v2054, %v2058
  %v2061 = vsel %vm2057, %v2055, %v2059
  %v2062 = vsel %vm500, %v2060, -1e+30
  %v2063 = vsel %vm501, %v2061, -1e+30
  %v2064 = vsel %vm153, %v2062, -inf
  %2065 = vmax.xlane.f32.xlu0 %v2064
  %v2066 = vpop.xlane.xlu0 %2065
  %v2067 = vsel %vm153, %v2063, -inf
  %2068 = vmax.xlane.f32.xlu0 %v2067
  %v2069 = vpop.xlane.xlu0 %2068
  %v2070 = vsub.f32 %v2062, %v2066
  %v2071 = vsub.f32 %v2063, %v2069
  %v2072 = vmul.f32 %v2070, 1.442695
  %v2073 = vpow.pop %v2072
  %v2074 = vmul.f32 %v2071, 1.442695
  %v2075 = vpow.pop %v2074
  %v2076 = vsel %vm500, %v2073, 0.0
  %v2077 = vsel %vm501, %v2075, 0.0
  %v2078 = vsel %vm153, %v2076, 0.0
  %2079 = vadd.xlane.f32.xlu0 %v2078
  %v2080 = vpop.xlane.xlu0 %2079
  %v2081 = vsel %vm153, %v2077, 0.0
  %2082 = vadd.xlane.f32.xlu0 %v2081
  %v2083 = vpop.xlane.xlu0 %2082
  %v2084 = vmax.f32 %v2080, 1e-20
  %v2085 = vmax.f32 %v2083, 1e-20
  %v2086 = vrcp.pop %v2084
  %v2087 = vrcp.pop %v2085
  %v2088 = vmul.f32 %v2076, %v2086
  %v2089 = vmul.f32 %v2077, %v2087
  %2090 = vrot.lane.b32.xlu0 %v178, 20
  %v2091 = vpop.permute.xlu0 %2090
  %2092 = vrot.lane.b32.xlu0 %v181, 20
  %v2093 = vpop.permute.xlu0 %2092
  %v2097 = vsel %vm153, %v2088, 0
  %v2100 = vsel %vm153, %v2089, 0
  %2102 = vmatpush.msra.mxu0 0.0
  %2103 = vmatpush.msra.mxu0 0.0
  %2104 = vmatpush.msra.mxu0 0.0
  %2105 = vmatpush.msra.mxu0 0.0
  %2106 = vmatpush.msra.mxu0 0.0
  %2107 = vmatpush.msra.mxu0 0.0
  %2108 = vmatpush.msra.mxu0 0.0
  %2109 = vmatpush.msra.mxu0 0.0
  %2110 = vmatpush.msra.mxu0 0.0
  %2111 = vmatpush.msra.mxu0 0.0
  %2112 = vmatpush.msra.mxu0 0.0
  %2113 = vmatpush.msra.mxu0 0.0
  %2114 = vmatpush.msra.mxu0 0.0
  %2115 = vmatpush.msra.mxu0 0.0
  %2116 = vmatpush.msra.mxu0 %v2093
  %2117 = vmatpush.msra.mxu0 %v2091
  %2118 = vmatmul.f32.gmra.mxu0 %v2097
  %v2119 = vpop.f32.mrf.mxu0
  %v2120 = vadd.f32 0.0, %v2119
  %2121 = vmatmul.f32.gmra.mxu0 %v2100
  %v2122 = vpop.f32.mrf.mxu0
  %v2123 = vadd.f32 0.0, %v2122
  %2124 = vdwg.mxu0
  %2125 = vset.pattern.permute.xlu0 33
  %2126 = vperm.xlu0 %2125, %v431
  %v2127 = vpop.permute.xlu0 %2126
  %2129 = vset.pattern.permute.xlu0 33
  %2130 = vperm.xlu0 %2129, %v434
  %v2131 = vpop.permute.xlu0 %2130
  %v2133 = vperm.slane %v457, 5
  %v2134 = vadd.f32 %v2127, %v2133
  %v2135 = vadd.f32 %v2131, %v2133
  %vm2136 = vcmp.gt.f32.partialorder %v2134, 0.0
  %vm2137 = vcmp.gt.f32.partialorder %v2135, 0.0
  %v2138 = vmul.f32 %v2134, 0.2
  %v2139 = vmul.f32 %v2135, 0.2
  %v2140 = vsel %vm2136, %v2134, %v2138
  %v2141 = vsel %vm2137, %v2135, %v2139
  %v2142 = vsel %vm580, %v2140, -1e+30
  %v2143 = vsel %vm581, %v2141, -1e+30
  %v2144 = vsel %vm153, %v2142, -inf
  %2145 = vmax.xlane.f32.xlu0 %v2144
  %v2146 = vpop.xlane.xlu0 %2145
  %v2147 = vsel %vm153, %v2143, -inf
  %2148 = vmax.xlane.f32.xlu0 %v2147
  %v2149 = vpop.xlane.xlu0 %2148
  %v2150 = vsub.f32 %v2142, %v2146
  %v2151 = vsub.f32 %v2143, %v2149
  %v2152 = vmul.f32 %v2150, 1.442695
  %v2153 = vpow.pop %v2152
  %v2154 = vmul.f32 %v2151, 1.442695
  %v2155 = vpow.pop %v2154
  %v2156 = vsel %vm580, %v2153, 0.0
  %v2157 = vsel %vm581, %v2155, 0.0
  %v2158 = vsel %vm153, %v2156, 0.0
  %2159 = vadd.xlane.f32.xlu0 %v2158
  %v2160 = vpop.xlane.xlu0 %2159
  %v2161 = vsel %vm153, %v2157, 0.0
  %2162 = vadd.xlane.f32.xlu0 %v2161
  %v2163 = vpop.xlane.xlu0 %2162
  %v2164 = vmax.f32 %v2160, 1e-20
  %v2165 = vmax.f32 %v2163, 1e-20
  %v2166 = vrcp.pop %v2164
  %v2167 = vrcp.pop %v2165
  %v2168 = vmul.f32 %v2156, %v2166
  %v2169 = vmul.f32 %v2157, %v2167
  %2170 = vrot.lane.b32.xlu0 %v224, 20
  %v2171 = vpop.permute.xlu0 %2170
  %2172 = vrot.lane.b32.xlu0 %v227, 20
  %v2173 = vpop.permute.xlu0 %2172
  %v2177 = vsel %vm153, %v2168, 0
  %v2180 = vsel %vm153, %v2169, 0
  %2182 = vmatpush.msra.mxu0 0.0
  %2183 = vmatpush.msra.mxu0 0.0
  %2184 = vmatpush.msra.mxu0 0.0
  %2185 = vmatpush.msra.mxu0 0.0
  %2186 = vmatpush.msra.mxu0 0.0
  %2187 = vmatpush.msra.mxu0 0.0
  %2188 = vmatpush.msra.mxu0 0.0
  %2189 = vmatpush.msra.mxu0 0.0
  %2190 = vmatpush.msra.mxu0 0.0
  %2191 = vmatpush.msra.mxu0 0.0
  %2192 = vmatpush.msra.mxu0 0.0
  %2193 = vmatpush.msra.mxu0 0.0
  %2194 = vmatpush.msra.mxu0 0.0
  %2195 = vmatpush.msra.mxu0 0.0
  %2196 = vmatpush.msra.mxu0 %v2173
  %2197 = vmatpush.msra.mxu0 %v2171
  %2198 = vmatmul.f32.gmra.mxu0 %v2177
  %v2199 = vpop.f32.mrf.mxu0
  %v2200 = vadd.f32 0.0, %v2199
  %2201 = vmatmul.f32.gmra.mxu0 %v2180
  %v2202 = vpop.f32.mrf.mxu0
  %v2203 = vadd.f32 0.0, %v2202
  %2204 = vdwg.mxu0
  %v2205 = vmul.f32 %v2200, 0.5
  %v2206 = vmul.f32 %v2203, 0.5
  %v2207 = vmul.f32 %v2120, 0.5
  %v2208 = vmul.f32 %v2123, 0.5
  %v2209 = vadd.f32 %v2205, %v2207
  %v2210 = vadd.f32 %v2206, %v2208
  %2211 = vrot.lane.b32.xlu0 %v473, 20
  %v2212 = vpop.permute.xlu0 %2211
  %2213 = vrot.lane.b32.xlu0 %v475, 20
  %v2214 = vpop.permute.xlu0 %2213
  %v2217 = vadd.f32 %v2209, %v2212
  %v2218 = vadd.f32 %v2210, %v2214
  %2219 = vset.pattern.permute.xlu0 10
  %2220 = vperm.xlu0 %2219, %v431
  %v2221 = vpop.permute.xlu0 %2220
  %2223 = vset.pattern.permute.xlu0 10
  %2224 = vperm.xlu0 %2223, %v434
  %v2225 = vpop.permute.xlu0 %2224
  %v2227 = vperm.slane %v454, 6
  %v2228 = vadd.f32 %v2221, %v2227
  %v2229 = vadd.f32 %v2225, %v2227
  %vm2230 = vcmp.gt.f32.partialorder %v2228, 0.0
  %vm2231 = vcmp.gt.f32.partialorder %v2229, 0.0
  %v2232 = vmul.f32 %v2228, 0.2
  %v2233 = vmul.f32 %v2229, 0.2
  %v2234 = vsel %vm2230, %v2228, %v2232
  %v2235 = vsel %vm2231, %v2229, %v2233
  %v2236 = vsel %vm500, %v2234, -1e+30
  %v2237 = vsel %vm501, %v2235, -1e+30
  %v2238 = vsel %vm153, %v2236, -inf
  %2239 = vmax.xlane.f32.xlu0 %v2238
  %v2240 = vpop.xlane.xlu0 %2239
  %v2241 = vsel %vm153, %v2237, -inf
  %2242 = vmax.xlane.f32.xlu0 %v2241
  %v2243 = vpop.xlane.xlu0 %2242
  %v2244 = vsub.f32 %v2236, %v2240
  %v2245 = vsub.f32 %v2237, %v2243
  %v2246 = vmul.f32 %v2244, 1.442695
  %v2247 = vpow.pop %v2246
  %v2248 = vmul.f32 %v2245, 1.442695
  %v2249 = vpow.pop %v2248
  %v2250 = vsel %vm500, %v2247, 0.0
  %v2251 = vsel %vm501, %v2249, 0.0
  %v2252 = vsel %vm153, %v2250, 0.0
  %2253 = vadd.xlane.f32.xlu0 %v2252
  %v2254 = vpop.xlane.xlu0 %2253
  %v2255 = vsel %vm153, %v2251, 0.0
  %2256 = vadd.xlane.f32.xlu0 %v2255
  %v2257 = vpop.xlane.xlu0 %2256
  %v2258 = vmax.f32 %v2254, 1e-20
  %v2259 = vmax.f32 %v2257, 1e-20
  %v2260 = vrcp.pop %v2258
  %v2261 = vrcp.pop %v2259
  %v2262 = vmul.f32 %v2250, %v2260
  %v2263 = vmul.f32 %v2251, %v2261
  %2266 = vrot.lane.b32.xlu0 %v178, 8
  %v2267 = vpop.permute.xlu0 %2266
  %2268 = vrot.lane.b32.xlu0 %v201, 8
  %v2269 = vpop.permute.xlu0 %2268
  %2270 = vrot.lane.b32.xlu0 %v181, 8
  %v2271 = vpop.permute.xlu0 %2270
  %2272 = vrot.lane.b32.xlu0 %v204, 8
  %v2273 = vpop.permute.xlu0 %2272
  %vm2274 = vcmask 64512
  %v2275 = vsel %vm2274, %v2267, %v2269
  %v2276 = vsel %vm2274, %v2271, %v2273
  %v2280 = vsel %vm153, %v2262, 0
  %v2283 = vsel %vm153, %v2263, 0
  %2285 = vmatpush.msra.mxu0 0.0
  %2286 = vmatpush.msra.mxu0 0.0
  %2287 = vmatpush.msra.mxu0 0.0
  %2288 = vmatpush.msra.mxu0 0.0
  %2289 = vmatpush.msra.mxu0 0.0
  %2290 = vmatpush.msra.mxu0 0.0
  %2291 = vmatpush.msra.mxu0 0.0
  %2292 = vmatpush.msra.mxu0 0.0
  %2293 = vmatpush.msra.mxu0 0.0
  %2294 = vmatpush.msra.mxu0 0.0
  %2295 = vmatpush.msra.mxu0 0.0
  %2296 = vmatpush.msra.mxu0 0.0
  %2297 = vmatpush.msra.mxu0 0.0
  %2298 = vmatpush.msra.mxu0 0.0
  %2299 = vmatpush.msra.mxu0 %v2276
  %2300 = vmatpush.msra.mxu0 %v2275
  %2301 = vmatmul.f32.gmra.mxu0 %v2280
  %v2302 = vpop.f32.mrf.mxu0
  %v2303 = vadd.f32 0.0, %v2302
  %2304 = vmatmul.f32.gmra.mxu0 %v2283
  %v2305 = vpop.f32.mrf.mxu0
  %v2306 = vadd.f32 0.0, %v2305
  %2307 = vdwg.mxu0
  %2308 = vset.pattern.permute.xlu0 34
  %2309 = vperm.xlu0 %2308, %v431
  %v2310 = vpop.permute.xlu0 %2309
  %2312 = vset.pattern.permute.xlu0 34
  %2313 = vperm.xlu0 %2312, %v434
  %v2314 = vpop.permute.xlu0 %2313
  %v2316 = vperm.slane %v457, 6
  %v2317 = vadd.f32 %v2310, %v2316
  %v2318 = vadd.f32 %v2314, %v2316
  %vm2319 = vcmp.gt.f32.partialorder %v2317, 0.0
  %vm2320 = vcmp.gt.f32.partialorder %v2318, 0.0
  %v2321 = vmul.f32 %v2317, 0.2
  %v2322 = vmul.f32 %v2318, 0.2
  %v2323 = vsel %vm2319, %v2317, %v2321
  %v2324 = vsel %vm2320, %v2318, %v2322
  %v2325 = vsel %vm580, %v2323, -1e+30
  %v2326 = vsel %vm581, %v2324, -1e+30
  %v2327 = vsel %vm153, %v2325, -inf
  %2328 = vmax.xlane.f32.xlu0 %v2327
  %v2329 = vpop.xlane.xlu0 %2328
  %v2330 = vsel %vm153, %v2326, -inf
  %2331 = vmax.xlane.f32.xlu0 %v2330
  %v2332 = vpop.xlane.xlu0 %2331
  %v2333 = vsub.f32 %v2325, %v2329
  %v2334 = vsub.f32 %v2326, %v2332
  %v2335 = vmul.f32 %v2333, 1.442695
  %v2336 = vpow.pop %v2335
  %v2337 = vmul.f32 %v2334, 1.442695
  %v2338 = vpow.pop %v2337
  %v2339 = vsel %vm580, %v2336, 0.0
  %v2340 = vsel %vm581, %v2338, 0.0
  %v2341 = vsel %vm153, %v2339, 0.0
  %2342 = vadd.xlane.f32.xlu0 %v2341
  %v2343 = vpop.xlane.xlu0 %2342
  %v2344 = vsel %vm153, %v2340, 0.0
  %2345 = vadd.xlane.f32.xlu0 %v2344
  %v2346 = vpop.xlane.xlu0 %2345
  %v2347 = vmax.f32 %v2343, 1e-20
  %v2348 = vmax.f32 %v2346, 1e-20
  %v2349 = vrcp.pop %v2347
  %v2350 = vrcp.pop %v2348
  %v2351 = vmul.f32 %v2339, %v2349
  %v2352 = vmul.f32 %v2340, %v2350
  %2355 = vrot.lane.b32.xlu0 %v224, 8
  %v2356 = vpop.permute.xlu0 %2355
  %2357 = vrot.lane.b32.xlu0 %v247, 8
  %v2358 = vpop.permute.xlu0 %2357
  %2359 = vrot.lane.b32.xlu0 %v227, 8
  %v2360 = vpop.permute.xlu0 %2359
  %2361 = vrot.lane.b32.xlu0 %v250, 8
  %v2362 = vpop.permute.xlu0 %2361
  %v2363 = vsel %vm2274, %v2356, %v2358
  %v2364 = vsel %vm2274, %v2360, %v2362
  %v2368 = vsel %vm153, %v2351, 0
  %v2371 = vsel %vm153, %v2352, 0
  %2373 = vmatpush.msra.mxu0 0.0
  %2374 = vmatpush.msra.mxu0 0.0
  %2375 = vmatpush.msra.mxu0 0.0
  %2376 = vmatpush.msra.mxu0 0.0
  %2377 = vmatpush.msra.mxu0 0.0
  %2378 = vmatpush.msra.mxu0 0.0
  %2379 = vmatpush.msra.mxu0 0.0
  %2380 = vmatpush.msra.mxu0 0.0
  %2381 = vmatpush.msra.mxu0 0.0
  %2382 = vmatpush.msra.mxu0 0.0
  %2383 = vmatpush.msra.mxu0 0.0
  %2384 = vmatpush.msra.mxu0 0.0
  %2385 = vmatpush.msra.mxu0 0.0
  %2386 = vmatpush.msra.mxu0 0.0
  %2387 = vmatpush.msra.mxu0 %v2364
  %2388 = vmatpush.msra.mxu0 %v2363
  %2389 = vmatmul.f32.gmra.mxu0 %v2368
  %v2390 = vpop.f32.mrf.mxu0
  %v2391 = vadd.f32 0.0, %v2390
  %2392 = vmatmul.f32.gmra.mxu0 %v2371
  %v2393 = vpop.f32.mrf.mxu0
  %v2394 = vadd.f32 0.0, %v2393
  %2395 = vdwg.mxu0
  %v2396 = vmul.f32 %v2391, 0.5
  %v2397 = vmul.f32 %v2394, 0.5
  %v2398 = vmul.f32 %v2303, 0.5
  %v2399 = vmul.f32 %v2306, 0.5
  %v2400 = vadd.f32 %v2396, %v2398
  %v2401 = vadd.f32 %v2397, %v2399
  %2404 = vrot.lane.b32.xlu0 %v473, 8
  %v2405 = vpop.permute.xlu0 %2404
  %2406 = vrot.lane.b32.xlu0 %v474, 8
  %v2407 = vpop.permute.xlu0 %2406
  %2408 = vrot.lane.b32.xlu0 %v475, 8
  %v2409 = vpop.permute.xlu0 %2408
  %2410 = vrot.lane.b32.xlu0 %v476, 8
  %v2411 = vpop.permute.xlu0 %2410
  %v2412 = vsel %vm2274, %v2405, %v2407
  %v2413 = vsel %vm2274, %v2409, %v2411
  %v2416 = vadd.f32 %v2400, %v2412
  %v2417 = vadd.f32 %v2401, %v2413
  %2418 = vset.pattern.permute.xlu0 11
  %2419 = vperm.xlu0 %2418, %v431
  %v2420 = vpop.permute.xlu0 %2419
  %2422 = vset.pattern.permute.xlu0 11
  %2423 = vperm.xlu0 %2422, %v434
  %v2424 = vpop.permute.xlu0 %2423
  %v2426 = vperm.slane %v454, 7
  %v2427 = vadd.f32 %v2420, %v2426
  %v2428 = vadd.f32 %v2424, %v2426
  %vm2429 = vcmp.gt.f32.partialorder %v2427, 0.0
  %vm2430 = vcmp.gt.f32.partialorder %v2428, 0.0
  %v2431 = vmul.f32 %v2427, 0.2
  %v2432 = vmul.f32 %v2428, 0.2
  %v2433 = vsel %vm2429, %v2427, %v2431
  %v2434 = vsel %vm2430, %v2428, %v2432
  %v2435 = vsel %vm500, %v2433, -1e+30
  %v2436 = vsel %vm501, %v2434, -1e+30
  %v2437 = vsel %vm153, %v2435, -inf
  %2438 = vmax.xlane.f32.xlu0 %v2437
  %v2439 = vpop.xlane.xlu0 %2438
  %v2440 = vsel %vm153, %v2436, -inf
  %2441 = vmax.xlane.f32.xlu0 %v2440
  %v2442 = vpop.xlane.xlu0 %2441
  %v2443 = vsub.f32 %v2435, %v2439
  %v2444 = vsub.f32 %v2436, %v2442
  %v2445 = vmul.f32 %v2443, 1.442695
  %v2446 = vpow.pop %v2445
  %v2447 = vmul.f32 %v2444, 1.442695
  %v2448 = vpow.pop %v2447
  %v2449 = vsel %vm500, %v2446, 0.0
  %v2450 = vsel %vm501, %v2448, 0.0
  %v2451 = vsel %vm153, %v2449, 0.0
  %2452 = vadd.xlane.f32.xlu0 %v2451
  %v2453 = vpop.xlane.xlu0 %2452
  %v2454 = vsel %vm153, %v2450, 0.0
  %2455 = vadd.xlane.f32.xlu0 %v2454
  %v2456 = vpop.xlane.xlu0 %2455
  %v2457 = vmax.f32 %v2453, 1e-20
  %v2458 = vmax.f32 %v2456, 1e-20
  %v2459 = vrcp.pop %v2457
  %v2460 = vrcp.pop %v2458
  %v2461 = vmul.f32 %v2449, %v2459
  %v2462 = vmul.f32 %v2450, %v2460
  %2463 = vrot.lane.b32.xlu0 %v201, 124
  %v2464 = vpop.permute.xlu0 %2463
  %2465 = vrot.lane.b32.xlu0 %v204, 124
  %v2466 = vpop.permute.xlu0 %2465
  %v2470 = vsel %vm153, %v2461, 0
  %v2473 = vsel %vm153, %v2462, 0
  %2475 = vmatpush.msra.mxu0 0.0
  %2476 = vmatpush.msra.mxu0 0.0
  %2477 = vmatpush.msra.mxu0 0.0
  %2478 = vmatpush.msra.mxu0 0.0
  %2479 = vmatpush.msra.mxu0 0.0
  %2480 = vmatpush.msra.mxu0 0.0
  %2481 = vmatpush.msra.mxu0 0.0
  %2482 = vmatpush.msra.mxu0 0.0
  %2483 = vmatpush.msra.mxu0 0.0
  %2484 = vmatpush.msra.mxu0 0.0
  %2485 = vmatpush.msra.mxu0 0.0
  %2486 = vmatpush.msra.mxu0 0.0
  %2487 = vmatpush.msra.mxu0 0.0
  %2488 = vmatpush.msra.mxu0 0.0
  %2489 = vmatpush.msra.mxu0 %v2466
  %2490 = vmatpush.msra.mxu0 %v2464
  %2491 = vmatmul.f32.gmra.mxu0 %v2470
  %v2492 = vpop.f32.mrf.mxu0
  %v2493 = vadd.f32 0.0, %v2492
  %2494 = vmatmul.f32.gmra.mxu0 %v2473
  %v2495 = vpop.f32.mrf.mxu0
  %v2496 = vadd.f32 0.0, %v2495
  %2497 = vdwg.mxu0
  %2498 = vset.pattern.permute.xlu0 35
  %2499 = vperm.xlu0 %2498, %v431
  %v2500 = vpop.permute.xlu0 %2499
  %2502 = vset.pattern.permute.xlu0 35
  %2503 = vperm.xlu0 %2502, %v434
  %v2504 = vpop.permute.xlu0 %2503
  %v2506 = vperm.slane %v457, 7
  %v2507 = vadd.f32 %v2500, %v2506
  %v2508 = vadd.f32 %v2504, %v2506
  %vm2509 = vcmp.gt.f32.partialorder %v2507, 0.0
  %vm2510 = vcmp.gt.f32.partialorder %v2508, 0.0
  %v2511 = vmul.f32 %v2507, 0.2
  %v2512 = vmul.f32 %v2508, 0.2
  %v2513 = vsel %vm2509, %v2507, %v2511
  %v2514 = vsel %vm2510, %v2508, %v2512
  %v2515 = vsel %vm580, %v2513, -1e+30
  %v2516 = vsel %vm581, %v2514, -1e+30
  %v2517 = vsel %vm153, %v2515, -inf
  %2518 = vmax.xlane.f32.xlu0 %v2517
  %v2519 = vpop.xlane.xlu0 %2518
  %v2520 = vsel %vm153, %v2516, -inf
  %2521 = vmax.xlane.f32.xlu0 %v2520
  %v2522 = vpop.xlane.xlu0 %2521
  %v2523 = vsub.f32 %v2515, %v2519
  %v2524 = vsub.f32 %v2516, %v2522
  %v2525 = vmul.f32 %v2523, 1.442695
  %v2526 = vpow.pop %v2525
  %v2527 = vmul.f32 %v2524, 1.442695
  %v2528 = vpow.pop %v2527
  %v2529 = vsel %vm580, %v2526, 0.0
  %v2530 = vsel %vm581, %v2528, 0.0
  %v2531 = vsel %vm153, %v2529, 0.0
  %2532 = vadd.xlane.f32.xlu0 %v2531
  %v2533 = vpop.xlane.xlu0 %2532
  %v2534 = vsel %vm153, %v2530, 0.0
  %2535 = vadd.xlane.f32.xlu0 %v2534
  %v2536 = vpop.xlane.xlu0 %2535
  %v2537 = vmax.f32 %v2533, 1e-20
  %v2538 = vmax.f32 %v2536, 1e-20
  %v2539 = vrcp.pop %v2537
  %v2540 = vrcp.pop %v2538
  %v2541 = vmul.f32 %v2529, %v2539
  %v2542 = vmul.f32 %v2530, %v2540
  %2543 = vrot.lane.b32.xlu0 %v247, 124
  %v2544 = vpop.permute.xlu0 %2543
  %2545 = vrot.lane.b32.xlu0 %v250, 124
  %v2546 = vpop.permute.xlu0 %2545
  %v2550 = vsel %vm153, %v2541, 0
  %v2553 = vsel %vm153, %v2542, 0
  %2555 = vmatpush.msra.mxu0 0.0
  %2556 = vmatpush.msra.mxu0 0.0
  %2557 = vmatpush.msra.mxu0 0.0
  %2558 = vmatpush.msra.mxu0 0.0
  %2559 = vmatpush.msra.mxu0 0.0
  %2560 = vmatpush.msra.mxu0 0.0
  %2561 = vmatpush.msra.mxu0 0.0
  %2562 = vmatpush.msra.mxu0 0.0
  %2563 = vmatpush.msra.mxu0 0.0
  %2564 = vmatpush.msra.mxu0 0.0
  %2565 = vmatpush.msra.mxu0 0.0
  %2566 = vmatpush.msra.mxu0 0.0
  %2567 = vmatpush.msra.mxu0 0.0
  %2568 = vmatpush.msra.mxu0 0.0
  %2569 = vmatpush.msra.mxu0 %v2546
  %2570 = vmatpush.msra.mxu0 %v2544
  %2571 = vmatmul.f32.gmra.mxu0 %v2550
  %v2572 = vpop.f32.mrf.mxu0
  %v2573 = vadd.f32 0.0, %v2572
  %2574 = vmatmul.f32.gmra.mxu0 %v2553
  %v2575 = vpop.f32.mrf.mxu0
  %v2576 = vadd.f32 0.0, %v2575
  %2577 = vdwg.mxu0
  %v2578 = vmul.f32 %v2573, 0.5
  %v2579 = vmul.f32 %v2576, 0.5
  %v2580 = vmul.f32 %v2493, 0.5
  %v2581 = vmul.f32 %v2496, 0.5
  %v2582 = vadd.f32 %v2578, %v2580
  %v2583 = vadd.f32 %v2579, %v2581
  %2584 = vrot.lane.b32.xlu0 %v474, 124
  %v2585 = vpop.permute.xlu0 %2584
  %2586 = vrot.lane.b32.xlu0 %v476, 124
  %v2587 = vpop.permute.xlu0 %2586
  %v2590 = vadd.f32 %v2582, %v2585
  %v2591 = vadd.f32 %v2583, %v2587
  %2594 = vrot.lane.b32.xlu0 %v825, 12
  %v2595 = vpop.permute.xlu0 %2594
  %2596 = vrot.lane.b32.xlu0 %v826, 12
  %v2597 = vpop.permute.xlu0 %2596
  %2602 = vrot.lane.b32.xlu0 %v999, 24
  %v2603 = vpop.permute.xlu0 %2602
  %2604 = vrot.lane.b32.xlu0 %v1000, 24
  %v2605 = vpop.permute.xlu0 %2604
  %2610 = vrot.lane.b32.xlu0 %v1173, 36
  %v2611 = vpop.permute.xlu0 %2610
  %2612 = vrot.lane.b32.xlu0 %v1174, 36
  %v2613 = vpop.permute.xlu0 %2612
  %2618 = vrot.lane.b32.xlu0 %v1347, 48
  %v2619 = vpop.permute.xlu0 %2618
  %2620 = vrot.lane.b32.xlu0 %v1348, 48
  %v2621 = vpop.permute.xlu0 %2620
  %2626 = vrot.lane.b32.xlu0 %v1521, 60
  %v2627 = vpop.permute.xlu0 %2626
  %2628 = vrot.lane.b32.xlu0 %v1522, 60
  %v2629 = vpop.permute.xlu0 %2628
  %2634 = vrot.lane.b32.xlu0 %v1695, 72
  %v2635 = vpop.permute.xlu0 %2634
  %2636 = vrot.lane.b32.xlu0 %v1696, 72
  %v2637 = vpop.permute.xlu0 %2636
  %2642 = vrot.lane.b32.xlu0 %v1869, 84
  %v2643 = vpop.permute.xlu0 %2642
  %2644 = vrot.lane.b32.xlu0 %v1870, 84
  %v2645 = vpop.permute.xlu0 %2644
  %2650 = vrot.lane.b32.xlu0 %v2043, 96
  %v2651 = vpop.permute.xlu0 %2650
  %2652 = vrot.lane.b32.xlu0 %v2044, 96
  %v2653 = vpop.permute.xlu0 %2652
  %2658 = vrot.lane.b32.xlu0 %v2217, 108
  %v2659 = vpop.permute.xlu0 %2658
  %2660 = vrot.lane.b32.xlu0 %v2218, 108
  %v2661 = vpop.permute.xlu0 %2660
  %2666 = vrot.lane.b32.xlu0 %v2416, 120
  %v2667 = vpop.permute.xlu0 %2666
  %2668 = vrot.lane.b32.xlu0 %v2417, 120
  %v2669 = vpop.permute.xlu0 %2668
  %2674 = vrot.lane.b32.xlu0 %v2590, 4
  %v2675 = vpop.permute.xlu0 %2674
  %2676 = vrot.lane.b32.xlu0 %v2591, 4
  %v2677 = vpop.permute.xlu0 %2676
  %vm2680 = vcmask 97280
  %v2681 = vsel %vm2680, %v645, %v2595
  %v2682 = vsel %vm2680, %v646, %v2597
  %vm2683 = vcmask 195584
  %v2684 = vsel %vm2683, %v2681, %v2603
  %v2685 = vsel %vm2683, %v2682, %v2605
  %vm2686 = vcmask 293888
  %v2687 = vsel %vm2686, %v2684, %v2611
  %v2688 = vsel %vm2686, %v2685, %v2613
  %vm2689 = vcmask 392192
  %v2690 = vsel %vm2689, %v2687, %v2619
  %v2691 = vsel %vm2689, %v2688, %v2621
  %vm2692 = vcmask 490496
  %v2693 = vsel %vm2692, %v2690, %v2627
  %v2694 = vsel %vm2692, %v2691, %v2629
  %vm2695 = vcmask 588800
  %v2696 = vsel %vm2695, %v2693, %v2635
  %v2697 = vsel %vm2695, %v2694, %v2637
  %vm2698 = vcmask 687104
  %v2699 = vsel %vm2698, %v2696, %v2643
  %v2700 = vsel %vm2698, %v2697, %v2645
  %vm2701 = vcmask 785408
  %v2702 = vsel %vm2701, %v2699, %v2651
  %v2703 = vsel %vm2701, %v2700, %v2653
  %vm2704 = vcmask 883712
  %v2705 = vsel %vm2704, %v2702, %v2659
  %v2706 = vsel %vm2704, %v2703, %v2661
  %vm2707 = vcmask 982016
  %v2708 = vsel %vm2707, %v2705, %v2667
  %v2709 = vsel %vm2707, %v2706, %v2669
  %vm2710 = vcmask 31744
  %v2711 = vsel %vm2710, %v2667, %v2675
  %v2712 = vsel %vm2710, %v2669, %v2677
  %v2713 = vmax.f32 %v2708, 0.0
  %v2714 = vmax.f32 %v2711, 0.0
  %v2715 = vmax.f32 %v2709, 0.0
  %v2716 = vmax.f32 %v2712, 0.0
  %v2717 = vld [vmem:[%s6] sm:$0xff]
  %v2718 = vld [vmem:[%s6 + $0x8] sm:$0xff]
  %v2719 = vld [vmem:[%s6 + $0x10] sm:$0xff]
  %v2720 = vld [vmem:[%s6 + $0x18] sm:$0xff]
  %v2721 = vld [vmem:[%s6 + $0x20] sm:$0xff]
  %v2722 = vld [vmem:[%s6 + $0x28] sm:$0xff]
  %v2723 = vld [vmem:[%s6 + $0x30] sm:$0xff]
  %v2724 = vld [vmem:[%s6 + $0x38] sm:$0xff]
  %v2725 = vld [vmem:[%s6 + $0x40] sm:$0xff]
  %v2726 = vld [vmem:[%s6 + $0x48] sm:$0xff]
  %v2727 = vld [vmem:[%s6 + $0x50] sm:$0xff]
  %v2728 = vld [vmem:[%s6 + $0x58] sm:$0xff]
  %v2729 = vld [vmem:[%s6 + $0x60] sm:$0xff]
  %v2730 = vld [vmem:[%s6 + $0x68] sm:$0xff]
  %v2731 = vld [vmem:[%s6 + $0x70] sm:$0xff]
  %v2732 = vld [vmem:[%s6 + $0x78] sm:$0xff]
  %v2733 = vld [vmem:[%s6 + $0x80] sm:$0xff]
  %v2734 = vld [vmem:[%s6 + $0x88] sm:$0xff]
  %v2735 = vld [vmem:[%s6 + $0x90] sm:$0xff]
  %v2736 = vld [vmem:[%s6 + $0x98] sm:$0xff]
  %v2737 = vld [vmem:[%s6 + $0xa0] sm:$0xff]
  %v2738 = vld [vmem:[%s6 + $0xa8] sm:$0xff]
  %v2739 = vld [vmem:[%s6 + $0xb0] sm:$0xff]
  %v2740 = vld [vmem:[%s6 + $0xb8] sm:$0xff]
  %v2741 = vld [vmem:[%s6 + $0xc0] sm:$0xff]
  %v2742 = vld [vmem:[%s6 + $0xc8] sm:$0xff]
  %v2743 = vld [vmem:[%s6 + $0xd0] sm:$0xff]
  %v2744 = vld [vmem:[%s6 + $0xd8] sm:$0xff]
  %v2745 = vld [vmem:[%s6 + $0xe0] sm:$0xff]
  %v2746 = vld [vmem:[%s6 + $0xe8] sm:$0xff]
  %v2747 = vld [vmem:[%s6 + $0xf0] sm:$0xff]
  %v2748 = vld [vmem:[%s6 + $0xf8] sm:$0xff]
  %v2749 = vld [vmem:[%s6 + $0x100] sm:$0xff]
  %v2750 = vld [vmem:[%s6 + $0x108] sm:$0xff]
  %v2751 = vld [vmem:[%s6 + $0x110] sm:$0xff]
  %v2752 = vld [vmem:[%s6 + $0x118] sm:$0xff]
  %v2753 = vld [vmem:[%s6 + $0x120] sm:$0xff]
  %v2754 = vld [vmem:[%s6 + $0x128] sm:$0xff]
  %v2755 = vld [vmem:[%s6 + $0x130] sm:$0xff]
  %v2756 = vld [vmem:[%s6 + $0x138] sm:$0xff]
  %v2757 = vld [vmem:[%s6 + $0x140] sm:$0xff]
  %v2758 = vld [vmem:[%s6 + $0x148] sm:$0xff]
  %v2759 = vld [vmem:[%s6 + $0x150] sm:$0xff]
  %v2760 = vld [vmem:[%s6 + $0x158] sm:$0xff]
  %v2761 = vld [vmem:[%s6 + $0x160] sm:$0xff]
  %v2762 = vld [vmem:[%s6 + $0x168] sm:$0xff]
  %v2763 = vld [vmem:[%s6 + $0x170] sm:$0xff]
  %v2764 = vld [vmem:[%s6 + $0x178] sm:$0xff]
  %v2765 = vld [vmem:[%s6 + $0x180] sm:$0xff]
  %v2766 = vld [vmem:[%s6 + $0x188] sm:$0xff]
  %v2767 = vld [vmem:[%s6 + $0x190] sm:$0xff]
  %v2768 = vld [vmem:[%s6 + $0x198] sm:$0xff]
  %v2769 = vld [vmem:[%s6 + $0x1a0] sm:$0xff]
  %v2770 = vld [vmem:[%s6 + $0x1a8] sm:$0xff]
  %v2771 = vld [vmem:[%s7] sm:$0xff]
  %v2772 = vld [vmem:[%s7 + $0x8] sm:$0xff]
  %v2773 = vld [vmem:[%s7 + $0x10] sm:$0xff]
  %v2774 = vld [vmem:[%s7 + $0x18] sm:$0xff]
  %v2775 = vld [vmem:[%s7 + $0x20] sm:$0xff]
  %v2776 = vld [vmem:[%s7 + $0x28] sm:$0xff]
  %v2777 = vld [vmem:[%s7 + $0x30] sm:$0xff]
  %v2778 = vld [vmem:[%s7 + $0x38] sm:$0xff]
  %v2779 = vld [vmem:[%s7 + $0x40] sm:$0xff]
  %v2780 = vld [vmem:[%s7 + $0x48] sm:$0xff]
  %v2781 = vld [vmem:[%s7 + $0x50] sm:$0xff]
  %v2782 = vld [vmem:[%s7 + $0x58] sm:$0xff]
  %v2783 = vld [vmem:[%s7 + $0x60] sm:$0xff]
  %v2784 = vld [vmem:[%s7 + $0x68] sm:$0xff]
  %v2785 = vld [vmem:[%s7 + $0x70] sm:$0xff]
  %v2786 = vld [vmem:[%s7 + $0x78] sm:$0xff]
  %v2787 = vld [vmem:[%s7 + $0x80] sm:$0xff]
  %v2788 = vld [vmem:[%s7 + $0x88] sm:$0xff]
  %v2789 = vld [vmem:[%s7 + $0x90] sm:$0xff]
  %v2790 = vld [vmem:[%s7 + $0x98] sm:$0xff]
  %v2791 = vld [vmem:[%s7 + $0xa0] sm:$0xff]
  %v2792 = vld [vmem:[%s7 + $0xa8] sm:$0xff]
  %v2793 = vld [vmem:[%s7 + $0xb0] sm:$0xff]
  %v2794 = vld [vmem:[%s7 + $0xb8] sm:$0xff]
  %v2795 = vld [vmem:[%s7 + $0xc0] sm:$0xff]
  %v2796 = vld [vmem:[%s7 + $0xc8] sm:$0xff]
  %v2797 = vld [vmem:[%s7 + $0xd0] sm:$0xff]
  %v2798 = vld [vmem:[%s7 + $0xd8] sm:$0xff]
  %v2799 = vld [vmem:[%s7 + $0xe0] sm:$0xff]
  %v2800 = vld [vmem:[%s7 + $0xe8] sm:$0xff]
  %v2801 = vld [vmem:[%s7 + $0xf0] sm:$0xff]
  %v2802 = vld [vmem:[%s7 + $0xf8] sm:$0xff]
  %v2803 = vld [vmem:[%s7 + $0x100] sm:$0xff]
  %v2804 = vld [vmem:[%s7 + $0x108] sm:$0xff]
  %v2805 = vld [vmem:[%s7 + $0x110] sm:$0xff]
  %v2806 = vld [vmem:[%s7 + $0x118] sm:$0xff]
  %v2807 = vld [vmem:[%s7 + $0x120] sm:$0xff]
  %v2808 = vld [vmem:[%s7 + $0x128] sm:$0xff]
  %v2809 = vld [vmem:[%s7 + $0x130] sm:$0xff]
  %v2810 = vld [vmem:[%s7 + $0x138] sm:$0xff]
  %v2811 = vld [vmem:[%s7 + $0x140] sm:$0xff]
  %v2812 = vld [vmem:[%s7 + $0x148] sm:$0xff]
  %v2813 = vld [vmem:[%s7 + $0x150] sm:$0xff]
  %v2814 = vld [vmem:[%s7 + $0x158] sm:$0xff]
  %v2815 = vld [vmem:[%s7 + $0x160] sm:$0xff]
  %v2816 = vld [vmem:[%s7 + $0x168] sm:$0xff]
  %v2817 = vld [vmem:[%s7 + $0x170] sm:$0xff]
  %v2818 = vld [vmem:[%s7 + $0x178] sm:$0xff]
  %v2819 = vld [vmem:[%s8] sm:$0x1]
  %v2821 = vsel %vm153, %v2714, 0
  %v2824 = vsel %vm153, %v2716, 0
  %2826 = vmatpush.msra.mxu0 %v2762
  %2827 = vmatpush.msra.mxu0 %v2759
  %2828 = vmatpush.msra.mxu0 %v2756
  %2829 = vmatpush.msra.mxu0 %v2753
  %2830 = vmatpush.msra.mxu0 %v2750
  %2831 = vmatpush.msra.mxu0 %v2747
  %2832 = vmatpush.msra.mxu0 %v2744
  %2833 = vmatpush.msra.mxu0 %v2741
  %2834 = vmatpush.msra.mxu0 %v2738
  %2835 = vmatpush.msra.mxu0 %v2735
  %2836 = vmatpush.msra.mxu0 %v2732
  %2837 = vmatpush.msra.mxu0 %v2729
  %2838 = vmatpush.msra.mxu0 %v2726
  %2839 = vmatpush.msra.mxu0 %v2723
  %2840 = vmatpush.msra.mxu0 %v2720
  %2841 = vmatpush.msra.mxu0 %v2717
  %2842 = vmatmul.f32.gmra.mxu0 %v2713
  %v2843 = vpop.f32.mrf.mxu0
  %v2844 = vadd.f32 0.0, %v2843
  %2845 = vmatmul.f32.gmra.mxu0 %v2715
  %v2846 = vpop.f32.mrf.mxu0
  %v2847 = vadd.f32 0.0, %v2846
  %2848 = vdwg.mxu0
  %2849 = vmatpush.msra.mxu0 0.0
  %2850 = vmatpush.msra.mxu0 0.0
  %2851 = vmatpush.msra.mxu0 0.0
  %2852 = vmatpush.msra.mxu0 0.0
  %2853 = vmatpush.msra.mxu0 0.0
  %2854 = vmatpush.msra.mxu0 0.0
  %2855 = vmatpush.msra.mxu0 0.0
  %2856 = vmatpush.msra.mxu0 0.0
  %2857 = vmatpush.msra.mxu0 0.0
  %2858 = vmatpush.msra.mxu0 0.0
  %2859 = vmatpush.msra.mxu0 0.0
  %2860 = vmatpush.msra.mxu0 0.0
  %2861 = vmatpush.msra.mxu0 0.0
  %2862 = vmatpush.msra.mxu0 0.0
  %2863 = vmatpush.msra.mxu0 %v2768
  %2864 = vmatpush.msra.mxu0 %v2765
  %2865 = vmatmul.f32.gmra.mxu0 %v2821
  %v2866 = vpop.f32.mrf.mxu0
  %v2867 = vadd.f32 %v2844, %v2866
  %2868 = vmatmul.f32.gmra.mxu0 %v2824
  %v2869 = vpop.f32.mrf.mxu0
  %v2870 = vadd.f32 %v2847, %v2869
  %2871 = vdwg.mxu0
  %2872 = vmatpush.msra.mxu0 %v2763
  %2873 = vmatpush.msra.mxu0 %v2760
  %2874 = vmatpush.msra.mxu0 %v2757
  %2875 = vmatpush.msra.mxu0 %v2754
  %2876 = vmatpush.msra.mxu0 %v2751
  %2877 = vmatpush.msra.mxu0 %v2748
  %2878 = vmatpush.msra.mxu0 %v2745
  %2879 = vmatpush.msra.mxu0 %v2742
  %2880 = vmatpush.msra.mxu0 %v2739
  %2881 = vmatpush.msra.mxu0 %v2736
  %2882 = vmatpush.msra.mxu0 %v2733
  %2883 = vmatpush.msra.mxu0 %v2730
  %2884 = vmatpush.msra.mxu0 %v2727
  %2885 = vmatpush.msra.mxu0 %v2724
  %2886 = vmatpush.msra.mxu0 %v2721
  %2887 = vmatpush.msra.mxu0 %v2718
  %2888 = vmatmul.f32.gmra.mxu0 %v2713
  %v2889 = vpop.f32.mrf.mxu0
  %v2890 = vadd.f32 0.0, %v2889
  %2891 = vmatmul.f32.gmra.mxu0 %v2715
  %v2892 = vpop.f32.mrf.mxu0
  %v2893 = vadd.f32 0.0, %v2892
  %2894 = vdwg.mxu0
  %2895 = vmatpush.msra.mxu0 0.0
  %2896 = vmatpush.msra.mxu0 0.0
  %2897 = vmatpush.msra.mxu0 0.0
  %2898 = vmatpush.msra.mxu0 0.0
  %2899 = vmatpush.msra.mxu0 0.0
  %2900 = vmatpush.msra.mxu0 0.0
  %2901 = vmatpush.msra.mxu0 0.0
  %2902 = vmatpush.msra.mxu0 0.0
  %2903 = vmatpush.msra.mxu0 0.0
  %2904 = vmatpush.msra.mxu0 0.0
  %2905 = vmatpush.msra.mxu0 0.0
  %2906 = vmatpush.msra.mxu0 0.0
  %2907 = vmatpush.msra.mxu0 0.0
  %2908 = vmatpush.msra.mxu0 0.0
  %2909 = vmatpush.msra.mxu0 %v2769
  %2910 = vmatpush.msra.mxu0 %v2766
  %2911 = vmatmul.f32.gmra.mxu0 %v2821
  %v2912 = vpop.f32.mrf.mxu0
  %v2913 = vadd.f32 %v2890, %v2912
  %2914 = vmatmul.f32.gmra.mxu0 %v2824
  %v2915 = vpop.f32.mrf.mxu0
  %v2916 = vadd.f32 %v2893, %v2915
  %2917 = vdwg.mxu0
  %2918 = vmatpush.msra.mxu0 %v2764
  %2919 = vmatpush.msra.mxu0 %v2761
  %2920 = vmatpush.msra.mxu0 %v2758
  %2921 = vmatpush.msra.mxu0 %v2755
  %2922 = vmatpush.msra.mxu0 %v2752
  %2923 = vmatpush.msra.mxu0 %v2749
  %2924 = vmatpush.msra.mxu0 %v2746
  %2925 = vmatpush.msra.mxu0 %v2743
  %2926 = vmatpush.msra.mxu0 %v2740
  %2927 = vmatpush.msra.mxu0 %v2737
  %2928 = vmatpush.msra.mxu0 %v2734
  %2929 = vmatpush.msra.mxu0 %v2731
  %2930 = vmatpush.msra.mxu0 %v2728
  %2931 = vmatpush.msra.mxu0 %v2725
  %2932 = vmatpush.msra.mxu0 %v2722
  %2933 = vmatpush.msra.mxu0 %v2719
  %2934 = vmatmul.f32.gmra.mxu0 %v2713
  %v2935 = vpop.f32.mrf.mxu0
  %v2936 = vadd.f32 0.0, %v2935
  %2937 = vmatmul.f32.gmra.mxu0 %v2715
  %v2938 = vpop.f32.mrf.mxu0
  %v2939 = vadd.f32 0.0, %v2938
  %2940 = vdwg.mxu0
  %2941 = vmatpush.msra.mxu0 0.0
  %2942 = vmatpush.msra.mxu0 0.0
  %2943 = vmatpush.msra.mxu0 0.0
  %2944 = vmatpush.msra.mxu0 0.0
  %2945 = vmatpush.msra.mxu0 0.0
  %2946 = vmatpush.msra.mxu0 0.0
  %2947 = vmatpush.msra.mxu0 0.0
  %2948 = vmatpush.msra.mxu0 0.0
  %2949 = vmatpush.msra.mxu0 0.0
  %2950 = vmatpush.msra.mxu0 0.0
  %2951 = vmatpush.msra.mxu0 0.0
  %2952 = vmatpush.msra.mxu0 0.0
  %2953 = vmatpush.msra.mxu0 0.0
  %2954 = vmatpush.msra.mxu0 0.0
  %2955 = vmatpush.msra.mxu0 %v2770
  %2956 = vmatpush.msra.mxu0 %v2767
  %2957 = vmatmul.f32.gmra.mxu0 %v2821
  %v2958 = vpop.f32.mrf.mxu0
  %v2959 = vadd.f32 %v2936, %v2958
  %2960 = vmatmul.f32.gmra.mxu0 %v2824
  %v2961 = vpop.f32.mrf.mxu0
  %v2962 = vadd.f32 %v2939, %v2961
  %2963 = vdwg.mxu0
  %2964 = vmatpush.msra.mxu0 %v2786
  %2965 = vmatpush.msra.mxu0 %v2785
  %2966 = vmatpush.msra.mxu0 %v2784
  %2967 = vmatpush.msra.mxu0 %v2783
  %2968 = vmatpush.msra.mxu0 %v2782
  %2969 = vmatpush.msra.mxu0 %v2781
  %2970 = vmatpush.msra.mxu0 %v2780
  %2971 = vmatpush.msra.mxu0 %v2779
  %2972 = vmatpush.msra.mxu0 %v2778
  %2973 = vmatpush.msra.mxu0 %v2777
  %2974 = vmatpush.msra.mxu0 %v2776
  %2975 = vmatpush.msra.mxu0 %v2775
  %2976 = vmatpush.msra.mxu0 %v2774
  %2977 = vmatpush.msra.mxu0 %v2773
  %2978 = vmatpush.msra.mxu0 %v2772
  %2979 = vmatpush.msra.mxu0 %v2771
  %2980 = vmatmul.f32.gmra.mxu0 %v2867
  %v2981 = vpop.f32.mrf.mxu0
  %v2982 = vadd.f32 0.0, %v2981
  %2983 = vmatmul.f32.gmra.mxu0 %v2870
  %v2984 = vpop.f32.mrf.mxu0
  %v2985 = vadd.f32 0.0, %v2984
  %2986 = vdwg.mxu0
  %2987 = vmatpush.msra.mxu0 %v2802
  %2988 = vmatpush.msra.mxu0 %v2801
  %2989 = vmatpush.msra.mxu0 %v2800
  %2990 = vmatpush.msra.mxu0 %v2799
  %2991 = vmatpush.msra.mxu0 %v2798
  %2992 = vmatpush.msra.mxu0 %v2797
  %2993 = vmatpush.msra.mxu0 %v2796
  %2994 = vmatpush.msra.mxu0 %v2795
  %2995 = vmatpush.msra.mxu0 %v2794
  %2996 = vmatpush.msra.mxu0 %v2793
  %2997 = vmatpush.msra.mxu0 %v2792
  %2998 = vmatpush.msra.mxu0 %v2791
  %2999 = vmatpush.msra.mxu0 %v2790
  %3000 = vmatpush.msra.mxu0 %v2789
  %3001 = vmatpush.msra.mxu0 %v2788
  %3002 = vmatpush.msra.mxu0 %v2787
  %3003 = vmatmul.f32.gmra.mxu0 %v2913
  %v3004 = vpop.f32.mrf.mxu0
  %v3005 = vadd.f32 %v2982, %v3004
  %3006 = vmatmul.f32.gmra.mxu0 %v2916
  %v3007 = vpop.f32.mrf.mxu0
  %v3008 = vadd.f32 %v2985, %v3007
  %3009 = vdwg.mxu0
  %3010 = vmatpush.msra.mxu0 %v2818
  %3011 = vmatpush.msra.mxu0 %v2817
  %3012 = vmatpush.msra.mxu0 %v2816
  %3013 = vmatpush.msra.mxu0 %v2815
  %3014 = vmatpush.msra.mxu0 %v2814
  %3015 = vmatpush.msra.mxu0 %v2813
  %3016 = vmatpush.msra.mxu0 %v2812
  %3017 = vmatpush.msra.mxu0 %v2811
  %3018 = vmatpush.msra.mxu0 %v2810
  %3019 = vmatpush.msra.mxu0 %v2809
  %3020 = vmatpush.msra.mxu0 %v2808
  %3021 = vmatpush.msra.mxu0 %v2807
  %3022 = vmatpush.msra.mxu0 %v2806
  %3023 = vmatpush.msra.mxu0 %v2805
  %3024 = vmatpush.msra.mxu0 %v2804
  %3025 = vmatpush.msra.mxu0 %v2803
  %3026 = vmatmul.f32.gmra.mxu0 %v2959
  %v3027 = vpop.f32.mrf.mxu0
  %v3028 = vadd.f32 %v3005, %v3027
  %3029 = vmatmul.f32.gmra.mxu0 %v2962
  %v3030 = vpop.f32.mrf.mxu0
  %v3031 = vadd.f32 %v3008, %v3030
  %3032 = vdwg.mxu0
  %3033 = vxpose.xlu0.b32.start [1/16] %v3028, 128
  %3034 = vxpose.xlu0.b32.cont [2/16] %v3031, 128
  %3035 = vxpose.xlu0.b32.cont [3/16] 0.0, 128
  %3036 = vxpose.xlu0.b32.cont [4/16] 0.0, 128
  %3037 = vxpose.xlu0.b32.cont [5/16] 0.0, 128
  %3038 = vxpose.xlu0.b32.cont [6/16] 0.0, 128
  %3039 = vxpose.xlu0.b32.cont [7/16] 0.0, 128
  %3040 = vxpose.xlu0.b32.cont [8/16] 0.0, 128
  %3041 = vxpose.xlu0.b32.cont [9/16] 0.0, 128
  %3042 = vxpose.xlu0.b32.cont [10/16] 0.0, 128
  %3043 = vxpose.xlu0.b32.cont [11/16] 0.0, 128
  %3044 = vxpose.xlu0.b32.cont [12/16] 0.0, 128
  %3045 = vxpose.xlu0.b32.cont [13/16] 0.0, 128
  %3046 = vxpose.xlu0.b32.cont [14/16] 0.0, 128
  %3047 = vxpose.xlu0.b32.cont [15/16] 0.0, 128
  %3048 = vxpose.xlu0.b32.end [16/16] 0.0, 128
  %v3049 = vpop.trf.xlu0
  %v3050 = vpop.trf.xlu0
  %v3051 = vpop.trf.xlu0
  %v3052 = vpop.trf.xlu0
  %v3053 = vpop.trf.xlu0
  %v3054 = vpop.trf.xlu0
  %v3055 = vpop.trf.xlu0
  %v3056 = vpop.trf.xlu0
  %v3057 = vpop.trf.xlu0
  %v3058 = vpop.trf.xlu0
  %v3059 = vpop.trf.xlu0
  %v3060 = vpop.trf.xlu0
  %v3061 = vpop.trf.xlu0
  %v3062 = vpop.trf.xlu0
  %v3063 = vpop.trf.xlu0
  %v3064 = vpop.trf.xlu0
  %v3066 = vperm.slane %v2819, 0
  %v3068 = vadd.f32 %v2959, %v3066
  %v3069 = vadd.f32 %v2962, %v3066
  %3071 = vset.pattern.permute.xlu0 0
  %3072 = vperm.xlu0 %3071, %v3028
  %v3073 = vpop.permute.xlu0 %3072
  %3076 = vset.pattern.permute.xlu0 0
  %3077 = vperm.xlu0 %3076, %v3031
  %v3078 = vpop.permute.xlu0 %3077
  %v3080 = vperm.slane %v3049, 1
  %v3081 = vadd.f32 %v3073, %v3080
  %v3082 = vadd.f32 %v3078, %v3080
  %vm3083 = vcmp.gt.f32.partialorder %v3081, 0.0
  %vm3084 = vcmp.gt.f32.partialorder %v3082, 0.0
  %v3085 = vmul.f32 %v3081, 0.2
  %v3086 = vmul.f32 %v3082, 0.2
  %v3087 = vsel %vm3083, %v3081, %v3085
  %v3088 = vsel %vm3084, %v3082, %v3086
  %v3089 = vsel %vm500, %v3087, -1e+30
  %v3090 = vsel %vm501, %v3088, -1e+30
  %v3091 = vsel %vm153, %v3089, -inf
  %3092 = vmax.xlane.f32.xlu0 %v3091
  %v3093 = vpop.xlane.xlu0 %3092
  %v3094 = vsel %vm153, %v3090, -inf
  %3095 = vmax.xlane.f32.xlu0 %v3094
  %v3096 = vpop.xlane.xlu0 %3095
  %v3097 = vsub.f32 %v3089, %v3093
  %v3098 = vsub.f32 %v3090, %v3096
  %v3099 = vmul.f32 %v3097, 1.442695
  %v3100 = vpow.pop %v3099
  %v3101 = vmul.f32 %v3098, 1.442695
  %v3102 = vpow.pop %v3101
  %v3103 = vsel %vm500, %v3100, 0.0
  %v3104 = vsel %vm501, %v3102, 0.0
  %v3105 = vsel %vm153, %v3103, 0.0
  %3106 = vadd.xlane.f32.xlu0 %v3105
  %v3107 = vpop.xlane.xlu0 %3106
  %v3108 = vsel %vm153, %v3104, 0.0
  %3109 = vadd.xlane.f32.xlu0 %v3108
  %v3110 = vpop.xlane.xlu0 %3109
  %v3111 = vmax.f32 %v3107, 1e-20
  %v3112 = vmax.f32 %v3110, 1e-20
  %v3113 = vrcp.pop %v3111
  %v3114 = vrcp.pop %v3112
  %v3115 = vmul.f32 %v3103, %v3113
  %v3116 = vmul.f32 %v3104, %v3114
  %v3118 = vsel %vm153, %v3115, 0
  %v3121 = vsel %vm153, %v3116, 0
  %3123 = vmatpush.msra.mxu0 0.0
  %3124 = vmatpush.msra.mxu0 0.0
  %3125 = vmatpush.msra.mxu0 0.0
  %3126 = vmatpush.msra.mxu0 0.0
  %3127 = vmatpush.msra.mxu0 0.0
  %3128 = vmatpush.msra.mxu0 0.0
  %3129 = vmatpush.msra.mxu0 0.0
  %3130 = vmatpush.msra.mxu0 0.0
  %3131 = vmatpush.msra.mxu0 0.0
  %3132 = vmatpush.msra.mxu0 0.0
  %3133 = vmatpush.msra.mxu0 0.0
  %3134 = vmatpush.msra.mxu0 0.0
  %3135 = vmatpush.msra.mxu0 0.0
  %3136 = vmatpush.msra.mxu0 0.0
  %3137 = vmatpush.msra.mxu0 %v2870
  %3138 = vmatpush.msra.mxu0 %v2867
  %3139 = vmatmul.f32.gmra.mxu0 %v3118
  %v3140 = vpop.f32.mrf.mxu0
  %v3141 = vadd.f32 0.0, %v3140
  %3142 = vmatmul.f32.gmra.mxu0 %v3121
  %v3143 = vpop.f32.mrf.mxu0
  %v3144 = vadd.f32 0.0, %v3143
  %3145 = vdwg.mxu0
  %3146 = vset.pattern.permute.xlu0 2
  %3147 = vperm.xlu0 %3146, %v3028
  %v3148 = vpop.permute.xlu0 %3147
  %3150 = vset.pattern.permute.xlu0 2
  %3151 = vperm.xlu0 %3150, %v3031
  %v3152 = vpop.permute.xlu0 %3151
  %v3154 = vperm.slane %v3049, 3
  %v3155 = vadd.f32 %v3148, %v3154
  %v3156 = vadd.f32 %v3152, %v3154
  %vm3157 = vcmp.gt.f32.partialorder %v3155, 0.0
  %vm3158 = vcmp.gt.f32.partialorder %v3156, 0.0
  %v3159 = vmul.f32 %v3155, 0.2
  %v3160 = vmul.f32 %v3156, 0.2
  %v3161 = vsel %vm3157, %v3155, %v3159
  %v3162 = vsel %vm3158, %v3156, %v3160
  %v3163 = vsel %vm580, %v3161, -1e+30
  %v3164 = vsel %vm581, %v3162, -1e+30
  %v3165 = vsel %vm153, %v3163, -inf
  %3166 = vmax.xlane.f32.xlu0 %v3165
  %v3167 = vpop.xlane.xlu0 %3166
  %v3168 = vsel %vm153, %v3164, -inf
  %3169 = vmax.xlane.f32.xlu0 %v3168
  %v3170 = vpop.xlane.xlu0 %3169
  %v3171 = vsub.f32 %v3163, %v3167
  %v3172 = vsub.f32 %v3164, %v3170
  %v3173 = vmul.f32 %v3171, 1.442695
  %v3174 = vpow.pop %v3173
  %v3175 = vmul.f32 %v3172, 1.442695
  %v3176 = vpow.pop %v3175
  %v3177 = vsel %vm580, %v3174, 0.0
  %v3178 = vsel %vm581, %v3176, 0.0
  %v3179 = vsel %vm153, %v3177, 0.0
  %3180 = vadd.xlane.f32.xlu0 %v3179
  %v3181 = vpop.xlane.xlu0 %3180
  %v3182 = vsel %vm153, %v3178, 0.0
  %3183 = vadd.xlane.f32.xlu0 %v3182
  %v3184 = vpop.xlane.xlu0 %3183
  %v3185 = vmax.f32 %v3181, 1e-20
  %v3186 = vmax.f32 %v3184, 1e-20
  %v3187 = vrcp.pop %v3185
  %v3188 = vrcp.pop %v3186
  %v3189 = vmul.f32 %v3177, %v3187
  %v3190 = vmul.f32 %v3178, %v3188
  %v3192 = vsel %vm153, %v3189, 0
  %v3195 = vsel %vm153, %v3190, 0
  %3197 = vmatpush.msra.mxu0 0.0
  %3198 = vmatpush.msra.mxu0 0.0
  %3199 = vmatpush.msra.mxu0 0.0
  %3200 = vmatpush.msra.mxu0 0.0
  %3201 = vmatpush.msra.mxu0 0.0
  %3202 = vmatpush.msra.mxu0 0.0
  %3203 = vmatpush.msra.mxu0 0.0
  %3204 = vmatpush.msra.mxu0 0.0
  %3205 = vmatpush.msra.mxu0 0.0
  %3206 = vmatpush.msra.mxu0 0.0
  %3207 = vmatpush.msra.mxu0 0.0
  %3208 = vmatpush.msra.mxu0 0.0
  %3209 = vmatpush.msra.mxu0 0.0
  %3210 = vmatpush.msra.mxu0 0.0
  %3211 = vmatpush.msra.mxu0 %v2916
  %3212 = vmatpush.msra.mxu0 %v2913
  %3213 = vmatmul.f32.gmra.mxu0 %v3192
  %v3214 = vpop.f32.mrf.mxu0
  %v3215 = vadd.f32 0.0, %v3214
  %3216 = vmatmul.f32.gmra.mxu0 %v3195
  %v3217 = vpop.f32.mrf.mxu0
  %v3218 = vadd.f32 0.0, %v3217
  %3219 = vdwg.mxu0
  %v3220 = vmul.f32 %v3215, 0.5
  %v3221 = vmul.f32 %v3218, 0.5
  %v3222 = vmul.f32 %v3141, 0.5
  %v3223 = vmul.f32 %v3144, 0.5
  %v3224 = vadd.f32 %v3220, %v3222
  %v3225 = vadd.f32 %v3221, %v3223
  %v3226 = vadd.f32 %v3224, %v3068
  %v3227 = vadd.f32 %v3225, %v3069
  %3228 = vst.msk [vmem:[%s9] sm:$0xff] %vm2710, %v3226
  %3229 = vst.msk [vmem:[%s9 + $0x8] sm:$0xff] %vm2710, %v3227
  // Predicated region
  $region38: #{mini_gnn_forward.1} parent=0 // pred_check
    _
  $region39: #{mini_gnn_forward.1} parent=0 // pred_check_branch
    %3231 = sbr.rel (0) target = $region41
  $region40: #{mini_gnn_forward.1} parent=0 // pred_region
    _
  $region41: #{mini_gnn_forward.1} parent=0 // pred_fallthru
    _
  // Predicated region
  $region42: #{mini_gnn_forward.1} parent=0 // pred_check
    _
  $region43: #{mini_gnn_forward.1} parent=0 // pred_check_branch
    %3233 = sbr.rel (0) target = $region45
  $region44: #{mini_gnn_forward.1} parent=0 // pred_region
    _
  $region45: #{mini_gnn_forward.1} parent=0 // pred_fallthru
    _

</llo_original>
